<compile_context>
chip_gen: v6e
topology: v6e:2x2x1
jax: 0.10.0
libtpu: 0.0.40
codegen_flags: <defaults>
</compile_context>

<pallas_src>
import functools

import jax
import jax.numpy as jnp
from jax.experimental import pallas as pl
from jax.experimental.pallas import tpu as pltpu

# ----------------------------- model config ---------------------------------
NUM_OP_TYPES = 8
NUM_EDGE_TYPES = 4          # stand-in for len(EDGE_TYPE_MAP)
NUMERIC_DIM = 6             # data.x has 1 + NUMERIC_DIM cols (cols 4,5 used)
OP_EMB_DIM = 32
EDGE_EMB_DIM = 16
HIDDEN = 128                # hidden_dim (TPU-friendly; == lane width)
TEXT_DIM = 64
OUT_DIM = 128               # out_dim (TPU-friendly)
VOCAB = 32
D0 = OP_EMB_DIM + NUMERIC_DIM
SUMMARY_DIM = 3
LANE = 128


def _round_up(v, m):
    return (v + m - 1) // m * m


def _vmem_limit_bytes():
    # Per-generation VMEM budgeting (review item): half of physical, capped.
    try:
        cap = pltpu.get_tpu_info().vmem_capacity_bytes
        return int(min(cap // 2, 64 * 1024 * 1024))
    except Exception:
        return 32 * 1024 * 1024   # safe on v5e/v6e (128 MiB) and v7x (64 MiB)


# ------------------------------- kernel --------------------------------------
def _leaky(v):
    return jnp.where(v > 0, v, 0.1 * v)


def _layernorm(v):
    # nn.LayerNorm is constructed fresh every forward in the PyTorch module,
    # so gamma=1 / beta=0 -> affine-free LN is exact.
    mu = jnp.mean(v, axis=-1, keepdims=True)
    xc = v - mu
    var = jnp.mean(xc * xc, axis=-1, keepdims=True)
    return xc * jax.lax.rsqrt(var + 1e-5)


def plan2vec_kernel(
    h0_ref,      # [1, NPG, 128] f32  : op_emb ++ numerics, zero-padded lanes
    stats_ref,   # [1, NPG, 128] f32  : col0 = valid, col1 = x[:,5], col2 = x[:,4]
    eemb_ref,    # [1, EPG, 128] bf16 : edge embeddings, zero-padded lanes
    src_ref,     # [1, EPG, 1]   i32  : local src node index (-1 on padding)
    dst_ref,     # [1, 1, EPG]   i32  : local dst node index (-1 on padding)
    mask_ref,    # [1, LP, 1]    f32  : sql_mask
    tok_ref,     # [1, LP, 128]  bf16 : token embeddings, zero-padded lanes
    we_ref,      # [128, 384]    bf16 : edge-lin weights, all 3 layers side by side
    w1_ref,      # [3, 128, 128] bf16 : GINE MLP first linears (padded)
    w2_ref,      # [3, 128, 128] bf16 : GINE MLP second linears
    wfin1_ref,   # [384, 128]    bf16 : final MLP first linear ([g|summary|text] blocks)
    wfin2_ref,   # [128, 128]    bf16 : final MLP second linear
    b_ref,       # [16, 128]     f32  : rows 0-2 be, 3-5 b1, 6-8 b2, 9 bm1, 10 bm2, 11 eps
    out_ref,     # [1, 8, 128]   f32  : result row replicated to fill the (8,128) tile
):
    f32 = jnp.float32
    bf16 = jnp.bfloat16
    npg = h0_ref.shape[1]
    epg = eemb_ref.shape[1]

    # Edge projection for all three layers at once: [EPG,128] @ [128,384]
    # (MXU-width fusion; eemb does not depend on h so this is hoisted).
    e_proj_all = jnp.dot(eemb_ref[0], we_ref[...], preferred_element_type=f32)

    def gine(h, li):
        # Per-use loads / one-hot rebuilds keep vreg live ranges short.
        src_col = src_ref[0]                                        # [EPG, 1]
        dst_row = dst_ref[0]                                        # [1, EPG]
        gather_oh = jnp.where(
            jax.lax.broadcasted_iota(jnp.int32, (epg, npg), 1) == src_col,
            1.0, 0.0).astype(bf16)                                  # [EPG, NPG]
        scatter_oh = jnp.where(
            jax.lax.broadcasted_iota(jnp.int32, (npg, epg), 0) == dst_row,
            1.0, 0.0).astype(bf16)                                  # [NPG, EPG]

        eps = b_ref[11:12, li:li + 1]                               # [1,1]
        be = b_ref[li:li + 1, :]
        b1 = b_ref[3 + li:4 + li, :]
        b2 = b_ref[6 + li:7 + li, :]

        # message = relu(x_j + Lin(edge_emb)); aggregate = scatter_add over dst.
        e_proj = e_proj_all[:, li * LANE:(li + 1) * LANE] + be
        x_src = jnp.dot(gather_oh, h.astype(bf16), preferred_element_type=f32)
        msg = jnp.maximum(x_src + e_proj, 0.0)
        aggr = jnp.dot(scatter_oh, msg.astype(bf16), preferred_element_type=f32)
        z = (1.0 + eps) * h + aggr
        z = jnp.maximum(
            jnp.dot(z.astype(bf16), w1_ref[li], preferred_element_type=f32) + b1, 0.0)
        return jnp.dot(z.astype(bf16), w2_ref[li], preferred_element_type=f32) + b2

    h = h0_ref[0]                                                   # [NPG, 128] f32
    # layer 0: in_dim (D0) != hidden -> no residual
    z = gine(h, 0)
    h = _leaky(_layernorm(z))
    # layers 1 & 2: residual
    z = gine(h, 1)
    h = _leaky(_layernorm(z) + h)
    z = gine(h, 2)
    h = _leaky(_layernorm(z) + h)

    # --- per-graph readout: global_add_pool + [count, mean(x5), mean(x4)] -----
    stats = stats_ref[0]
    valid = stats[:, 0:1]                                 # 1.0 on real node rows
    g = jnp.sum(h * valid, axis=0, keepdims=True)         # [1, 128]
    sums = jnp.sum(stats, axis=0, keepdims=True)          # col0=count, col1/2=sums
    cnt = jnp.maximum(sums[:, 0:1], 1.0)
    col = jax.lax.broadcasted_iota(jnp.int32, sums.shape, 1)
    graph_sum = jnp.where(col == 0, sums, sums / cnt)     # exact division (review)

    # --- text masked-mean on the VPU (tokens arrive bf16, upcast here) --------
    m = mask_ref[0]                                       # [LP, 1]
    tsum = jnp.sum(tok_ref[0].astype(f32) * m, axis=0, keepdims=True)   # [1, 128]
    tlen = jnp.maximum(jnp.sum(m, axis=0, keepdims=True), 1.0)
    tfeat = tsum / tlen

    # --- final MLP as one K=384 matmul on [g | graph_sum | text] --------------
    cat = jnp.concatenate([g, graph_sum, tfeat], axis=1)                # [1, 384]
    z1 = _leaky(jnp.dot(cat.astype(bf16), wfin1_ref[...],
                        preferred_element_type=f32) + b_ref[9:10, :])
    y = jnp.dot(z1.astype(bf16), wfin2_ref[...],
                preferred_element_type=f32) + b_ref[10:11, :]           # [1, OUT]
    out_ref[0] = jnp.broadcast_to(y, (8, OUT_DIM))


# ------------------------------ parameters -----------------------------------
def init_params(key):
    ks = jax.random.split(key, 32)

    def w(k, shape, scale=0.05):
        return (scale * jax.random.normal(k, shape)).astype(jnp.float32)

    p = {}
    p["op_embed"] = w(ks[0], (NUM_OP_TYPES, OP_EMB_DIM), 1.0)
    p["edge_embed"] = w(ks[1], (NUM_EDGE_TYPES, EDGE_EMB_DIM), 1.0)
    tok = w(ks[2], (VOCAB, TEXT_DIM), 1.0)
    p["token_embed"] = tok.at[0].set(0.0)            # padding_idx=0
    # GINEConv 0 (edge lin 16->D0, mlp D0->H->H)
    p["we0"] = w(ks[3], (EDGE_EMB_DIM, D0)); p["be0"] = w(ks[4], (1, D0))
    p["w10"] = w(ks[5], (D0, HIDDEN));       p["b10"] = w(ks[6], (1, HIDDEN))
    p["w20"] = w(ks[7], (HIDDEN, HIDDEN));   p["b20"] = w(ks[8], (1, HIDDEN))
    # GINEConv 1
    p["we1"] = w(ks[9], (EDGE_EMB_DIM, HIDDEN));  p["be1"] = w(ks[10], (1, HIDDEN))
    p["w11"] = w(ks[11], (HIDDEN, HIDDEN));       p["b11"] = w(ks[12], (1, HIDDEN))
    p["w21"] = w(ks[13], (HIDDEN, HIDDEN));       p["b21"] = w(ks[14], (1, HIDDEN))
    # GINEConv 2
    p["we2"] = w(ks[15], (EDGE_EMB_DIM, HIDDEN)); p["be2"] = w(ks[16], (1, HIDDEN))
    p["w12"] = w(ks[17], (HIDDEN, HIDDEN));       p["b12"] = w(ks[18], (1, HIDDEN))
    p["w22"] = w(ks[19], (HIDDEN, HIDDEN));       p["b22"] = w(ks[20], (1, HIDDEN))
    # final MLP: Linear(HIDDEN+3+TEXT_DIM, HIDDEN) split by input block, then Linear(HIDDEN, OUT_DIM)
    p["wm1g"] = w(ks[21], (HIDDEN, HIDDEN))
    p["wm1s"] = w(ks[22], (SUMMARY_DIM, HIDDEN))
    p["wm1t"] = w(ks[23], (TEXT_DIM, HIDDEN))
    p["bm1"] = w(ks[24], (1, HIDDEN))
    p["wm2"] = w(ks[25], (HIDDEN, OUT_DIM)); p["bm2"] = w(ks[26], (1, OUT_DIM))
    p["eps"] = jnp.array([0.05, 0.10, 0.15], dtype=jnp.float32)
    return p


# ------------------------------- wrapper --------------------------------------
def plan2vec_forward(p, x, edge_index, edge_attr, batch, sql_ids, sql_mask,
                     num_graphs, max_nodes_per_graph=None, max_edges_per_graph=None):
    assert HIDDEN == LANE and OUT_DIM == LANE
    f32, bf16, i32 = jnp.float32, jnp.bfloat16, jnp.int32
    N = x.shape[0]
    E = edge_index.shape[1]
    B = num_graphs
    L = sql_ids.shape[1]
    # Static per-graph capacities (must bound the true per-graph max).
    NPG = _round_up(max_nodes_per_graph or N, 8)
    EPG = _round_up(max_edges_per_graph or E, 8)
    LP = _round_up(L, 8)

    # --- per-graph regrouping (pure host-side jnp, no sortedness assumption) --
    b_idx = batch.astype(i32)
    graph_iota = jnp.arange(B, dtype=i32)
    node_oh = (b_idx[:, None] == graph_iota[None, :]).astype(i32)            # [N, B]
    node_slot = jnp.sum((jnp.cumsum(node_oh, axis=0) - 1) * node_oh, axis=1) # local idx

    src = edge_index[0].astype(i32)
    dst = edge_index[1].astype(i32)
    e_graph = b_idx[src]
    edge_oh = (e_graph[:, None] == graph_iota[None, :]).astype(i32)          # [E, B]
    edge_slot = jnp.sum((jnp.cumsum(edge_oh, axis=0) - 1) * edge_oh, axis=1)
    lsrc = node_slot[src]
    ldst = node_slot[dst]

    # --- node features: op embedding ++ numerics, zero-padded to 128 lanes ----
    op_ids = jnp.clip(x[:, 0].astype(i32), 0, NUM_OP_TYPES - 1)
    h0 = jnp.concatenate([p["op_embed"][op_ids], x[:, 1:].astype(f32)], axis=1)
    h0 = jnp.pad(h0, ((0, 0), (0, LANE - D0)))                               # [N, 128]
    h0_pg = jnp.zeros((B, NPG, LANE), f32).at[b_idx, node_slot].set(h0)

    stats = jnp.zeros((N, LANE), f32)
    stats = stats.at[:, 0].set(1.0)
    stats = stats.at[:, 1].set(x[:, 5].astype(f32))
    stats = stats.at[:, 2].set(x[:, 4].astype(f32))
    stats_pg = jnp.zeros((B, NPG, LANE), f32).at[b_idx, node_slot].set(stats)

    # --- edge embeddings (clamp_max only, matching the PyTorch module) --------
    if edge_attr is None:
        edge_idx = jnp.zeros((E,), i32)
    else:
        ea = edge_attr
        if ea.ndim > 1:
            ea = ea[:, 0]
        edge_idx = jnp.minimum(ea.astype(i32), NUM_EDGE_TYPES - 1)
    eemb = jnp.pad(p["edge_embed"][edge_idx], ((0, 0), (0, LANE - EDGE_EMB_DIM)))
    eemb_pg = jnp.zeros((B, EPG, LANE), bf16).at[e_graph, edge_slot].set(eemb.astype(bf16))

    lsrc_pg = jnp.full((B, EPG), -1, i32).at[e_graph, edge_slot].set(lsrc)[:, :, None]
    ldst_pg = jnp.full((B, EPG), -1, i32).at[e_graph, edge_slot].set(ldst)[:, None, :]

    # --- text: token embeddings (bf16) + mask ---------------------------------
    tok = jnp.pad(p["token_embed"][sql_ids],
                  ((0, 0), (0, LP - L), (0, LANE - TEXT_DIM))).astype(bf16)  # [B,LP,128]
    mask3 = jnp.pad(sql_mask.astype(f32), ((0, 0), (0, LP - L)))[:, :, None] # [B,LP,1]

    # --- weights: lane-dense, bf16, fused where it widens the MXU -------------
    def padw(wm, rows, cols):
        return jnp.pad(wm, ((0, rows - wm.shape[0]), (0, cols - wm.shape[1])))

    we_wide = jnp.concatenate([padw(p["we0"], LANE, LANE),
                               padw(p["we1"], LANE, LANE),
                               padw(p["we2"], LANE, LANE)], axis=1).astype(bf16)  # [128,384]
    w1_all = jnp.stack([padw(p["w10"], LANE, HIDDEN), p["w11"], p["w12"]]).astype(bf16)
    w2_all = jnp.stack([p["w20"], p["w21"], p["w22"]]).astype(bf16)
    wfin1 = jnp.concatenate([p["wm1g"],
                             padw(p["wm1s"], LANE, HIDDEN),
                             padw(p["wm1t"], LANE, HIDDEN)], axis=0).astype(bf16) # [384,128]
    wfin2 = padw(p["wm2"], LANE, LANE).astype(bf16)

    biases = jnp.zeros((16, LANE), f32)
    biases = biases.at[0, :D0].set(p["be0"][0])
    biases = biases.at[1, :HIDDEN].set(p["be1"][0])
    biases = biases.at[2, :HIDDEN].set(p["be2"][0])
    biases = biases.at[3, :HIDDEN].set(p["b10"][0])
    biases = biases.at[4, :HIDDEN].set(p["b11"][0])
    biases = biases.at[5, :HIDDEN].set(p["b12"][0])
    biases = biases.at[6, :HIDDEN].set(p["b20"][0])
    biases = biases.at[7, :HIDDEN].set(p["b21"][0])
    biases = biases.at[8, :HIDDEN].set(p["b22"][0])
    biases = biases.at[9, :HIDDEN].set(p["bm1"][0])
    biases = biases.at[10, :OUT_DIM].set(p["bm2"][0])
    biases = biases.at[11, :3].set(p["eps"])

    inputs = (h0_pg, stats_pg, eemb_pg, lsrc_pg, ldst_pg, mask3, tok,
              we_wide, w1_all, w2_all, wfin1, wfin2, biases)
    in_specs = [
        pl.BlockSpec((1, NPG, LANE), lambda b: (b, 0, 0)),     # h0
        pl.BlockSpec((1, NPG, LANE), lambda b: (b, 0, 0)),     # stats
        pl.BlockSpec((1, EPG, LANE), lambda b: (b, 0, 0)),     # eemb
        pl.BlockSpec((1, EPG, 1),    lambda b: (b, 0, 0)),     # local src idx
        pl.BlockSpec((1, 1, EPG),    lambda b: (b, 0, 0)),     # local dst idx
        pl.BlockSpec((1, LP, 1),     lambda b: (b, 0, 0)),     # sql mask
        pl.BlockSpec((1, LP, LANE),  lambda b: (b, 0, 0)),     # token emb
        pl.BlockSpec((LANE, 3 * LANE), lambda b: (0, 0)),      # we (all layers)
        pl.BlockSpec((3, LANE, LANE),  lambda b: (0, 0, 0)),   # w1
        pl.BlockSpec((3, LANE, LANE),  lambda b: (0, 0, 0)),   # w2
        pl.BlockSpec((3 * LANE, LANE), lambda b: (0, 0)),      # final lin 1
        pl.BlockSpec((LANE, LANE),     lambda b: (0, 0)),      # final lin 2
        pl.BlockSpec((16, LANE),       lambda b: (0, 0)),      # biases + eps
    ]
    # Output row is replicated into an (8,128) tile so the store is an
    # unmasked full-tile vst; the wrapper slices row 0 back out.
    out3 = pl.pallas_call(
        plan2vec_kernel,
        out_shape=jax.ShapeDtypeStruct((B, 8, OUT_DIM), jnp.float32),
        grid=(B,),
        in_specs=in_specs,
        out_specs=pl.BlockSpec((1, 8, OUT_DIM), lambda b: (b, 0, 0)),
        compiler_params=pltpu.CompilerParams(
            dimension_semantics=("parallel",),          # shard graphs across v7x's 2 TCs
            vmem_limit_bytes=_vmem_limit_bytes()),
    )(*inputs)
    return out3[:, 0, :]


# --------------------------- pure-JAX reference -------------------------------
def plan2vec_reference(p, x, edge_index, edge_attr, batch, sql_ids, sql_mask, B):
    hp = jax.lax.Precision.HIGHEST
    dot = functools.partial(jnp.dot, precision=hp)

    def leaky(v):
        return jnp.where(v > 0, v, 0.1 * v)

    def ln(v):
        mu = v.mean(-1, keepdims=True)
        xc = v - mu
        return xc / jnp.sqrt((xc * xc).mean(-1, keepdims=True) + 1e-5)

    N = x.shape[0]
    op_ids = jnp.clip(x[:, 0].astype(jnp.int32), 0, NUM_OP_TYPES - 1)
    h = jnp.concatenate([p["op_embed"][op_ids], x[:, 1:].astype(jnp.float32)], axis=1)
    eemb = p["edge_embed"][jnp.minimum(edge_attr.astype(jnp.int32), NUM_EDGE_TYPES - 1)]
    src, dst = edge_index[0], edge_index[1]

    layers = [("we0", "be0", "w10", "b10", "w20", "b20", 0),
              ("we1", "be1", "w11", "b11", "w21", "b21", 1),
              ("we2", "be2", "w12", "b12", "w22", "b22", 2)]
    for (we, be, w1, b1, w2, b2, li) in layers:
        h_in = h
        eproj = dot(eemb, p[we]) + p[be]
        msg = jax.nn.relu(h[src] + eproj)
        aggr = jax.ops.segment_sum(msg, dst, num_segments=N)
        z = (1.0 + p["eps"][li]) * h + aggr
        z = jax.nn.relu(dot(z, p[w1]) + p[b1])
        z = dot(z, p[w2]) + p[b2]
        z = ln(z)
        h = leaky(z + h_in) if h_in.shape[-1] == z.shape[-1] else leaky(z)

    g = jax.ops.segment_sum(h, batch, num_segments=B)
    cnt = jax.ops.segment_sum(jnp.ones((N,), jnp.float32), batch, num_segments=B)
    cnt_safe = jnp.maximum(cnt, 1.0)
    fan = jax.ops.segment_sum(x[:, 5].astype(jnp.float32), batch, num_segments=B) / cnt_safe
    cost = jax.ops.segment_sum(x[:, 4].astype(jnp.float32), batch, num_segments=B) / cnt_safe
    graph_sum = jnp.stack([cnt, fan, cost], axis=1)

    emb = p["token_embed"][sql_ids]
    m = sql_mask.astype(jnp.float32)[..., None]
    summed = (emb * m).sum(1)
    lengths = jnp.maximum(m.sum(1), 1.0)
    tfeat = summed / lengths

    cat = jnp.concatenate([g, graph_sum, tfeat], axis=1)
    wm1 = jnp.concatenate([p["wm1g"], p["wm1s"], p["wm1t"]], axis=0)
    z1 = leaky(dot(cat, wm1) + p["bm1"])
    return dot(z1, p["wm2"]) + p["bm2"]


# ---------------------------------- main ---------------------------------------
if __name__ == "__main__":
    key = jax.random.PRNGKey(0)
    pk, xk, nk, ek, sk, mk = jax.random.split(key, 6)
    params = init_params(pk)

    N, E, B, L = 10, 12, 2, 8
    batch = jnp.array([0] * 6 + [1] * 4, dtype=jnp.int32)
    op_col = jax.random.randint(xk, (N, 1), 0, NUM_OP_TYPES).astype(jnp.float32)
    num_cols = jax.random.normal(nk, (N, NUMERIC_DIM), dtype=jnp.float32)
    x = jnp.concatenate([op_col, num_cols], axis=1)                       # [N, 1+NUMERIC_DIM]

    src = jnp.array([0, 1, 2, 3, 4, 5, 1, 2, 6, 7, 8, 9], dtype=jnp.int32)
    dst = jnp.array([1, 2, 3, 4, 5, 0, 0, 1, 7, 8, 9, 6], dtype=jnp.int32)
    edge_index = jnp.stack([src, dst], axis=0)                            # [2, E]
    edge_attr = jax.random.randint(ek, (E,), 0, NUM_EDGE_TYPES + 2).astype(jnp.int32)
    sql_ids = jax.random.randint(sk, (B, L), 0, VOCAB).astype(jnp.int32)
    sql_mask = (jax.random.uniform(mk, (B, L)) > 0.3).astype(jnp.float32)

    out = plan2vec_forward(params, x, edge_index, edge_attr, batch, sql_ids, sql_mask,
                           B, max_nodes_per_graph=6, max_edges_per_graph=6)
    out = jax.block_until_ready(out)

    ref = plan2vec_reference(params, x, edge_index, edge_attr, batch, sql_ids, sql_mask, B)
    assert out.shape == (B, OUT_DIM)
    assert bool(jnp.all(jnp.isfinite(out)))
    # bf16 weights + bf16 activations at every MXU boundary (f32 accumulation),
    # so the tolerance is wider than a pure-f32 comparison.
    max_diff = float(jnp.max(jnp.abs(out - ref)))
    assert bool(jnp.allclose(out, ref, atol=3e-2, rtol=3e-2)), f"max|diff|={max_diff}"
    print("KERNEL_OK")
</pallas_src>

<mosaic_0001>
module attributes {stable_mosaic.version = 11 : i64} {
  func.func @plan2vec_kernel(%arg0: i32, %arg1: memref<1x8x128xf32, #tpu.memory_space<vmem>>, %arg2: memref<1x8x128xf32, #tpu.memory_space<vmem>>, %arg3: memref<1x8x128xbf16, #tpu.memory_space<vmem>>, %arg4: memref<1x8x1xi32, #tpu.memory_space<vmem>>, %arg5: memref<1x1x8xi32, #tpu.memory_space<vmem>>, %arg6: memref<1x8x1xf32, #tpu.memory_space<vmem>>, %arg7: memref<1x8x128xbf16, #tpu.memory_space<vmem>>, %arg8: memref<128x384xbf16, #tpu.memory_space<vmem>>, %arg9: memref<3x128x128xbf16, #tpu.memory_space<vmem>>, %arg10: memref<3x128x128xbf16, #tpu.memory_space<vmem>>, %arg11: memref<384x128xbf16, #tpu.memory_space<vmem>>, %arg12: memref<128x128xbf16, #tpu.memory_space<vmem>>, %arg13: memref<16x128xf32, #tpu.memory_space<vmem>>, %arg14: memref<1x8x128xf32, #tpu.memory_space<vmem>>) attributes {dimension_semantics = [#tpu.dimension_semantics<parallel>], iteration_bounds = array<i64: 2>, scalar_prefetch = 0 : i64, scratch_operands = 0 : i64, tpu.core_type = #tpu.core_type<tc>, window_params = [{transform_indices = @transform_0, window_bounds = array<i64: 1, 8, 128>}, {transform_indices = @transform_1, window_bounds = array<i64: 1, 8, 128>}, {transform_indices = @transform_2, window_bounds = array<i64: 1, 8, 128>}, {transform_indices = @transform_3, window_bounds = array<i64: 1, 8, 1>}, {transform_indices = @transform_4, window_bounds = array<i64: 1, 1, 8>}, {transform_indices = @transform_5, window_bounds = array<i64: 1, 8, 1>}, {transform_indices = @transform_6, window_bounds = array<i64: 1, 8, 128>}, {pipeline_mode = #tpu.pipeline_mode<synchronous>, transform_indices = @transform_7, window_bounds = array<i64: 128, 384>}, {pipeline_mode = #tpu.pipeline_mode<synchronous>, transform_indices = @transform_8, window_bounds = array<i64: 3, 128, 128>}, {pipeline_mode = #tpu.pipeline_mode<synchronous>, transform_indices = @transform_9, window_bounds = array<i64: 3, 128, 128>}, {pipeline_mode = #tpu.pipeline_mode<synchronous>, transform_indices = @transform_10, window_bounds = array<i64: 384, 128>}, {pipeline_mode = #tpu.pipeline_mode<synchronous>, transform_indices = @transform_11, window_bounds = array<i64: 128, 128>}, {pipeline_mode = #tpu.pipeline_mode<synchronous>, transform_indices = @transform_12, window_bounds = array<i64: 16, 128>}, {transform_indices = @transform_13, window_bounds = array<i64: 1, 8, 128>}]} {
    %c0 = arith.constant 0 : index
    %c0_0 = arith.constant 0 : index
    %c0_1 = arith.constant 0 : index
    %0 = vector.load %arg3[%c0, %c0_0, %c0_1] : memref<1x8x128xbf16, #tpu.memory_space<vmem>>, vector<1x8x128xbf16>
    %1 = vector.shape_cast %0 : vector<1x8x128xbf16> to vector<8x128xbf16>
    %c0_2 = arith.constant 0 : index
    %c0_3 = arith.constant 0 : index
    %2 = vector.load %arg8[%c0_2, %c0_3] : memref<128x384xbf16, #tpu.memory_space<vmem>>, vector<128x384xbf16>
    %cst = arith.constant dense<0.000000e+00> : vector<8x384xf32>
    %3 = tpu.matmul %1, %2, %cst {dimension_numbers = #tpu.dot_dimension_numbers<[1], [0], [0], [1], [0, 0, 1, 1], [], []>} : vector<8x128xbf16>, vector<128x384xbf16>, vector<8x384xf32> -> vector<8x384xf32>
    %c0_4 = arith.constant 0 : index
    %c0_5 = arith.constant 0 : index
    %c0_6 = arith.constant 0 : index
    %4 = vector.load %arg1[%c0_4, %c0_5, %c0_6] : memref<1x8x128xf32, #tpu.memory_space<vmem>>, vector<1x8x128xf32>
    %5 = vector.shape_cast %4 : vector<1x8x128xf32> to vector<8x128xf32>
    %c0_7 = arith.constant 0 : index
    %c0_8 = arith.constant 0 : index
    %c0_9 = arith.constant 0 : index
    %6 = vector.load %arg4[%c0_7, %c0_8, %c0_9] : memref<1x8x1xi32, #tpu.memory_space<vmem>>, vector<1x8x1xi32>
    %7 = vector.shape_cast %6 : vector<1x8x1xi32> to vector<8x1xi32>
    %c0_10 = arith.constant 0 : index
    %c0_11 = arith.constant 0 : index
    %c0_12 = arith.constant 0 : index
    %8 = vector.load %arg5[%c0_10, %c0_11, %c0_12] : memref<1x1x8xi32, #tpu.memory_space<vmem>>, vector<1x1x8xi32>
    %9 = vector.shape_cast %8 : vector<1x1x8xi32> to vector<1x8xi32>
    %10 = tpu.iota {dimensions = array<i32: 1>} : vector<8x8xi32>
    %11 = vector.broadcast %7 : vector<8x1xi32> to vector<8x8xi32>
    %12 = arith.cmpi eq, %10, %11 : vector<8x8xi32>
    %cst_13 = arith.constant 1.000000e+00 : f32
    %cst_14 = arith.constant 0.000000e+00 : f32
    %13 = vector.broadcast %cst_13 : f32 to vector<8x8xf32>
    %14 = vector.broadcast %cst_14 : f32 to vector<8x8xf32>
    %15 = arith.select %12, %13, %14 : vector<8x8xi1>, vector<8x8xf32>
    %16 = arith.truncf %15 : vector<8x8xf32> to vector<8x8xbf16>
    %17 = tpu.iota {dimensions = array<i32: 0>} : vector<8x8xi32>
    %18 = vector.broadcast %9 : vector<1x8xi32> to vector<8x8xi32>
    %19 = arith.cmpi eq, %17, %18 : vector<8x8xi32>
    %cst_15 = arith.constant 1.000000e+00 : f32
    %cst_16 = arith.constant 0.000000e+00 : f32
    %20 = vector.broadcast %cst_15 : f32 to vector<8x8xf32>
    %21 = vector.broadcast %cst_16 : f32 to vector<8x8xf32>
    %22 = arith.select %19, %20, %21 : vector<8x8xi1>, vector<8x8xf32>
    %23 = arith.truncf %22 : vector<8x8xf32> to vector<8x8xbf16>
    %c11 = arith.constant 11 : index
    %c0_17 = arith.constant 0 : index
    %24 = vector.load %arg13[%c11, %c0_17] : memref<16x128xf32, #tpu.memory_space<vmem>>, vector<1x1xf32>
    %c0_18 = arith.constant 0 : index
    %c0_19 = arith.constant 0 : index
    %25 = vector.load %arg13[%c0_18, %c0_19] : memref<16x128xf32, #tpu.memory_space<vmem>>, vector<1x128xf32>
    %c3 = arith.constant 3 : index
    %c0_20 = arith.constant 0 : index
    %26 = vector.load %arg13[%c3, %c0_20] : memref<16x128xf32, #tpu.memory_space<vmem>>, vector<1x128xf32>
    %c6 = arith.constant 6 : index
    %c0_21 = arith.constant 0 : index
    %27 = vector.load %arg13[%c6, %c0_21] : memref<16x128xf32, #tpu.memory_space<vmem>>, vector<1x128xf32>
    %28 = vector.extract_strided_slice %3 {offsets = [0, 0], sizes = [8, 128], strides = [1, 1]} : vector<8x384xf32> to vector<8x128xf32>
    %29 = vector.broadcast %25 : vector<1x128xf32> to vector<8x128xf32>
    %30 = arith.addf %28, %29 : vector<8x128xf32>
    %31 = arith.truncf %5 : vector<8x128xf32> to vector<8x128xbf16>
    %cst_22 = arith.constant dense<0.000000e+00> : vector<8x128xf32>
    %32 = tpu.matmul %16, %31, %cst_22 {dimension_numbers = #tpu.dot_dimension_numbers<[1], [0], [0], [1], [0, 0, 1, 1], [], []>} : vector<8x8xbf16>, vector<8x128xbf16>, vector<8x128xf32> -> vector<8x128xf32>
    %33 = arith.addf %32, %30 : vector<8x128xf32>
    %cst_23 = arith.constant 0.000000e+00 : f32
    %34 = vector.broadcast %cst_23 : f32 to vector<8x128xf32>
    %35 = arith.maximumf %33, %34 : vector<8x128xf32>
    %36 = arith.truncf %35 : vector<8x128xf32> to vector<8x128xbf16>
    %cst_24 = arith.constant dense<0.000000e+00> : vector<8x128xf32>
    %37 = tpu.matmul %23, %36, %cst_24 {dimension_numbers = #tpu.dot_dimension_numbers<[1], [0], [0], [1], [0, 0, 1, 1], [], []>} : vector<8x8xbf16>, vector<8x128xbf16>, vector<8x128xf32> -> vector<8x128xf32>
    %cst_25 = arith.constant 1.000000e+00 : f32
    %38 = vector.broadcast %cst_25 : f32 to vector<1x1xf32>
    %39 = arith.addf %38, %24 : vector<1x1xf32>
    %40 = vector.broadcast %39 : vector<1x1xf32> to vector<8x128xf32>
    %41 = arith.mulf %40, %5 : vector<8x128xf32>
    %42 = arith.addf %41, %37 : vector<8x128xf32>
    %43 = arith.truncf %42 : vector<8x128xf32> to vector<8x128xbf16>
    %c0_26 = arith.constant 0 : index
    %c0_27 = arith.constant 0 : index
    %c0_28 = arith.constant 0 : index
    %44 = vector.load %arg9[%c0_26, %c0_27, %c0_28] : memref<3x128x128xbf16, #tpu.memory_space<vmem>>, vector<1x128x128xbf16>
    %45 = vector.shape_cast %44 : vector<1x128x128xbf16> to vector<128x128xbf16>
    %cst_29 = arith.constant dense<0.000000e+00> : vector<8x128xf32>
    %46 = tpu.matmul %43, %45, %cst_29 {dimension_numbers = #tpu.dot_dimension_numbers<[1], [0], [0], [1], [0, 0, 1, 1], [], []>} : vector<8x128xbf16>, vector<128x128xbf16>, vector<8x128xf32> -> vector<8x128xf32>
    %47 = vector.broadcast %26 : vector<1x128xf32> to vector<8x128xf32>
    %48 = arith.addf %46, %47 : vector<8x128xf32>
    %cst_30 = arith.constant 0.000000e+00 : f32
    %49 = vector.broadcast %cst_30 : f32 to vector<8x128xf32>
    %50 = arith.maximumf %48, %49 : vector<8x128xf32>
    %51 = arith.truncf %50 : vector<8x128xf32> to vector<8x128xbf16>
    %c0_31 = arith.constant 0 : index
    %c0_32 = arith.constant 0 : index
    %c0_33 = arith.constant 0 : index
    %52 = vector.load %arg10[%c0_31, %c0_32, %c0_33] : memref<3x128x128xbf16, #tpu.memory_space<vmem>>, vector<1x128x128xbf16>
    %53 = vector.shape_cast %52 : vector<1x128x128xbf16> to vector<128x128xbf16>
    %cst_34 = arith.constant dense<0.000000e+00> : vector<8x128xf32>
    %54 = tpu.matmul %51, %53, %cst_34 {dimension_numbers = #tpu.dot_dimension_numbers<[1], [0], [0], [1], [0, 0, 1, 1], [], []>} : vector<8x128xbf16>, vector<128x128xbf16>, vector<8x128xf32> -> vector<8x128xf32>
    %55 = vector.broadcast %27 : vector<1x128xf32> to vector<8x128xf32>
    %56 = arith.addf %54, %55 : vector<8x128xf32>
    %cst_35 = arith.constant dense<0.000000e+00> : vector<8xf32>
    %57 = vector.multi_reduction <add>, %56, %cst_35 [1] : vector<8x128xf32> to vector<8xf32>
    %58 = vector.shape_cast %57 : vector<8xf32> to vector<8x1xf32>
    %cst_36 = arith.constant 1.280000e+02 : f32
    %59 = vector.broadcast %cst_36 : f32 to vector<8x1xf32>
    %60 = arith.divf %58, %59 : vector<8x1xf32>
    %61 = vector.broadcast %60 : vector<8x1xf32> to vector<8x128xf32>
    %62 = arith.subf %56, %61 : vector<8x128xf32>
    %63 = arith.mulf %62, %62 : vector<8x128xf32>
    %cst_37 = arith.constant dense<0.000000e+00> : vector<8xf32>
    %64 = vector.multi_reduction <add>, %63, %cst_37 [1] : vector<8x128xf32> to vector<8xf32>
    %65 = vector.shape_cast %64 : vector<8xf32> to vector<8x1xf32>
    %cst_38 = arith.constant 1.280000e+02 : f32
    %66 = vector.broadcast %cst_38 : f32 to vector<8x1xf32>
    %67 = arith.divf %65, %66 : vector<8x1xf32>
    %cst_39 = arith.constant 9.99999974E-6 : f32
    %68 = vector.broadcast %cst_39 : f32 to vector<8x1xf32>
    %69 = arith.addf %67, %68 : vector<8x1xf32>
    %70 = math.rsqrt %69 : vector<8x1xf32>
    %71 = vector.broadcast %70 : vector<8x1xf32> to vector<8x128xf32>
    %72 = arith.mulf %62, %71 : vector<8x128xf32>
    %cst_40 = arith.constant 0.000000e+00 : f32
    %73 = vector.broadcast %cst_40 : f32 to vector<8x128xf32>
    %74 = arith.cmpf ogt, %72, %73 : vector<8x128xf32>
    %cst_41 = arith.constant 1.000000e-01 : f32
    %75 = vector.broadcast %cst_41 : f32 to vector<8x128xf32>
    %76 = arith.mulf %75, %72 : vector<8x128xf32>
    %77 = arith.select %74, %72, %76 : vector<8x128xi1>, vector<8x128xf32>
    %c0_42 = arith.constant 0 : index
    %c0_43 = arith.constant 0 : index
    %c0_44 = arith.constant 0 : index
    %78 = vector.load %arg4[%c0_42, %c0_43, %c0_44] : memref<1x8x1xi32, #tpu.memory_space<vmem>>, vector<1x8x1xi32>
    %79 = vector.shape_cast %78 : vector<1x8x1xi32> to vector<8x1xi32>
    %c0_45 = arith.constant 0 : index
    %c0_46 = arith.constant 0 : index
    %c0_47 = arith.constant 0 : index
    %80 = vector.load %arg5[%c0_45, %c0_46, %c0_47] : memref<1x1x8xi32, #tpu.memory_space<vmem>>, vector<1x1x8xi32>
    %81 = vector.shape_cast %80 : vector<1x1x8xi32> to vector<1x8xi32>
    %82 = tpu.iota {dimensions = array<i32: 1>} : vector<8x8xi32>
    %83 = vector.broadcast %79 : vector<8x1xi32> to vector<8x8xi32>
    %84 = arith.cmpi eq, %82, %83 : vector<8x8xi32>
    %cst_48 = arith.constant 1.000000e+00 : f32
    %cst_49 = arith.constant 0.000000e+00 : f32
    %85 = vector.broadcast %cst_48 : f32 to vector<8x8xf32>
    %86 = vector.broadcast %cst_49 : f32 to vector<8x8xf32>
    %87 = arith.select %84, %85, %86 : vector<8x8xi1>, vector<8x8xf32>
    %88 = arith.truncf %87 : vector<8x8xf32> to vector<8x8xbf16>
    %89 = tpu.iota {dimensions = array<i32: 0>} : vector<8x8xi32>
    %90 = vector.broadcast %81 : vector<1x8xi32> to vector<8x8xi32>
    %91 = arith.cmpi eq, %89, %90 : vector<8x8xi32>
    %cst_50 = arith.constant 1.000000e+00 : f32
    %cst_51 = arith.constant 0.000000e+00 : f32
    %92 = vector.broadcast %cst_50 : f32 to vector<8x8xf32>
    %93 = vector.broadcast %cst_51 : f32 to vector<8x8xf32>
    %94 = arith.select %91, %92, %93 : vector<8x8xi1>, vector<8x8xf32>
    %95 = arith.truncf %94 : vector<8x8xf32> to vector<8x8xbf16>
    %c11_52 = arith.constant 11 : index
    %c1 = arith.constant 1 : index
    %96 = vector.load %arg13[%c11_52, %c1] : memref<16x128xf32, #tpu.memory_space<vmem>>, vector<1x1xf32>
    %c1_53 = arith.constant 1 : index
    %c0_54 = arith.constant 0 : index
    %97 = vector.load %arg13[%c1_53, %c0_54] : memref<16x128xf32, #tpu.memory_space<vmem>>, vector<1x128xf32>
    %c4 = arith.constant 4 : index
    %c0_55 = arith.constant 0 : index
    %98 = vector.load %arg13[%c4, %c0_55] : memref<16x128xf32, #tpu.memory_space<vmem>>, vector<1x128xf32>
    %c7 = arith.constant 7 : index
    %c0_56 = arith.constant 0 : index
    %99 = vector.load %arg13[%c7, %c0_56] : memref<16x128xf32, #tpu.memory_space<vmem>>, vector<1x128xf32>
    %100 = vector.extract_strided_slice %3 {offsets = [0, 128], sizes = [8, 128], strides = [1, 1]} : vector<8x384xf32> to vector<8x128xf32>
    %101 = vector.broadcast %97 : vector<1x128xf32> to vector<8x128xf32>
    %102 = arith.addf %100, %101 : vector<8x128xf32>
    %103 = arith.truncf %77 : vector<8x128xf32> to vector<8x128xbf16>
    %cst_57 = arith.constant dense<0.000000e+00> : vector<8x128xf32>
    %104 = tpu.matmul %88, %103, %cst_57 {dimension_numbers = #tpu.dot_dimension_numbers<[1], [0], [0], [1], [0, 0, 1, 1], [], []>} : vector<8x8xbf16>, vector<8x128xbf16>, vector<8x128xf32> -> vector<8x128xf32>
    %105 = arith.addf %104, %102 : vector<8x128xf32>
    %cst_58 = arith.constant 0.000000e+00 : f32
    %106 = vector.broadcast %cst_58 : f32 to vector<8x128xf32>
    %107 = arith.maximumf %105, %106 : vector<8x128xf32>
    %108 = arith.truncf %107 : vector<8x128xf32> to vector<8x128xbf16>
    %cst_59 = arith.constant dense<0.000000e+00> : vector<8x128xf32>
    %109 = tpu.matmul %95, %108, %cst_59 {dimension_numbers = #tpu.dot_dimension_numbers<[1], [0], [0], [1], [0, 0, 1, 1], [], []>} : vector<8x8xbf16>, vector<8x128xbf16>, vector<8x128xf32> -> vector<8x128xf32>
    %cst_60 = arith.constant 1.000000e+00 : f32
    %110 = vector.broadcast %cst_60 : f32 to vector<1x1xf32>
    %111 = arith.addf %110, %96 : vector<1x1xf32>
    %112 = vector.broadcast %111 : vector<1x1xf32> to vector<8x128xf32>
    %113 = arith.mulf %112, %77 : vector<8x128xf32>
    %114 = arith.addf %113, %109 : vector<8x128xf32>
    %115 = arith.truncf %114 : vector<8x128xf32> to vector<8x128xbf16>
    %c1_61 = arith.constant 1 : index
    %c0_62 = arith.constant 0 : index
    %c0_63 = arith.constant 0 : index
    %116 = vector.load %arg9[%c1_61, %c0_62, %c0_63] : memref<3x128x128xbf16, #tpu.memory_space<vmem>>, vector<1x128x128xbf16>
    %117 = vector.shape_cast %116 : vector<1x128x128xbf16> to vector<128x128xbf16>
    %cst_64 = arith.constant dense<0.000000e+00> : vector<8x128xf32>
    %118 = tpu.matmul %115, %117, %cst_64 {dimension_numbers = #tpu.dot_dimension_numbers<[1], [0], [0], [1], [0, 0, 1, 1], [], []>} : vector<8x128xbf16>, vector<128x128xbf16>, vector<8x128xf32> -> vector<8x128xf32>
    %119 = vector.broadcast %98 : vector<1x128xf32> to vector<8x128xf32>
    %120 = arith.addf %118, %119 : vector<8x128xf32>
    %cst_65 = arith.constant 0.000000e+00 : f32
    %121 = vector.broadcast %cst_65 : f32 to vector<8x128xf32>
    %122 = arith.maximumf %120, %121 : vector<8x128xf32>
    %123 = arith.truncf %122 : vector<8x128xf32> to vector<8x128xbf16>
    %c1_66 = arith.constant 1 : index
    %c0_67 = arith.constant 0 : index
    %c0_68 = arith.constant 0 : index
    %124 = vector.load %arg10[%c1_66, %c0_67, %c0_68] : memref<3x128x128xbf16, #tpu.memory_space<vmem>>, vector<1x128x128xbf16>
    %125 = vector.shape_cast %124 : vector<1x128x128xbf16> to vector<128x128xbf16>
    %cst_69 = arith.constant dense<0.000000e+00> : vector<8x128xf32>
    %126 = tpu.matmul %123, %125, %cst_69 {dimension_numbers = #tpu.dot_dimension_numbers<[1], [0], [0], [1], [0, 0, 1, 1], [], []>} : vector<8x128xbf16>, vector<128x128xbf16>, vector<8x128xf32> -> vector<8x128xf32>
    %127 = vector.broadcast %99 : vector<1x128xf32> to vector<8x128xf32>
    %128 = arith.addf %126, %127 : vector<8x128xf32>
    %cst_70 = arith.constant dense<0.000000e+00> : vector<8xf32>
    %129 = vector.multi_reduction <add>, %128, %cst_70 [1] : vector<8x128xf32> to vector<8xf32>
    %130 = vector.shape_cast %129 : vector<8xf32> to vector<8x1xf32>
    %cst_71 = arith.constant 1.280000e+02 : f32
    %131 = vector.broadcast %cst_71 : f32 to vector<8x1xf32>
    %132 = arith.divf %130, %131 : vector<8x1xf32>
    %133 = vector.broadcast %132 : vector<8x1xf32> to vector<8x128xf32>
    %134 = arith.subf %128, %133 : vector<8x128xf32>
    %135 = arith.mulf %134, %134 : vector<8x128xf32>
    %cst_72 = arith.constant dense<0.000000e+00> : vector<8xf32>
    %136 = vector.multi_reduction <add>, %135, %cst_72 [1] : vector<8x128xf32> to vector<8xf32>
    %137 = vector.shape_cast %136 : vector<8xf32> to vector<8x1xf32>
    %cst_73 = arith.constant 1.280000e+02 : f32
    %138 = vector.broadcast %cst_73 : f32 to vector<8x1xf32>
    %139 = arith.divf %137, %138 : vector<8x1xf32>
    %cst_74 = arith.constant 9.99999974E-6 : f32
    %140 = vector.broadcast %cst_74 : f32 to vector<8x1xf32>
    %141 = arith.addf %139, %140 : vector<8x1xf32>
    %142 = math.rsqrt %141 : vector<8x1xf32>
    %143 = vector.broadcast %142 : vector<8x1xf32> to vector<8x128xf32>
    %144 = arith.mulf %134, %143 : vector<8x128xf32>
    %145 = arith.addf %144, %77 : vector<8x128xf32>
    %cst_75 = arith.constant 0.000000e+00 : f32
    %146 = vector.broadcast %cst_75 : f32 to vector<8x128xf32>
    %147 = arith.cmpf ogt, %145, %146 : vector<8x128xf32>
    %cst_76 = arith.constant 1.000000e-01 : f32
    %148 = vector.broadcast %cst_76 : f32 to vector<8x128xf32>
    %149 = arith.mulf %148, %145 : vector<8x128xf32>
    %150 = arith.select %147, %145, %149 : vector<8x128xi1>, vector<8x128xf32>
    %c0_77 = arith.constant 0 : index
    %c0_78 = arith.constant 0 : index
    %c0_79 = arith.constant 0 : index
    %151 = vector.load %arg4[%c0_77, %c0_78, %c0_79] : memref<1x8x1xi32, #tpu.memory_space<vmem>>, vector<1x8x1xi32>
    %152 = vector.shape_cast %151 : vector<1x8x1xi32> to vector<8x1xi32>
    %c0_80 = arith.constant 0 : index
    %c0_81 = arith.constant 0 : index
    %c0_82 = arith.constant 0 : index
    %153 = vector.load %arg5[%c0_80, %c0_81, %c0_82] : memref<1x1x8xi32, #tpu.memory_space<vmem>>, vector<1x1x8xi32>
    %154 = vector.shape_cast %153 : vector<1x1x8xi32> to vector<1x8xi32>
    %155 = tpu.iota {dimensions = array<i32: 1>} : vector<8x8xi32>
    %156 = vector.broadcast %152 : vector<8x1xi32> to vector<8x8xi32>
    %157 = arith.cmpi eq, %155, %156 : vector<8x8xi32>
    %cst_83 = arith.constant 1.000000e+00 : f32
    %cst_84 = arith.constant 0.000000e+00 : f32
    %158 = vector.broadcast %cst_83 : f32 to vector<8x8xf32>
    %159 = vector.broadcast %cst_84 : f32 to vector<8x8xf32>
    %160 = arith.select %157, %158, %159 : vector<8x8xi1>, vector<8x8xf32>
    %161 = arith.truncf %160 : vector<8x8xf32> to vector<8x8xbf16>
    %162 = tpu.iota {dimensions = array<i32: 0>} : vector<8x8xi32>
    %163 = vector.broadcast %154 : vector<1x8xi32> to vector<8x8xi32>
    %164 = arith.cmpi eq, %162, %163 : vector<8x8xi32>
    %cst_85 = arith.constant 1.000000e+00 : f32
    %cst_86 = arith.constant 0.000000e+00 : f32
    %165 = vector.broadcast %cst_85 : f32 to vector<8x8xf32>
    %166 = vector.broadcast %cst_86 : f32 to vector<8x8xf32>
    %167 = arith.select %164, %165, %166 : vector<8x8xi1>, vector<8x8xf32>
    %168 = arith.truncf %167 : vector<8x8xf32> to vector<8x8xbf16>
    %c11_87 = arith.constant 11 : index
    %c2 = arith.constant 2 : index
    %169 = vector.load %arg13[%c11_87, %c2] : memref<16x128xf32, #tpu.memory_space<vmem>>, vector<1x1xf32>
    %c2_88 = arith.constant 2 : index
    %c0_89 = arith.constant 0 : index
    %170 = vector.load %arg13[%c2_88, %c0_89] : memref<16x128xf32, #tpu.memory_space<vmem>>, vector<1x128xf32>
    %c5 = arith.constant 5 : index
    %c0_90 = arith.constant 0 : index
    %171 = vector.load %arg13[%c5, %c0_90] : memref<16x128xf32, #tpu.memory_space<vmem>>, vector<1x128xf32>
    %c8 = arith.constant 8 : index
    %c0_91 = arith.constant 0 : index
    %172 = vector.load %arg13[%c8, %c0_91] : memref<16x128xf32, #tpu.memory_space<vmem>>, vector<1x128xf32>
    %173 = vector.extract_strided_slice %3 {offsets = [0, 256], sizes = [8, 128], strides = [1, 1]} : vector<8x384xf32> to vector<8x128xf32>
    %174 = vector.broadcast %170 : vector<1x128xf32> to vector<8x128xf32>
    %175 = arith.addf %173, %174 : vector<8x128xf32>
    %176 = arith.truncf %150 : vector<8x128xf32> to vector<8x128xbf16>
    %cst_92 = arith.constant dense<0.000000e+00> : vector<8x128xf32>
    %177 = tpu.matmul %161, %176, %cst_92 {dimension_numbers = #tpu.dot_dimension_numbers<[1], [0], [0], [1], [0, 0, 1, 1], [], []>} : vector<8x8xbf16>, vector<8x128xbf16>, vector<8x128xf32> -> vector<8x128xf32>
    %178 = arith.addf %177, %175 : vector<8x128xf32>
    %cst_93 = arith.constant 0.000000e+00 : f32
    %179 = vector.broadcast %cst_93 : f32 to vector<8x128xf32>
    %180 = arith.maximumf %178, %179 : vector<8x128xf32>
    %181 = arith.truncf %180 : vector<8x128xf32> to vector<8x128xbf16>
    %cst_94 = arith.constant dense<0.000000e+00> : vector<8x128xf32>
    %182 = tpu.matmul %168, %181, %cst_94 {dimension_numbers = #tpu.dot_dimension_numbers<[1], [0], [0], [1], [0, 0, 1, 1], [], []>} : vector<8x8xbf16>, vector<8x128xbf16>, vector<8x128xf32> -> vector<8x128xf32>
    %cst_95 = arith.constant 1.000000e+00 : f32
    %183 = vector.broadcast %cst_95 : f32 to vector<1x1xf32>
    %184 = arith.addf %183, %169 : vector<1x1xf32>
    %185 = vector.broadcast %184 : vector<1x1xf32> to vector<8x128xf32>
    %186 = arith.mulf %185, %150 : vector<8x128xf32>
    %187 = arith.addf %186, %182 : vector<8x128xf32>
    %188 = arith.truncf %187 : vector<8x128xf32> to vector<8x128xbf16>
    %c2_96 = arith.constant 2 : index
    %c0_97 = arith.constant 0 : index
    %c0_98 = arith.constant 0 : index
    %189 = vector.load %arg9[%c2_96, %c0_97, %c0_98] : memref<3x128x128xbf16, #tpu.memory_space<vmem>>, vector<1x128x128xbf16>
    %190 = vector.shape_cast %189 : vector<1x128x128xbf16> to vector<128x128xbf16>
    %cst_99 = arith.constant dense<0.000000e+00> : vector<8x128xf32>
    %191 = tpu.matmul %188, %190, %cst_99 {dimension_numbers = #tpu.dot_dimension_numbers<[1], [0], [0], [1], [0, 0, 1, 1], [], []>} : vector<8x128xbf16>, vector<128x128xbf16>, vector<8x128xf32> -> vector<8x128xf32>
    %192 = vector.broadcast %171 : vector<1x128xf32> to vector<8x128xf32>
    %193 = arith.addf %191, %192 : vector<8x128xf32>
    %cst_100 = arith.constant 0.000000e+00 : f32
    %194 = vector.broadcast %cst_100 : f32 to vector<8x128xf32>
    %195 = arith.maximumf %193, %194 : vector<8x128xf32>
    %196 = arith.truncf %195 : vector<8x128xf32> to vector<8x128xbf16>
    %c2_101 = arith.constant 2 : index
    %c0_102 = arith.constant 0 : index
    %c0_103 = arith.constant 0 : index
    %197 = vector.load %arg10[%c2_101, %c0_102, %c0_103] : memref<3x128x128xbf16, #tpu.memory_space<vmem>>, vector<1x128x128xbf16>
    %198 = vector.shape_cast %197 : vector<1x128x128xbf16> to vector<128x128xbf16>
    %cst_104 = arith.constant dense<0.000000e+00> : vector<8x128xf32>
    %199 = tpu.matmul %196, %198, %cst_104 {dimension_numbers = #tpu.dot_dimension_numbers<[1], [0], [0], [1], [0, 0, 1, 1], [], []>} : vector<8x128xbf16>, vector<128x128xbf16>, vector<8x128xf32> -> vector<8x128xf32>
    %200 = vector.broadcast %172 : vector<1x128xf32> to vector<8x128xf32>
    %201 = arith.addf %199, %200 : vector<8x128xf32>
    %cst_105 = arith.constant dense<0.000000e+00> : vector<8xf32>
    %202 = vector.multi_reduction <add>, %201, %cst_105 [1] : vector<8x128xf32> to vector<8xf32>
    %203 = vector.shape_cast %202 : vector<8xf32> to vector<8x1xf32>
    %cst_106 = arith.constant 1.280000e+02 : f32
    %204 = vector.broadcast %cst_106 : f32 to vector<8x1xf32>
    %205 = arith.divf %203, %204 : vector<8x1xf32>
    %206 = vector.broadcast %205 : vector<8x1xf32> to vector<8x128xf32>
    %207 = arith.subf %201, %206 : vector<8x128xf32>
    %208 = arith.mulf %207, %207 : vector<8x128xf32>
    %cst_107 = arith.constant dense<0.000000e+00> : vector<8xf32>
    %209 = vector.multi_reduction <add>, %208, %cst_107 [1] : vector<8x128xf32> to vector<8xf32>
    %210 = vector.shape_cast %209 : vector<8xf32> to vector<8x1xf32>
    %cst_108 = arith.constant 1.280000e+02 : f32
    %211 = vector.broadcast %cst_108 : f32 to vector<8x1xf32>
    %212 = arith.divf %210, %211 : vector<8x1xf32>
    %cst_109 = arith.constant 9.99999974E-6 : f32
    %213 = vector.broadcast %cst_109 : f32 to vector<8x1xf32>
    %214 = arith.addf %212, %213 : vector<8x1xf32>
    %215 = math.rsqrt %214 : vector<8x1xf32>
    %216 = vector.broadcast %215 : vector<8x1xf32> to vector<8x128xf32>
    %217 = arith.mulf %207, %216 : vector<8x128xf32>
    %218 = arith.addf %217, %150 : vector<8x128xf32>
    %cst_110 = arith.constant 0.000000e+00 : f32
    %219 = vector.broadcast %cst_110 : f32 to vector<8x128xf32>
    %220 = arith.cmpf ogt, %218, %219 : vector<8x128xf32>
    %cst_111 = arith.constant 1.000000e-01 : f32
    %221 = vector.broadcast %cst_111 : f32 to vector<8x128xf32>
    %222 = arith.mulf %221, %218 : vector<8x128xf32>
    %223 = arith.select %220, %218, %222 : vector<8x128xi1>, vector<8x128xf32>
    %c0_112 = arith.constant 0 : index
    %c0_113 = arith.constant 0 : index
    %c0_114 = arith.constant 0 : index
    %224 = vector.load %arg2[%c0_112, %c0_113, %c0_114] : memref<1x8x128xf32, #tpu.memory_space<vmem>>, vector<1x8x128xf32>
    %225 = vector.shape_cast %224 : vector<1x8x128xf32> to vector<8x128xf32>
    %226 = vector.extract_strided_slice %225 {offsets = [0, 0], sizes = [8, 1], strides = [1, 1]} : vector<8x128xf32> to vector<8x1xf32>
    %227 = vector.broadcast %226 : vector<8x1xf32> to vector<8x128xf32>
    %228 = arith.mulf %223, %227 : vector<8x128xf32>
    %cst_115 = arith.constant dense<0.000000e+00> : vector<128xf32>
    %229 = vector.multi_reduction <add>, %228, %cst_115 [0] : vector<8x128xf32> to vector<128xf32>
    %230 = vector.shape_cast %229 : vector<128xf32> to vector<1x128xf32>
    %cst_116 = arith.constant dense<0.000000e+00> : vector<128xf32>
    %231 = vector.multi_reduction <add>, %225, %cst_116 [0] : vector<8x128xf32> to vector<128xf32>
    %232 = vector.shape_cast %231 : vector<128xf32> to vector<1x128xf32>
    %233 = vector.extract_strided_slice %232 {offsets = [0, 0], sizes = [1, 1], strides = [1, 1]} : vector<1x128xf32> to vector<1x1xf32>
    %cst_117 = arith.constant 1.000000e+00 : f32
    %234 = vector.broadcast %cst_117 : f32 to vector<1x1xf32>
    %235 = arith.maximumf %233, %234 : vector<1x1xf32>
    %236 = tpu.iota {dimensions = array<i32: 1>} : vector<1x128xi32>
    %c0_i32 = arith.constant 0 : i32
    %237 = vector.broadcast %c0_i32 : i32 to vector<1x128xi32>
    %238 = arith.cmpi eq, %236, %237 : vector<1x128xi32>
    %239 = vector.broadcast %235 : vector<1x1xf32> to vector<1x128xf32>
    %240 = arith.divf %232, %239 : vector<1x128xf32>
    %241 = arith.select %238, %232, %240 : vector<1x128xi1>, vector<1x128xf32>
    %c0_118 = arith.constant 0 : index
    %c0_119 = arith.constant 0 : index
    %c0_120 = arith.constant 0 : index
    %242 = vector.load %arg6[%c0_118, %c0_119, %c0_120] : memref<1x8x1xf32, #tpu.memory_space<vmem>>, vector<1x8x1xf32>
    %243 = vector.shape_cast %242 : vector<1x8x1xf32> to vector<8x1xf32>
    %c0_121 = arith.constant 0 : index
    %c0_122 = arith.constant 0 : index
    %c0_123 = arith.constant 0 : index
    %244 = vector.load %arg7[%c0_121, %c0_122, %c0_123] : memref<1x8x128xbf16, #tpu.memory_space<vmem>>, vector<1x8x128xbf16>
    %245 = vector.shape_cast %244 : vector<1x8x128xbf16> to vector<8x128xbf16>
    %246 = arith.extf %245 : vector<8x128xbf16> to vector<8x128xf32>
    %247 = vector.broadcast %243 : vector<8x1xf32> to vector<8x128xf32>
    %248 = arith.mulf %246, %247 : vector<8x128xf32>
    %cst_124 = arith.constant dense<0.000000e+00> : vector<128xf32>
    %249 = vector.multi_reduction <add>, %248, %cst_124 [0] : vector<8x128xf32> to vector<128xf32>
    %250 = vector.shape_cast %249 : vector<128xf32> to vector<1x128xf32>
    %cst_125 = arith.constant dense<0.000000e+00> : vector<1xf32>
    %251 = vector.multi_reduction <add>, %243, %cst_125 [0] : vector<8x1xf32> to vector<1xf32>
    %252 = vector.shape_cast %251 : vector<1xf32> to vector<1x1xf32>
    %cst_126 = arith.constant 1.000000e+00 : f32
    %253 = vector.broadcast %cst_126 : f32 to vector<1x1xf32>
    %254 = arith.maximumf %252, %253 : vector<1x1xf32>
    %255 = vector.broadcast %254 : vector<1x1xf32> to vector<1x128xf32>
    %256 = arith.divf %250, %255 : vector<1x128xf32>
    %257 = tpu.concatenate %230, %241, %256 in 1 : vector<1x128xf32>, vector<1x128xf32>, vector<1x128xf32> -> vector<1x384xf32>
    %258 = arith.truncf %257 : vector<1x384xf32> to vector<1x384xbf16>
    %c0_127 = arith.constant 0 : index
    %c0_128 = arith.constant 0 : index
    %259 = vector.load %arg11[%c0_127, %c0_128] : memref<384x128xbf16, #tpu.memory_space<vmem>>, vector<384x128xbf16>
    %cst_129 = arith.constant dense<0.000000e+00> : vector<1x128xf32>
    %260 = tpu.matmul %258, %259, %cst_129 {dimension_numbers = #tpu.dot_dimension_numbers<[1], [0], [0], [1], [0, 0, 1, 1], [], []>} : vector<1x384xbf16>, vector<384x128xbf16>, vector<1x128xf32> -> vector<1x128xf32>
    %c9 = arith.constant 9 : index
    %c0_130 = arith.constant 0 : index
    %261 = vector.load %arg13[%c9, %c0_130] : memref<16x128xf32, #tpu.memory_space<vmem>>, vector<1x128xf32>
    %262 = arith.addf %260, %261 : vector<1x128xf32>
    %cst_131 = arith.constant 0.000000e+00 : f32
    %263 = vector.broadcast %cst_131 : f32 to vector<1x128xf32>
    %264 = arith.cmpf ogt, %262, %263 : vector<1x128xf32>
    %cst_132 = arith.constant 1.000000e-01 : f32
    %265 = vector.broadcast %cst_132 : f32 to vector<1x128xf32>
    %266 = arith.mulf %265, %262 : vector<1x128xf32>
    %267 = arith.select %264, %262, %266 : vector<1x128xi1>, vector<1x128xf32>
    %268 = arith.truncf %267 : vector<1x128xf32> to vector<1x128xbf16>
    %c0_133 = arith.constant 0 : index
    %c0_134 = arith.constant 0 : index
    %269 = vector.load %arg12[%c0_133, %c0_134] : memref<128x128xbf16, #tpu.memory_space<vmem>>, vector<128x128xbf16>
    %cst_135 = arith.constant dense<0.000000e+00> : vector<1x128xf32>
    %270 = tpu.matmul %268, %269, %cst_135 {dimension_numbers = #tpu.dot_dimension_numbers<[1], [0], [0], [1], [0, 0, 1, 1], [], []>} : vector<1x128xbf16>, vector<128x128xbf16>, vector<1x128xf32> -> vector<1x128xf32>
    %c10 = arith.constant 10 : index
    %c0_136 = arith.constant 0 : index
    %271 = vector.load %arg13[%c10, %c0_136] : memref<16x128xf32, #tpu.memory_space<vmem>>, vector<1x128xf32>
    %272 = arith.addf %270, %271 : vector<1x128xf32>
    %273 = vector.shape_cast %272 : vector<1x128xf32> to vector<1x128xf32>
    %274 = vector.broadcast %273 : vector<1x128xf32> to vector<8x128xf32>
    %c0_137 = arith.constant 0 : index
    %c0_138 = arith.constant 0 : index
    %c0_139 = arith.constant 0 : index
    %275 = vector.load %arg14[%c0_137, %c0_138, %c0_139] : memref<1x8x128xf32, #tpu.memory_space<vmem>>, vector<1x8x128xf32>
    %276 = vector.shape_cast %275 : vector<1x8x128xf32> to vector<8x128xf32>
    %277 = vector.shape_cast %274 : vector<8x128xf32> to vector<1x8x128xf32>
    tpu.vector_store %arg14[%c0_137, %c0_138, %c0_139], %277 {strides = array<i32>} : memref<1x8x128xf32, #tpu.memory_space<vmem>>, vector<1x8x128xf32>,
    return
  }
  func.func @transform_0(%arg0: i32) -> (i32, i32, i32) {
    %c0_i32 = arith.constant 0 : i32
    %c0_i32_0 = arith.constant 0 : i32
    %c0_i32_1 = arith.constant 0 : i32
    return %arg0, %c0_i32, %c0_i32_0 : i32, i32, i32
  }
  func.func @transform_1(%arg0: i32) -> (i32, i32, i32) {
    %c0_i32 = arith.constant 0 : i32
    %c0_i32_0 = arith.constant 0 : i32
    %c0_i32_1 = arith.constant 0 : i32
    return %arg0, %c0_i32, %c0_i32_0 : i32, i32, i32
  }
  func.func @transform_2(%arg0: i32) -> (i32, i32, i32) {
    %c0_i32 = arith.constant 0 : i32
    %c0_i32_0 = arith.constant 0 : i32
    %c0_i32_1 = arith.constant 0 : i32
    return %arg0, %c0_i32, %c0_i32_0 : i32, i32, i32
  }
  func.func @transform_3(%arg0: i32) -> (i32, i32, i32) {
    %c0_i32 = arith.constant 0 : i32
    %c0_i32_0 = arith.constant 0 : i32
    %c0_i32_1 = arith.constant 0 : i32
    return %arg0, %c0_i32, %c0_i32_0 : i32, i32, i32
  }
  func.func @transform_4(%arg0: i32) -> (i32, i32, i32) {
    %c0_i32 = arith.constant 0 : i32
    %c0_i32_0 = arith.constant 0 : i32
    %c0_i32_1 = arith.constant 0 : i32
    return %arg0, %c0_i32, %c0_i32_0 : i32, i32, i32
  }
  func.func @transform_5(%arg0: i32) -> (i32, i32, i32) {
    %c0_i32 = arith.constant 0 : i32
    %c0_i32_0 = arith.constant 0 : i32
    %c0_i32_1 = arith.constant 0 : i32
    return %arg0, %c0_i32, %c0_i32_0 : i32, i32, i32
  }
  func.func @transform_6(%arg0: i32) -> (i32, i32, i32) {
    %c0_i32 = arith.constant 0 : i32
    %c0_i32_0 = arith.constant 0 : i32
    %c0_i32_1 = arith.constant 0 : i32
    return %arg0, %c0_i32, %c0_i32_0 : i32, i32, i32
  }
  func.func @transform_7(%arg0: i32) -> (i32, i32) {
    %c0_i32 = arith.constant 0 : i32
    %c0_i32_0 = arith.constant 0 : i32
    %c0_i32_1 = arith.constant 0 : i32
    return %c0_i32, %c0_i32_0 : i32, i32
  }
  func.func @transform_8(%arg0: i32) -> (i32, i32, i32) {
    %c0_i32 = arith.constant 0 : i32
    %c0_i32_0 = arith.constant 0 : i32
    %c0_i32_1 = arith.constant 0 : i32
    %c0_i32_2 = arith.constant 0 : i32
    return %c0_i32, %c0_i32_0, %c0_i32_1 : i32, i32, i32
  }
  func.func @transform_9(%arg0: i32) -> (i32, i32, i32) {
    %c0_i32 = arith.constant 0 : i32
    %c0_i32_0 = arith.constant 0 : i32
    %c0_i32_1 = arith.constant 0 : i32
    %c0_i32_2 = arith.constant 0 : i32
    return %c0_i32, %c0_i32_0, %c0_i32_1 : i32, i32, i32
  }
  func.func @transform_10(%arg0: i32) -> (i32, i32) {
    %c0_i32 = arith.constant 0 : i32
    %c0_i32_0 = arith.constant 0 : i32
    %c0_i32_1 = arith.constant 0 : i32
    return %c0_i32, %c0_i32_0 : i32, i32
  }
  func.func @transform_11(%arg0: i32) -> (i32, i32) {
    %c0_i32 = arith.constant 0 : i32
    %c0_i32_0 = arith.constant 0 : i32
    %c0_i32_1 = arith.constant 0 : i32
    return %c0_i32, %c0_i32_0 : i32, i32
  }
  func.func @transform_12(%arg0: i32) -> (i32, i32) {
    %c0_i32 = arith.constant 0 : i32
    %c0_i32_0 = arith.constant 0 : i32
    %c0_i32_1 = arith.constant 0 : i32
    return %c0_i32, %c0_i32_0 : i32, i32
  }
  func.func @transform_13(%arg0: i32) -> (i32, i32, i32) {
    %c0_i32 = arith.constant 0 : i32
    %c0_i32_0 = arith.constant 0 : i32
    %c0_i32_1 = arith.constant 0 : i32
    return %arg0, %c0_i32, %c0_i32_0 : i32, i32, i32
  }
}

</mosaic_0001>

<llo_original>
// kernel: tpu_custom_call.1
$region0: #{tpu_custom_call.1}
  #allocation0 [shape = 'u32[]', space=smem, size = 0x4, offset = 0x4, fixed_abs, tag = 'smem constant byte address 0x4 - core index']
  #allocation1 [shape = 'u32[144,128]{1,0:T(1,128)}', space=vmem, size = 0x12000, scoped, tag = 'internal scratch']
  %s0 = inlined_call_operand.vmem [shape: f32[2,8,128], index: 0, kind: input, shape index: {}]
  %s1 = inlined_call_operand.vmem [shape: f32[2,8,128], index: 1, kind: input, shape index: {}]
  %s2 = inlined_call_operand.hbm [shape: bf16[2,8,128], index: 2, kind: input, shape index: {}]
  %s3 = inlined_call_operand.vmem [shape: s32[2,8,1], index: 3, kind: input, shape index: {}]
  %s4 = inlined_call_operand.hbm [shape: s32[2,1,8], index: 4, kind: input, shape index: {}]
  %s5 = inlined_call_operand.vmem [shape: f32[2,8,1], index: 5, kind: input, shape index: {}]
  %s6 = inlined_call_operand.hbm [shape: bf16[2,8,128], index: 6, kind: input, shape index: {}]
  %s7 = inlined_call_operand.hbm [shape: bf16[128,384], index: 7, kind: input, shape index: {}]
  %s8 = inlined_call_operand.hbm [shape: bf16[3,128,128], index: 8, kind: input, shape index: {}]
  %s9 = inlined_call_operand.hbm [shape: bf16[3,128,128], index: 9, kind: input, shape index: {}]
  %s10 = inlined_call_operand.hbm [shape: bf16[384,128], index: 10, kind: input, shape index: {}]
  %s11 = inlined_call_operand.hbm [shape: bf16[128,128], index: 11, kind: input, shape index: {}]
  %s12 = inlined_call_operand.vmem [shape: f32[16,128], index: 12, kind: input, shape index: {}]
  %s13 = inlined_call_operand.hbm [shape: f32[2,8,128], index: 13, kind: output, shape index: {}]
  %s14 = sld [smem:[#allocation0]]
  $region117: #{tpu_custom_call.1} parent=0
    _
  %s16 = ssub.s32 1, %s14
  %s17 = scalar_select 0, %s16, %s14
  $region1: #{tpu_custom_call.1} parent=0
    #allocation2 [shape = 'u8[4096]{0}', space=vmem, size = 0x1000, scoped, tag = 'input window, operand 2']
    #allocation3 [shape = 's32[2]{0}', space=sflag, size = 0x8, scoped, tag = 'scoped memory for tpu_custom_call.1']
    #allocation4 [shape = 's32[2]{0}', space=sflag, size = 0x8, scoped, tag = 'scoped memory for tpu_custom_call.1']
    #allocation5 [shape = 'u8[1024]{0}', space=vmem, size = 0x400, scoped, tag = 'input window, operand 4']
    #allocation6 [shape = 's32[2]{0}', space=sflag, size = 0x8, scoped, tag = 'scoped memory for tpu_custom_call.1']
    #allocation7 [shape = 'u8[4096]{0}', space=vmem, size = 0x1000, scoped, tag = 'input window, operand 6']
    #allocation8 [shape = 'u8[98304]{0}', space=vmem, size = 0x18000, scoped, tag = 'input window, operand 7, single buffered']
    #allocation9 [shape = 's32[1]{0}', space=sflag, size = 0x4, scoped, tag = 'scoped memory for tpu_custom_call.1']
    #allocation10 [shape = 'u8[98304]{0}', space=vmem, size = 0x18000, scoped, tag = 'input window, operand 8, single buffered']
    #allocation11 [shape = 'u8[98304]{0}', space=vmem, size = 0x18000, scoped, tag = 'input window, operand 9, single buffered']
    #allocation12 [shape = 's32[1]{0}', space=sflag, size = 0x4, scoped, tag = 'scoped memory for tpu_custom_call.1']
    #allocation13 [shape = 'u8[98304]{0}', space=vmem, size = 0x18000, scoped, tag = 'input window, operand 10, single buffered']
    #allocation14 [shape = 'u8[32768]{0}', space=vmem, size = 0x8000, scoped, tag = 'input window, operand 11, single buffered']
    #allocation15 [shape = 's32[1]{0}', space=sflag, size = 0x4, scoped, tag = 'scoped memory for tpu_custom_call.1']
    #allocation16 [shape = 'u8[8192]{0}', space=vmem, size = 0x2000, scoped, tag = 'output window, operand 0']
    %18 = vsyncpa [#allocation3], 0
    %s19 = scalar_lea.sflag [#allocation3], 1
    %20 = vsyncpa %s19, 0
    %21 = vsyncpa [#allocation6], 0
    %s22 = scalar_lea.sflag [#allocation6], 1
    %23 = vsyncpa %s22, 0
    %24 = vsyncpa [#allocation9], 0
    %25 = vsyncpa [#allocation12], 0
    %26 = vsyncpa [#allocation15], 0
    %27 = vsyncpa [#allocation4], 0
    %s28 = scalar_lea.sflag [#allocation4], 1
    %29 = vsyncpa %s28, 0
    loop: start=0, step=1, limit=4
    $region2: #{tpu_custom_call.1} parent=1 // loop_pre_header
      _
    $region3: #{tpu_custom_call.1} parent=1 // loop_header
      %s31 = sphi 0, %s35
      %p32 = scmp.ge.s32.totalorder %s31, 4
      %s41 = sphi 0, %s43
      %s44 = sphi 0, %s41
      %s45 = sphi 0, %s44
      %s61 = sphi 0, %s45
      %s67 = sphi 0, %s69
      %s70 = sphi 0, %s67
      %s71 = sphi 0, %s70
      %s87 = sphi 0, %s71
      %s93 = sphi 0, %s95
      %s96 = sphi 0, %s93
      %s97 = sphi 0, %s96
      %s113 = sphi 0, %s97
      %s119 = sphi 0, %s121
      %s122 = sphi 0, %s119
      %s123 = sphi 0, %s122
      %s139 = sphi 0, %s123
      %s145 = sphi 0, %s147
      %s148 = sphi 0, %s145
      %s149 = sphi 0, %s148
      %s165 = sphi 0, %s149
      %s171 = sphi 0, %s173
      %s174 = sphi 0, %s171
      %s175 = sphi 0, %s174
      %s191 = sphi 0, %s175
      %s197 = sphi 0, %s199
      %s200 = sphi 0, %s197
      %s201 = sphi 0, %s200
      %s217 = sphi 0, %s201
      %s221 = sphi 0, %s221
      %s223 = sphi 0, %s221
      %s224 = sphi 0, %s223
      %s238 = sphi 0, %s224
      %s242 = sphi 0, %s242
      %s244 = sphi 0, %s242
      %s245 = sphi 0, %s244
      %s259 = sphi 0, %s245
      %s263 = sphi 0, %s263
      %s265 = sphi 0, %s263
      %s266 = sphi 0, %s265
      %s280 = sphi 0, %s266
      %s284 = sphi 0, %s284
      %s286 = sphi 0, %s284
      %s287 = sphi 0, %s286
      %s301 = sphi 0, %s287
      %s305 = sphi 0, %s305
      %s307 = sphi 0, %s305
      %s308 = sphi 0, %s307
      %s322 = sphi 0, %s308
      %s326 = sphi 0, %s326
      %s328 = sphi 0, %s326
      %s329 = sphi 0, %s328
      %s343 = sphi 0, %s329
      %s349 = sphi 0, %s351
      %s352 = sphi 0, %s349
      %s353 = sphi 0, %s352
      %s369 = sphi 0, %s353
    $region4: #{tpu_custom_call.1} parent=1 // loop_header_branch
      %34 = sbr.rel (%p32) target = $region8
    $region5: #{tpu_custom_call.1} parent=1 // loop_body
      %s36 = ssub.s32 %s31, 1
      %s37 = ssub.s32 %s31, 2
      %s38 = sadd.s32 %s31, 1
      %s39 = ssub.s32 %s31, %s38
      %p40 = scmp.eq.s32.totalorder %s39, 0
      %s42 = sadd.s32 %s41, 1
      %s43 = scalar_select %p40, %s41, %s42
      %p46 = pneg %p40
      %p47 = scmp.eq.s32.totalorder %s31, 1
      %p48 = por %p46, %p47
      %p49 = scmp.ne.s32.totalorder %s41, %s44
      %p50 = scmp.eq.s32.totalorder %s31, 0
      %p51 = por %p49, %p50
      %p52 = scmp.ne.s32.totalorder %s41, %s44
      %p53 = scmp.eq.s32.totalorder %s36, 1
      %p54 = por %p52, %p53
      %p55 = scmp.ne.s32.totalorder %s44, %s45
      %p56 = scmp.eq.s32.totalorder %s36, 0
      %p57 = por %p55, %p56
      %p58 = scmp.ne.s32.totalorder %s44, %s45
      %p59 = scmp.eq.s32.totalorder %s37, 1
      %p60 = por %p58, %p59
      %p62 = scmp.ne.s32.totalorder %s45, %s61
      %p63 = scmp.eq.s32.totalorder %s37, 0
      %p64 = por %p62, %p63
      %s65 = ssub.s32 %s31, %s38
      %p66 = scmp.eq.s32.totalorder %s65, 0
      %s68 = sadd.s32 %s67, 1
      %s69 = scalar_select %p66, %s67, %s68
      %p72 = pneg %p66
      %p73 = scmp.eq.s32.totalorder %s31, 1
      %p74 = por %p72, %p73
      %p75 = scmp.ne.s32.totalorder %s67, %s70
      %p76 = scmp.eq.s32.totalorder %s31, 0
      %p77 = por %p75, %p76
      %p78 = scmp.ne.s32.totalorder %s67, %s70
      %p79 = scmp.eq.s32.totalorder %s36, 1
      %p80 = por %p78, %p79
      %p81 = scmp.ne.s32.totalorder %s70, %s71
      %p82 = scmp.eq.s32.totalorder %s36, 0
      %p83 = por %p81, %p82
      %p84 = scmp.ne.s32.totalorder %s70, %s71
      %p85 = scmp.eq.s32.totalorder %s37, 1
      %p86 = por %p84, %p85
      %p88 = scmp.ne.s32.totalorder %s71, %s87
      %p89 = scmp.eq.s32.totalorder %s37, 0
      %p90 = por %p88, %p89
      %s91 = ssub.s32 %s31, %s38
      %p92 = scmp.eq.s32.totalorder %s91, 0
      %s94 = sadd.s32 %s93, 1
      %s95 = scalar_select %p92, %s93, %s94
      %p98 = pneg %p92
      %p99 = scmp.eq.s32.totalorder %s31, 1
      %p100 = por %p98, %p99
      %p101 = scmp.ne.s32.totalorder %s93, %s96
      %p102 = scmp.eq.s32.totalorder %s31, 0
      %p103 = por %p101, %p102
      %p104 = scmp.ne.s32.totalorder %s93, %s96
      %p105 = scmp.eq.s32.totalorder %s36, 1
      %p106 = por %p104, %p105
      %p107 = scmp.ne.s32.totalorder %s96, %s97
      %p108 = scmp.eq.s32.totalorder %s36, 0
      %p109 = por %p107, %p108
      %p110 = scmp.ne.s32.totalorder %s96, %s97
      %p111 = scmp.eq.s32.totalorder %s37, 1
      %p112 = por %p110, %p111
      %p114 = scmp.ne.s32.totalorder %s97, %s113
      %p115 = scmp.eq.s32.totalorder %s37, 0
      %p116 = por %p114, %p115
      %s117 = ssub.s32 %s31, %s38
      %p118 = scmp.eq.s32.totalorder %s117, 0
      %s120 = sadd.s32 %s119, 1
      %s121 = scalar_select %p118, %s119, %s120
      %p124 = pneg %p118
      %p125 = scmp.eq.s32.totalorder %s31, 1
      %p126 = por %p124, %p125
      %p127 = scmp.ne.s32.totalorder %s119, %s122
      %p128 = scmp.eq.s32.totalorder %s31, 0
      %p129 = por %p127, %p128
      %p130 = scmp.ne.s32.totalorder %s119, %s122
      %p131 = scmp.eq.s32.totalorder %s36, 1
      %p132 = por %p130, %p131
      %p133 = scmp.ne.s32.totalorder %s122, %s123
      %p134 = scmp.eq.s32.totalorder %s36, 0
      %p135 = por %p133, %p134
      %p136 = scmp.ne.s32.totalorder %s122, %s123
      %p137 = scmp.eq.s32.totalorder %s37, 1
      %p138 = por %p136, %p137
      %p140 = scmp.ne.s32.totalorder %s123, %s139
      %p141 = scmp.eq.s32.totalorder %s37, 0
      %p142 = por %p140, %p141
      %s143 = ssub.s32 %s31, %s38
      %p144 = scmp.eq.s32.totalorder %s143, 0
      %s146 = sadd.s32 %s145, 1
      %s147 = scalar_select %p144, %s145, %s146
      %p150 = pneg %p144
      %p151 = scmp.eq.s32.totalorder %s31, 1
      %p152 = por %p150, %p151
      %p153 = scmp.ne.s32.totalorder %s145, %s148
      %p154 = scmp.eq.s32.totalorder %s31, 0
      %p155 = por %p153, %p154
      %p156 = scmp.ne.s32.totalorder %s145, %s148
      %p157 = scmp.eq.s32.totalorder %s36, 1
      %p158 = por %p156, %p157
      %p159 = scmp.ne.s32.totalorder %s148, %s149
      %p160 = scmp.eq.s32.totalorder %s36, 0
      %p161 = por %p159, %p160
      %p162 = scmp.ne.s32.totalorder %s148, %s149
      %p163 = scmp.eq.s32.totalorder %s37, 1
      %p164 = por %p162, %p163
      %p166 = scmp.ne.s32.totalorder %s149, %s165
      %p167 = scmp.eq.s32.totalorder %s37, 0
      %p168 = por %p166, %p167
      %s169 = ssub.s32 %s31, %s38
      %p170 = scmp.eq.s32.totalorder %s169, 0
      %s172 = sadd.s32 %s171, 1
      %s173 = scalar_select %p170, %s171, %s172
      %p176 = pneg %p170
      %p177 = scmp.eq.s32.totalorder %s31, 1
      %p178 = por %p176, %p177
      %p179 = scmp.ne.s32.totalorder %s171, %s174
      %p180 = scmp.eq.s32.totalorder %s31, 0
      %p181 = por %p179, %p180
      %p182 = scmp.ne.s32.totalorder %s171, %s174
      %p183 = scmp.eq.s32.totalorder %s36, 1
      %p184 = por %p182, %p183
      %p185 = scmp.ne.s32.totalorder %s174, %s175
      %p186 = scmp.eq.s32.totalorder %s36, 0
      %p187 = por %p185, %p186
      %p188 = scmp.ne.s32.totalorder %s174, %s175
      %p189 = scmp.eq.s32.totalorder %s37, 1
      %p190 = por %p188, %p189
      %p192 = scmp.ne.s32.totalorder %s175, %s191
      %p193 = scmp.eq.s32.totalorder %s37, 0
      %p194 = por %p192, %p193
      %s195 = ssub.s32 %s31, %s38
      %p196 = scmp.eq.s32.totalorder %s195, 0
      %s198 = sadd.s32 %s197, 1
      %s199 = scalar_select %p196, %s197, %s198
      %p202 = pneg %p196
      %p203 = scmp.eq.s32.totalorder %s31, 1
      %p204 = por %p202, %p203
      %p205 = scmp.ne.s32.totalorder %s197, %s200
      %p206 = scmp.eq.s32.totalorder %s31, 0
      %p207 = por %p205, %p206
      %p208 = scmp.ne.s32.totalorder %s197, %s200
      %p209 = scmp.eq.s32.totalorder %s36, 1
      %p210 = por %p208, %p209
      %p211 = scmp.ne.s32.totalorder %s200, %s201
      %p212 = scmp.eq.s32.totalorder %s36, 0
      %p213 = por %p211, %p212
      %p214 = scmp.ne.s32.totalorder %s200, %s201
      %p215 = scmp.eq.s32.totalorder %s37, 1
      %p216 = por %p214, %p215
      %p218 = scmp.ne.s32.totalorder %s201, %s217
      %p219 = scmp.eq.s32.totalorder %s37, 0
      %p220 = por %p218, %p219
      %s222 = sadd.s32 %s221, 1
      %p225 = scmp.eq.s32.totalorder %s31, 1
      %p226 = scmp.ne.s32.totalorder %s221, %s223
      %p227 = scmp.eq.s32.totalorder %s31, 0
      %p228 = por %p226, %p227
      %p229 = scmp.ne.s32.totalorder %s221, %s223
      %p230 = scmp.eq.s32.totalorder %s36, 1
      %p231 = por %p229, %p230
      %p232 = scmp.ne.s32.totalorder %s223, %s224
      %p233 = scmp.eq.s32.totalorder %s36, 0
      %p234 = por %p232, %p233
      %p235 = scmp.ne.s32.totalorder %s223, %s224
      %p236 = scmp.eq.s32.totalorder %s37, 1
      %p237 = por %p235, %p236
      %p239 = scmp.ne.s32.totalorder %s224, %s238
      %p240 = scmp.eq.s32.totalorder %s37, 0
      %p241 = por %p239, %p240
      %s243 = sadd.s32 %s242, 1
      %p246 = scmp.eq.s32.totalorder %s31, 1
      %p247 = scmp.ne.s32.totalorder %s242, %s244
      %p248 = scmp.eq.s32.totalorder %s31, 0
      %p249 = por %p247, %p248
      %p250 = scmp.ne.s32.totalorder %s242, %s244
      %p251 = scmp.eq.s32.totalorder %s36, 1
      %p252 = por %p250, %p251
      %p253 = scmp.ne.s32.totalorder %s244, %s245
      %p254 = scmp.eq.s32.totalorder %s36, 0
      %p255 = por %p253, %p254
      %p256 = scmp.ne.s32.totalorder %s244, %s245
      %p257 = scmp.eq.s32.totalorder %s37, 1
      %p258 = por %p256, %p257
      %p260 = scmp.ne.s32.totalorder %s245, %s259
      %p261 = scmp.eq.s32.totalorder %s37, 0
      %p262 = por %p260, %p261
      %s264 = sadd.s32 %s263, 1
      %p267 = scmp.eq.s32.totalorder %s31, 1
      %p268 = scmp.ne.s32.totalorder %s263, %s265
      %p269 = scmp.eq.s32.totalorder %s31, 0
      %p270 = por %p268, %p269
      %p271 = scmp.ne.s32.totalorder %s263, %s265
      %p272 = scmp.eq.s32.totalorder %s36, 1
      %p273 = por %p271, %p272
      %p274 = scmp.ne.s32.totalorder %s265, %s266
      %p275 = scmp.eq.s32.totalorder %s36, 0
      %p276 = por %p274, %p275
      %p277 = scmp.ne.s32.totalorder %s265, %s266
      %p278 = scmp.eq.s32.totalorder %s37, 1
      %p279 = por %p277, %p278
      %p281 = scmp.ne.s32.totalorder %s266, %s280
      %p282 = scmp.eq.s32.totalorder %s37, 0
      %p283 = por %p281, %p282
      %s285 = sadd.s32 %s284, 1
      %p288 = scmp.eq.s32.totalorder %s31, 1
      %p289 = scmp.ne.s32.totalorder %s284, %s286
      %p290 = scmp.eq.s32.totalorder %s31, 0
      %p291 = por %p289, %p290
      %p292 = scmp.ne.s32.totalorder %s284, %s286
      %p293 = scmp.eq.s32.totalorder %s36, 1
      %p294 = por %p292, %p293
      %p295 = scmp.ne.s32.totalorder %s286, %s287
      %p296 = scmp.eq.s32.totalorder %s36, 0
      %p297 = por %p295, %p296
      %p298 = scmp.ne.s32.totalorder %s286, %s287
      %p299 = scmp.eq.s32.totalorder %s37, 1
      %p300 = por %p298, %p299
      %p302 = scmp.ne.s32.totalorder %s287, %s301
      %p303 = scmp.eq.s32.totalorder %s37, 0
      %p304 = por %p302, %p303
      %s306 = sadd.s32 %s305, 1
      %p309 = scmp.eq.s32.totalorder %s31, 1
      %p310 = scmp.ne.s32.totalorder %s305, %s307
      %p311 = scmp.eq.s32.totalorder %s31, 0
      %p312 = por %p310, %p311
      %p313 = scmp.ne.s32.totalorder %s305, %s307
      %p314 = scmp.eq.s32.totalorder %s36, 1
      %p315 = por %p313, %p314
      %p316 = scmp.ne.s32.totalorder %s307, %s308
      %p317 = scmp.eq.s32.totalorder %s36, 0
      %p318 = por %p316, %p317
      %p319 = scmp.ne.s32.totalorder %s307, %s308
      %p320 = scmp.eq.s32.totalorder %s37, 1
      %p321 = por %p319, %p320
      %p323 = scmp.ne.s32.totalorder %s308, %s322
      %p324 = scmp.eq.s32.totalorder %s37, 0
      %p325 = por %p323, %p324
      %s327 = sadd.s32 %s326, 1
      %p330 = scmp.eq.s32.totalorder %s31, 1
      %p331 = scmp.ne.s32.totalorder %s326, %s328
      %p332 = scmp.eq.s32.totalorder %s31, 0
      %p333 = por %p331, %p332
      %p334 = scmp.ne.s32.totalorder %s326, %s328
      %p335 = scmp.eq.s32.totalorder %s36, 1
      %p336 = por %p334, %p335
      %p337 = scmp.ne.s32.totalorder %s328, %s329
      %p338 = scmp.eq.s32.totalorder %s36, 0
      %p339 = por %p337, %p338
      %p340 = scmp.ne.s32.totalorder %s328, %s329
      %p341 = scmp.eq.s32.totalorder %s37, 1
      %p342 = por %p340, %p341
      %p344 = scmp.ne.s32.totalorder %s329, %s343
      %p345 = scmp.eq.s32.totalorder %s37, 0
      %p346 = por %p344, %p345
      %s347 = ssub.s32 %s31, %s38
      %p348 = scmp.eq.s32.totalorder %s347, 0
      %s350 = sadd.s32 %s349, 1
      %s351 = scalar_select %p348, %s349, %s350
      %p354 = pneg %p348
      %p355 = scmp.eq.s32.totalorder %s31, 1
      %p356 = por %p354, %p355
      %p357 = scmp.ne.s32.totalorder %s349, %s352
      %p358 = scmp.eq.s32.totalorder %s31, 0
      %p359 = por %p357, %p358
      %p360 = scmp.ne.s32.totalorder %s349, %s352
      %p361 = scmp.eq.s32.totalorder %s36, 1
      %p362 = por %p360, %p361
      %p363 = scmp.ne.s32.totalorder %s352, %s353
      %p364 = scmp.eq.s32.totalorder %s36, 0
      %p365 = por %p363, %p364
      %p366 = scmp.ne.s32.totalorder %s352, %s353
      %p367 = scmp.eq.s32.totalorder %s37, 1
      %p368 = por %p366, %p367
      %p370 = scmp.ne.s32.totalorder %s353, %s369
      %p371 = scmp.eq.s32.totalorder %s37, 0
      %p372 = por %p370, %p371
      %p373 = scmp.le.s32.totalorder 1, %s31
      %p374 = scmp.lt.s32.totalorder %s31, 3
      %p375 = pnand %p373, %p374
      %p376 = pneg %p375
      // Predicated region
      $region9: #{tpu_custom_call.1} parent=5 // pred_check
        _
      $region10: #{tpu_custom_call.1} parent=5 // pred_check_branch
        %378 = sbr.rel (%p375) target = $region12
      $region11: #{tpu_custom_call.1} parent=5 // pred_region
        %s379 = ssub.s32 %s31, 1
        // Predicated region
        $region13: #{tpu_custom_call.1} parent=11 // pred_check
          %p380 = pneg %p234
        $region14: #{tpu_custom_call.1} parent=11 // pred_check_branch
          %382 = sbr.rel (%p380) target = $region16
        $region15: #{tpu_custom_call.1} parent=11 // pred_region
          %s384 = ssub.s32 3072, 3072
          %385 = vsyncadd [#allocation9], %s384
          %s386 = sshll.u32 [#allocation8], 4
          %s387 = int_to_ptr.vmem [resolvable:$true] %s386
          %392 = dma.hbm_to_vmem [thread:$0]  %s7, 3072, %s387, [#allocation9], 192, 192, 12
        $region16: #{tpu_custom_call.1} parent=11 // pred_fallthru
          _
        // Predicated region
        $region17: #{tpu_custom_call.1} parent=11 // pred_check
          %p393 = pneg %p255
        $region18: #{tpu_custom_call.1} parent=11 // pred_check_branch
          %395 = sbr.rel (%p393) target = $region20
        $region19: #{tpu_custom_call.1} parent=11 // pred_region
          %s397 = ssub.s32 3072, 3072
          %398 = vsyncadd [#allocation9], %s397
          %s399 = sshll.u32 [#allocation10], 4
          %s400 = int_to_ptr.vmem [resolvable:$true] %s399
          %405 = dma.hbm_to_vmem [thread:$0]  %s8, 3072, %s400, [#allocation9], 64, 64, 4
        $region20: #{tpu_custom_call.1} parent=11 // pred_fallthru
          _
        // Predicated region
        $region21: #{tpu_custom_call.1} parent=11 // pred_check
          %p406 = pneg %p276
        $region22: #{tpu_custom_call.1} parent=11 // pred_check_branch
          %408 = sbr.rel (%p406) target = $region24
        $region23: #{tpu_custom_call.1} parent=11 // pred_region
          %s410 = ssub.s32 3072, 3072
          %411 = vsyncadd [#allocation12], %s410
          %s412 = sshll.u32 [#allocation11], 4
          %s413 = int_to_ptr.vmem [resolvable:$true] %s412
          %418 = dma.hbm_to_vmem [thread:$0]  %s9, 3072, %s413, [#allocation12], 64, 64, 4
        $region24: #{tpu_custom_call.1} parent=11 // pred_fallthru
          _
        // Predicated region
        $region25: #{tpu_custom_call.1} parent=11 // pred_check
          %p419 = pneg %p297
        $region26: #{tpu_custom_call.1} parent=11 // pred_check_branch
          %421 = sbr.rel (%p419) target = $region28
        $region27: #{tpu_custom_call.1} parent=11 // pred_region
          %s423 = ssub.s32 3072, 3072
          %424 = vsyncadd [#allocation12], %s423
          %s425 = sshll.u32 [#allocation13], 4
          %s426 = int_to_ptr.vmem [resolvable:$true] %s425
          %431 = dma.hbm_to_vmem [thread:$0]  %s10, 3072, %s426, [#allocation12], 64, 64, 4
        $region28: #{tpu_custom_call.1} parent=11 // pred_fallthru
          _
        // Predicated region
        $region29: #{tpu_custom_call.1} parent=11 // pred_check
          %p432 = pneg %p318
        $region30: #{tpu_custom_call.1} parent=11 // pred_check_branch
          %434 = sbr.rel (%p432) target = $region32
        $region31: #{tpu_custom_call.1} parent=11 // pred_region
          %s436 = ssub.s32 1024, 1024
          %437 = vsyncadd [#allocation15], %s436
          %s438 = sshll.u32 [#allocation14], 4
          %s439 = int_to_ptr.vmem [resolvable:$true] %s438
          %444 = dma.hbm_to_vmem [thread:$0]  %s11, 1024, %s439, [#allocation15], 64, 64, 4
        $region32: #{tpu_custom_call.1} parent=11 // pred_fallthru
          _
        // Predicated region
        $region33: #{tpu_custom_call.1} parent=11 // pred_check
          %p445 = pneg %p339
        $region34: #{tpu_custom_call.1} parent=11 // pred_check_branch
          %447 = sbr.rel (%p445) target = $region36
        $region35: #{tpu_custom_call.1} parent=11 // pred_region
          _
        $region36: #{tpu_custom_call.1} parent=11 // pred_fallthru
          _
      $region12: #{tpu_custom_call.1} parent=5 // pred_fallthru
        _
      %p448 = scmp.lt.s32.totalorder %s31, 2
      // Predicated region
      $region37: #{tpu_custom_call.1} parent=5 // pred_check
        %p449 = pneg %p448
      $region38: #{tpu_custom_call.1} parent=5 // pred_check_branch
        %451 = sbr.rel (%p449) target = $region40
      $region39: #{tpu_custom_call.1} parent=5 // pred_region
        // Predicated region
        $region41: #{tpu_custom_call.1} parent=39 // pred_check
          %p452 = pneg %p51
        $region42: #{tpu_custom_call.1} parent=39 // pred_check_branch
          %454 = sbr.rel (%p452) target = $region44
        $region43: #{tpu_custom_call.1} parent=39 // pred_region
          %p455 = scmp.lt.s32.totalorder %s31, 1
          %s456 = scalar_select %p455, %s31, 1
          %s457 = smul.addr %s456, 8
          %s458 = scalar_lea.vmem %s0, %s457
        $region44: #{tpu_custom_call.1} parent=39 // pred_fallthru
          _
        // Predicated region
        $region45: #{tpu_custom_call.1} parent=39 // pred_check
          %p459 = pneg %p77
        $region46: #{tpu_custom_call.1} parent=39 // pred_check_branch
          %461 = sbr.rel (%p459) target = $region48
        $region47: #{tpu_custom_call.1} parent=39 // pred_region
          %p462 = scmp.lt.s32.totalorder %s31, 1
          %s463 = scalar_select %p462, %s31, 1
          %s464 = smul.addr %s463, 8
          %s465 = scalar_lea.vmem %s1, %s464
        $region48: #{tpu_custom_call.1} parent=39 // pred_fallthru
          _
        // Predicated region
        $region49: #{tpu_custom_call.1} parent=39 // pred_check
          %p466 = pneg %p103
        $region50: #{tpu_custom_call.1} parent=39 // pred_check_branch
          %468 = sbr.rel (%p466) target = $region52
        $region51: #{tpu_custom_call.1} parent=39 // pred_region
          %s469 = sand.u32 %s93, 1
          %s470 = scalar_lea.sflag [#allocation3], %s469
          %s471 = sand.u32 %s93, 1
          %s472 = smul.addr %s471, 4
          %s473 = scalar_lea.vmem [#allocation2], %s472
          %s475 = ssub.s32 64, 64
          %476 = vsyncadd %s470, %s475
          %s477 = smul.addr %s31, 64
          %s478 = scalar_lea.hbm %s2, %s477
          %s480 = sshll.u32 %s473, 4
          %s481 = int_to_ptr.vmem [resolvable:$true] %s480
          %483 = dma.hbm_to_vmem [thread:$0]  %s478, 64, %s481, %s470
        $region52: #{tpu_custom_call.1} parent=39 // pred_fallthru
          _
        // Predicated region
        $region53: #{tpu_custom_call.1} parent=39 // pred_check
          %p484 = pneg %p129
        $region54: #{tpu_custom_call.1} parent=39 // pred_check_branch
          %486 = sbr.rel (%p484) target = $region56
        $region55: #{tpu_custom_call.1} parent=39 // pred_region
          %p487 = scmp.lt.s32.totalorder %s31, 1
          %s488 = scalar_select %p487, %s31, 1
          %s489 = smul.addr %s488, 8
          %s490 = scalar_lea.vmem %s3, %s489
        $region56: #{tpu_custom_call.1} parent=39 // pred_fallthru
          _
        // Predicated region
        $region57: #{tpu_custom_call.1} parent=39 // pred_check
          %p491 = pneg %p155
        $region58: #{tpu_custom_call.1} parent=39 // pred_check_branch
          %493 = sbr.rel (%p491) target = $region60
        $region59: #{tpu_custom_call.1} parent=39 // pred_region
          %s494 = sand.u32 %s31, 1
          %s495 = scalar_lea.sflag [#allocation6], %s494
          %s496 = sand.u32 %s145, 1
          %s497 = scalar_lea.vmem [#allocation5], %s496
          %s499 = ssub.s32 16, 16
          %500 = vsyncadd %s495, %s499
          %s501 = smul.addr %s31, 16
          %s502 = scalar_lea.hbm %s4, %s501
          %s504 = sshll.u32 %s497, 4
          %s505 = int_to_ptr.vmem [resolvable:$true] %s504
          %507 = dma.hbm_to_vmem [thread:$0]  %s502, 16, %s505, %s495
        $region60: #{tpu_custom_call.1} parent=39 // pred_fallthru
          _
        // Predicated region
        $region61: #{tpu_custom_call.1} parent=39 // pred_check
          %p508 = pneg %p181
        $region62: #{tpu_custom_call.1} parent=39 // pred_check_branch
          %510 = sbr.rel (%p508) target = $region64
        $region63: #{tpu_custom_call.1} parent=39 // pred_region
          %p511 = scmp.lt.s32.totalorder %s31, 1
          %s512 = scalar_select %p511, %s31, 1
          %s513 = smul.addr %s512, 8
          %s514 = scalar_lea.vmem %s5, %s513
        $region64: #{tpu_custom_call.1} parent=39 // pred_fallthru
          _
        // Predicated region
        $region65: #{tpu_custom_call.1} parent=39 // pred_check
          %p515 = pneg %p207
        $region66: #{tpu_custom_call.1} parent=39 // pred_check_branch
          %517 = sbr.rel (%p515) target = $region68
        $region67: #{tpu_custom_call.1} parent=39 // pred_region
          %s518 = sand.u32 %s31, 1
          %s519 = scalar_lea.sflag [#allocation6], %s518
          %s520 = sand.u32 %s197, 1
          %s521 = smul.addr %s520, 4
          %s522 = scalar_lea.vmem [#allocation7], %s521
          %s524 = ssub.s32 64, 64
          %525 = vsyncadd %s519, %s524
          %s526 = smul.addr %s31, 64
          %s527 = scalar_lea.hbm %s6, %s526
          %s529 = sshll.u32 %s522, 4
          %s530 = int_to_ptr.vmem [resolvable:$true] %s529
          %532 = dma.hbm_to_vmem [thread:$0]  %s527, 64, %s530, %s519
        $region68: #{tpu_custom_call.1} parent=39 // pred_fallthru
          _
      $region40: #{tpu_custom_call.1} parent=5 // pred_fallthru
        _
      %p533 = scmp.le.s32.totalorder 1, %s31
      %p534 = scmp.lt.s32.totalorder %s31, 3
      %p535 = pnand %p533, %p534
      %p536 = pneg %p535
      // Predicated region
      $region69: #{tpu_custom_call.1} parent=5 // pred_check
        _
      $region70: #{tpu_custom_call.1} parent=5 // pred_check_branch
        %538 = sbr.rel (%p535) target = $region72
      $region71: #{tpu_custom_call.1} parent=5 // pred_region
        %s539 = ssub.s32 %s31, 1
        %s540 = sand.u32 %s96, 1
        %s541 = scalar_lea.sflag [#allocation3], %s540
        %s542 = sand.u32 %s96, 1
        %s543 = smul.addr %s542, 4
        %s544 = scalar_lea.vmem [#allocation2], %s543
        // Predicated region
        $region73: #{tpu_custom_call.1} parent=71 // pred_check
          %p545 = pneg %p109
        $region74: #{tpu_custom_call.1} parent=71 // pred_check_branch
          %547 = sbr.rel (%p545) target = $region76
        $region75: #{tpu_custom_call.1} parent=71 // pred_region
          %548 = dma.done %s541, 64
        $region76: #{tpu_custom_call.1} parent=71 // pred_fallthru
          _
        %s549 = sand.u32 %s36, 1
        %s550 = scalar_lea.sflag [#allocation6], %s549
        %s551 = sand.u32 %s148, 1
        %s552 = scalar_lea.vmem [#allocation5], %s551
        // Predicated region
        $region77: #{tpu_custom_call.1} parent=71 // pred_check
          %p553 = pneg %p161
        $region78: #{tpu_custom_call.1} parent=71 // pred_check_branch
          %555 = sbr.rel (%p553) target = $region80
        $region79: #{tpu_custom_call.1} parent=71 // pred_region
          %556 = dma.done %s550, 16
        $region80: #{tpu_custom_call.1} parent=71 // pred_fallthru
          _
        %s557 = sand.u32 %s36, 1
        %s558 = scalar_lea.sflag [#allocation6], %s557
        %s559 = sand.u32 %s200, 1
        %s560 = smul.addr %s559, 4
        %s561 = scalar_lea.vmem [#allocation7], %s560
        // Predicated region
        $region81: #{tpu_custom_call.1} parent=71 // pred_check
          %p562 = pneg %p213
        $region82: #{tpu_custom_call.1} parent=71 // pred_check_branch
          %564 = sbr.rel (%p562) target = $region84
        $region83: #{tpu_custom_call.1} parent=71 // pred_region
          %565 = dma.done %s558, 64
        $region84: #{tpu_custom_call.1} parent=71 // pred_fallthru
          _
        // Predicated region
        $region85: #{tpu_custom_call.1} parent=71 // pred_check
          %p566 = pneg %p234
        $region86: #{tpu_custom_call.1} parent=71 // pred_check_branch
          %568 = sbr.rel (%p566) target = $region88
        $region87: #{tpu_custom_call.1} parent=71 // pred_region
          %569 = dma.done [#allocation9], 3072
        $region88: #{tpu_custom_call.1} parent=71 // pred_fallthru
          _
        // Predicated region
        $region89: #{tpu_custom_call.1} parent=71 // pred_check
          %p570 = pneg %p255
        $region90: #{tpu_custom_call.1} parent=71 // pred_check_branch
          %572 = sbr.rel (%p570) target = $region92
        $region91: #{tpu_custom_call.1} parent=71 // pred_region
          %573 = dma.done [#allocation9], 3072
        $region92: #{tpu_custom_call.1} parent=71 // pred_fallthru
          _
        // Predicated region
        $region93: #{tpu_custom_call.1} parent=71 // pred_check
          %p574 = pneg %p276
        $region94: #{tpu_custom_call.1} parent=71 // pred_check_branch
          %576 = sbr.rel (%p574) target = $region96
        $region95: #{tpu_custom_call.1} parent=71 // pred_region
          %577 = dma.done [#allocation12], 3072
        $region96: #{tpu_custom_call.1} parent=71 // pred_fallthru
          _
        // Predicated region
        $region97: #{tpu_custom_call.1} parent=71 // pred_check
          %p578 = pneg %p297
        $region98: #{tpu_custom_call.1} parent=71 // pred_check_branch
          %580 = sbr.rel (%p578) target = $region100
        $region99: #{tpu_custom_call.1} parent=71 // pred_region
          %581 = dma.done [#allocation12], 3072
        $region100: #{tpu_custom_call.1} parent=71 // pred_fallthru
          _
        // Predicated region
        $region101: #{tpu_custom_call.1} parent=71 // pred_check
          %p582 = pneg %p318
        $region102: #{tpu_custom_call.1} parent=71 // pred_check_branch
          %584 = sbr.rel (%p582) target = $region104
        $region103: #{tpu_custom_call.1} parent=71 // pred_region
          %585 = dma.done [#allocation15], 1024
        $region104: #{tpu_custom_call.1} parent=71 // pred_fallthru
          _
        %p586 = scmp.lt.s32.totalorder %s36, 1
        %s587 = scalar_select %p586, %s36, 1
        %s588 = smul.addr %s587, 8
        %s589 = scalar_lea.vmem %s0, %s588
        %p590 = pneg %p57
        %p591 = pneg %p54
        %p592 = scmp.lt.s32.totalorder %s36, 1
        %s593 = scalar_select %p592, %s36, 1
        %s594 = smul.addr %s593, 8
        %s595 = scalar_lea.vmem %s1, %s594
        %p596 = pneg %p83
        %p597 = pneg %p80
        %s598 = sand.u32 %s96, 1
        %s599 = scalar_lea.sflag [#allocation3], %s598
        %s600 = sand.u32 %s96, 1
        %s601 = smul.addr %s600, 4
        %s602 = scalar_lea.vmem [#allocation2], %s601
        %p603 = pneg %p109
        %p604 = pneg %p106
        %p605 = scmp.lt.s32.totalorder %s36, 1
        %s606 = scalar_select %p605, %s36, 1
        %s607 = smul.addr %s606, 8
        %s608 = scalar_lea.vmem %s3, %s607
        %p609 = pneg %p135
        %p610 = pneg %p132
        %s611 = sand.u32 %s36, 1
        %s612 = scalar_lea.sflag [#allocation6], %s611
        %s613 = sand.u32 %s148, 1
        %s614 = scalar_lea.vmem [#allocation5], %s613
        %p615 = pneg %p161
        %p616 = pneg %p158
        %p617 = scmp.lt.s32.totalorder %s36, 1
        %s618 = scalar_select %p617, %s36, 1
        %s619 = smul.addr %s618, 8
        %s620 = scalar_lea.vmem %s5, %s619
        %p621 = pneg %p187
        %p622 = pneg %p184
        %s623 = sand.u32 %s36, 1
        %s624 = scalar_lea.sflag [#allocation6], %s623
        %s625 = sand.u32 %s200, 1
        %s626 = smul.addr %s625, 4
        %s627 = scalar_lea.vmem [#allocation7], %s626
        %p628 = pneg %p213
        %p629 = pneg %p210
        %p630 = pneg %p234
        %p631 = pneg %p231
        %p632 = pneg %p255
        %p633 = pneg %p252
        %p634 = pneg %p276
        %p635 = pneg %p273
        %p636 = pneg %p297
        %p637 = pneg %p294
        %p638 = pneg %p318
        %p639 = pneg %p315
        %p640 = pneg %p339
        %p641 = pneg %p336
        %p642 = pneg %p365
        %p643 = pneg %p362
        %s644 = sand.u32 %s352, 1
        %s645 = scalar_lea.sflag [#allocation4], %s644
        %s646 = sand.u32 %s352, 1
        %s647 = smul.addr %s646, 8
        %s648 = scalar_lea.vmem [#allocation16], %s647
        %p649 = scmp.lt.s32.totalorder %s36, 1
        %s650 = scalar_select %p649, %s36, 1
        %s651 = smul.addr %s650, 8
        %s652 = scalar_lea.vmem %s0, %s651
        %p653 = scmp.lt.s32.totalorder %s36, 1
        %s654 = scalar_select %p653, %s36, 1
        %s655 = smul.addr %s654, 8
        %s656 = scalar_lea.vmem %s1, %s655
        %p657 = scmp.lt.s32.totalorder %s36, 1
        %s658 = scalar_select %p657, %s36, 1
        %s659 = smul.addr %s658, 8
        %s660 = scalar_lea.vmem %s3, %s659
        %p661 = scmp.lt.s32.totalorder %s36, 1
        %s662 = scalar_select %p661, %s36, 1
        %s663 = smul.addr %s662, 8
        %s664 = scalar_lea.vmem %s5, %s663
        %v666 = vld [vmem:[%s544] sm:$0xf]
        %v667 = vld [vmem:[#allocation8] sm:$0xff]
        %v668 = vld [vmem:[#allocation8 + $0x8] sm:$0xf]
        %v669 = vld [vmem:[#allocation8 + $0xc] sm:$0xff]
        %v670 = vld [vmem:[#allocation8 + $0x14] sm:$0xf]
        %v671 = vld [vmem:[#allocation8 + $0x18] sm:$0xff]
        %v672 = vld [vmem:[#allocation8 + $0x20] sm:$0xf]
        %v673 = vld [vmem:[#allocation8 + $0x24] sm:$0xff]
        %v674 = vld [vmem:[#allocation8 + $0x2c] sm:$0xf]
        %v675 = vld [vmem:[#allocation8 + $0x30] sm:$0xff]
        %v676 = vld [vmem:[#allocation8 + $0x38] sm:$0xf]
        %v677 = vld [vmem:[#allocation8 + $0x3c] sm:$0xff]
        %v678 = vld [vmem:[#allocation8 + $0x44] sm:$0xf]
        %v679 = vld [vmem:[#allocation8 + $0x48] sm:$0xff]
        %v680 = vld [vmem:[#allocation8 + $0x50] sm:$0xf]
        %v681 = vld [vmem:[#allocation8 + $0x54] sm:$0xff]
        %v682 = vld [vmem:[#allocation8 + $0x5c] sm:$0xf]
        %v683 = vld [vmem:[#allocation8 + $0x60] sm:$0xff]
        %v684 = vld [vmem:[#allocation8 + $0x68] sm:$0xf]
        %v685 = vld [vmem:[#allocation8 + $0x6c] sm:$0xff]
        %v686 = vld [vmem:[#allocation8 + $0x74] sm:$0xf]
        %v687 = vld [vmem:[#allocation8 + $0x78] sm:$0xff]
        %v688 = vld [vmem:[#allocation8 + $0x80] sm:$0xf]
        %v689 = vld [vmem:[#allocation8 + $0x84] sm:$0xff]
        %v690 = vld [vmem:[#allocation8 + $0x8c] sm:$0xf]
        %v691 = vld [vmem:[#allocation8 + $0x90] sm:$0xff]
        %v692 = vld [vmem:[#allocation8 + $0x98] sm:$0xf]
        %v693 = vld [vmem:[#allocation8 + $0x9c] sm:$0xff]
        %v694 = vld [vmem:[#allocation8 + $0xa4] sm:$0xf]
        %v695 = vld [vmem:[#allocation8 + $0xa8] sm:$0xff]
        %v696 = vld [vmem:[#allocation8 + $0xb0] sm:$0xf]
        %v697 = vld [vmem:[#allocation8 + $0xb4] sm:$0xff]
        %v698 = vld [vmem:[#allocation8 + $0xbc] sm:$0xf]
        %v731 = vunpack.c.l.b16 %v667
        %v732 = vunpack.c.h.b16 %v667
        %v733 = vunpack.c.l.b16 %v668
        %v734 = vunpack.c.l.b16 %v669
        %v735 = vunpack.c.h.b16 %v669
        %v736 = vunpack.c.l.b16 %v670
        %v737 = vunpack.c.l.b16 %v671
        %v738 = vunpack.c.h.b16 %v671
        %v739 = vunpack.c.l.b16 %v672
        %v740 = vunpack.c.l.b16 %v673
        %v741 = vunpack.c.h.b16 %v673
        %v742 = vunpack.c.l.b16 %v674
        %v743 = vunpack.c.l.b16 %v675
        %v744 = vunpack.c.h.b16 %v675
        %v745 = vunpack.c.l.b16 %v676
        %v746 = vunpack.c.l.b16 %v677
        %v747 = vunpack.c.h.b16 %v677
        %v748 = vunpack.c.l.b16 %v678
        %v749 = vunpack.c.l.b16 %v679
        %v750 = vunpack.c.h.b16 %v679
        %v751 = vunpack.c.l.b16 %v680
        %v752 = vunpack.c.l.b16 %v681
        %v753 = vunpack.c.h.b16 %v681
        %v754 = vunpack.c.l.b16 %v682
        %v755 = vunpack.c.l.b16 %v683
        %v756 = vunpack.c.h.b16 %v683
        %v757 = vunpack.c.l.b16 %v684
        %v758 = vunpack.c.l.b16 %v685
        %v759 = vunpack.c.h.b16 %v685
        %v760 = vunpack.c.l.b16 %v686
        %v761 = vunpack.c.l.b16 %v687
        %v762 = vunpack.c.h.b16 %v687
        %v763 = vunpack.c.l.b16 %v688
        %v764 = vunpack.c.l.b16 %v689
        %v765 = vunpack.c.h.b16 %v689
        %v766 = vunpack.c.l.b16 %v690
        %v767 = vunpack.c.l.b16 %v691
        %v768 = vunpack.c.h.b16 %v691
        %v769 = vunpack.c.l.b16 %v692
        %v770 = vunpack.c.l.b16 %v693
        %v771 = vunpack.c.h.b16 %v693
        %v772 = vunpack.c.l.b16 %v694
        %v773 = vunpack.c.l.b16 %v695
        %v774 = vunpack.c.h.b16 %v695
        %v775 = vunpack.c.l.b16 %v696
        %v776 = vunpack.c.l.b16 %v697
        %v777 = vunpack.c.h.b16 %v697
        %v778 = vunpack.c.l.b16 %v698
        %v779 = vpack.c.b16 %v734, %v731
        %v780 = vpack.c.b16 %v735, %v732
        %v781 = vpack.c.b16 %v736, %v733
        %v782 = vpack.c.b16 %v740, %v737
        %v783 = vpack.c.b16 %v741, %v738
        %v784 = vpack.c.b16 %v742, %v739
        %v785 = vpack.c.b16 %v746, %v743
        %v786 = vpack.c.b16 %v747, %v744
        %v787 = vpack.c.b16 %v748, %v745
        %v788 = vpack.c.b16 %v752, %v749
        %v789 = vpack.c.b16 %v753, %v750
        %v790 = vpack.c.b16 %v754, %v751
        %v791 = vpack.c.b16 %v758, %v755
        %v792 = vpack.c.b16 %v759, %v756
        %v793 = vpack.c.b16 %v760, %v757
        %v794 = vpack.c.b16 %v764, %v761
        %v795 = vpack.c.b16 %v765, %v762
        %v796 = vpack.c.b16 %v766, %v763
        %v797 = vpack.c.b16 %v770, %v767
        %v798 = vpack.c.b16 %v771, %v768
        %v799 = vpack.c.b16 %v772, %v769
        %v800 = vpack.c.b16 %v776, %v773
        %v801 = vpack.c.b16 %v777, %v774
        %v802 = vpack.c.b16 %v778, %v775
        %827 = vmatprep.subr.bf16.mxu0 %v801
        %828 = vmatpush1.bf16.msra.mxu0 %v800
        %829 = vmatprep.subr.bf16.mxu0 %v798
        %830 = vmatpush1.bf16.msra.mxu0 %v797
        %831 = vmatprep.subr.bf16.mxu0 %v795
        %832 = vmatpush1.bf16.msra.mxu0 %v794
        %833 = vmatprep.subr.bf16.mxu0 %v792
        %834 = vmatpush1.bf16.msra.mxu0 %v791
        %835 = vmatprep.subr.bf16.mxu0 %v789
        %836 = vmatpush1.bf16.msra.mxu0 %v788
        %837 = vmatprep.subr.bf16.mxu0 %v786
        %838 = vmatpush1.bf16.msra.mxu0 %v785
        %839 = vmatprep.subr.bf16.mxu0 %v783
        %840 = vmatpush1.bf16.msra.mxu0 %v782
        %841 = vmatprep.subr.bf16.mxu0 %v780
        %842 = vmatpush1.bf16.msra.mxu0 %v779
        %843 = vmatprep.subr.bf16.mxu0 0
        %844 = vmatpush2.bf16.msra.mxu0 0
        %845 = vmatprep.subr.bf16.mxu0 0
        %846 = vmatpush2.bf16.msra.mxu0 0
        %847 = vmatprep.subr.bf16.mxu0 0
        %848 = vmatpush2.bf16.msra.mxu0 0
        %849 = vmatprep.subr.bf16.mxu0 0
        %850 = vmatpush2.bf16.msra.mxu0 0
        %851 = vmatprep.subr.bf16.mxu0 0
        %852 = vmatpush2.bf16.msra.mxu0 0
        %853 = vmatprep.subr.bf16.mxu0 0
        %854 = vmatpush2.bf16.msra.mxu0 0
        %855 = vmatprep.subr.bf16.mxu0 0
        %856 = vmatpush2.bf16.msra.mxu0 0
        %857 = vmatprep.subr.bf16.mxu0 0
        %858 = vmatpush2.bf16.msra.mxu0 0
        %859 = vmatprep.mubr.bf16.mxu0 0
        %860 = vmatmul.mubr.bf16.gmra.mxu0 %v666
        %v861 = vpop.f32.mrf.mxu0
        %v862 = vadd.f32 0.0, %v861
        %v863 = vpop.f32.mrf.mxu0
        %v864 = vadd.f32 0.0, %v863
        %v865 = vpop.f32.mrf.mxu0
        %v866 = vpop.f32.mrf.mxu0
        %867 = vdwg.mxu0
        %868 = vmatprep.subr.bf16.mxu0 0
        %869 = vmatpush1.bf16.msra.mxu0 %v802
        %870 = vmatprep.subr.bf16.mxu0 0
        %871 = vmatpush1.bf16.msra.mxu0 %v799
        %872 = vmatprep.subr.bf16.mxu0 0
        %873 = vmatpush1.bf16.msra.mxu0 %v796
        %874 = vmatprep.subr.bf16.mxu0 0
        %875 = vmatpush1.bf16.msra.mxu0 %v793
        %876 = vmatprep.subr.bf16.mxu0 0
        %877 = vmatpush1.bf16.msra.mxu0 %v790
        %878 = vmatprep.subr.bf16.mxu0 0
        %879 = vmatpush1.bf16.msra.mxu0 %v787
        %880 = vmatprep.subr.bf16.mxu0 0
        %881 = vmatpush1.bf16.msra.mxu0 %v784
        %882 = vmatprep.subr.bf16.mxu0 0
        %883 = vmatpush1.bf16.msra.mxu0 %v781
        %884 = vmatprep.subr.bf16.mxu0 0
        %885 = vmatpush2.bf16.msra.mxu0 0
        %886 = vmatprep.subr.bf16.mxu0 0
        %887 = vmatpush2.bf16.msra.mxu0 0
        %888 = vmatprep.subr.bf16.mxu0 0
        %889 = vmatpush2.bf16.msra.mxu0 0
        %890 = vmatprep.subr.bf16.mxu0 0
        %891 = vmatpush2.bf16.msra.mxu0 0
        %892 = vmatprep.subr.bf16.mxu0 0
        %893 = vmatpush2.bf16.msra.mxu0 0
        %894 = vmatprep.subr.bf16.mxu0 0
        %895 = vmatpush2.bf16.msra.mxu0 0
        %896 = vmatprep.subr.bf16.mxu0 0
        %897 = vmatpush2.bf16.msra.mxu0 0
        %898 = vmatprep.subr.bf16.mxu0 0
        %899 = vmatpush2.bf16.msra.mxu0 0
        %900 = vmatprep.mubr.bf16.mxu0 0
        %901 = vmatmul.mubr.bf16.gmra.mxu0 %v666
        %v902 = vpop.f32.mrf.mxu0
        %v903 = vadd.f32 0.0, %v902
        %v904 = vpop.f32.mrf.mxu0
        %v905 = vpop.f32.mrf.mxu0
        %v906 = vpop.f32.mrf.mxu0
        %907 = vdwg.mxu0
        %v908 = vld [vmem:[%s652] sm:$0xff]
        %v909 = vld [vmem:[%s660] sm:$0xff]
        %v910 = vld [vmem:[%s552] sm:$0x1]
        %v911 = vlaneseq
        %v912 = vand.u32 %v911, 127
        %913 = vset.pattern.permute.xlu0 0
        %914 = vperm.xlu0 %913, %v909
        %v915 = vpop.permute.xlu0 %914
        %vm916 = vcmp.eq.s32.totalorder %v912, %v915
        %v917 = vsel %vm916, 1.0, 0.0
        %v918 = vpack.c.bf16 %v917, %v917
        %v919 = vlaneseq
        %v920 = vshrl.u32 %v919, 7
        %v921 = vlaneseq
        %v922 = vshrl.u32 %v921, 7
        %v923 = vsub.s32 0, %v922
        %v924 = vrot.slane %v910, %v923
        %vm925 = vcmp.eq.s32.totalorder %v920, %v924
        %v926 = vsel %vm925, 1.0, 0.0
        %v927 = vpack.c.bf16 %v926, %v926
        %v928 = vld [vmem:[%s12 + $0xb] sm:$0x1]
        %v929 = vld [vmem:[%s12] sm:$0x1]
        %v930 = vld [vmem:[%s12 + $0x3] sm:$0x1]
        %v931 = vld [vmem:[%s12 + $0x6] sm:$0x1]
        %v932 = vlaneseq
        %v933 = vshrl.u32 %v932, 7
        %v934 = vsub.s32 0, %v933
        %v935 = vrot.slane %v929, %v934
        %v936 = vadd.f32 %v862, %v935
        %v937 = vpack.c.bf16 %v908, %v908
        %vm938 = vcmask 64512
        %v940 = vsel %vm938, %v918, 0
        %vm942 = vcmask 1043456
        %v944 = vsel %vm942, %v937, 0
        %946 = vmatprep.subr.bf16.mxu0 0
        %947 = vmatpush1.bf16.msra.mxu0 0
        %948 = vmatprep.subr.bf16.mxu0 0
        %949 = vmatpush1.bf16.msra.mxu0 0
        %950 = vmatprep.subr.bf16.mxu0 0
        %951 = vmatpush1.bf16.msra.mxu0 0
        %952 = vmatprep.subr.bf16.mxu0 0
        %953 = vmatpush1.bf16.msra.mxu0 0
        %954 = vmatprep.subr.bf16.mxu0 0
        %955 = vmatpush1.bf16.msra.mxu0 0
        %956 = vmatprep.subr.bf16.mxu0 0
        %957 = vmatpush1.bf16.msra.mxu0 0
        %958 = vmatprep.subr.bf16.mxu0 0
        %959 = vmatpush1.bf16.msra.mxu0 0
        %960 = vmatprep.subr.bf16.mxu0 0
        %961 = vmatpush1.bf16.msra.mxu0 %v944
        %962 = vmatprep.subr.bf16.mxu0 0
        %963 = vmatpush2.bf16.msra.mxu0 0
        %964 = vmatprep.subr.bf16.mxu0 0
        %965 = vmatpush2.bf16.msra.mxu0 0
        %966 = vmatprep.subr.bf16.mxu0 0
        %967 = vmatpush2.bf16.msra.mxu0 0
        %968 = vmatprep.subr.bf16.mxu0 0
        %969 = vmatpush2.bf16.msra.mxu0 0
        %970 = vmatprep.subr.bf16.mxu0 0
        %971 = vmatpush2.bf16.msra.mxu0 0
        %972 = vmatprep.subr.bf16.mxu0 0
        %973 = vmatpush2.bf16.msra.mxu0 0
        %974 = vmatprep.subr.bf16.mxu0 0
        %975 = vmatpush2.bf16.msra.mxu0 0
        %976 = vmatprep.subr.bf16.mxu0 0
        %977 = vmatpush2.bf16.msra.mxu0 0
        %978 = vmatprep.mubr.bf16.mxu0 0
        %979 = vmatmul.mubr.bf16.gmra.mxu0 %v940
        %v980 = vpop.f32.mrf.mxu0
        %v981 = vadd.f32 %v936, %v980
        %v982 = vpop.f32.mrf.mxu0
        %v983 = vpop.f32.mrf.mxu0
        %v984 = vpop.f32.mrf.mxu0
        %985 = vdwg.mxu0
        %v986 = vmax.f32 %v981, 0.0
        %v987 = vpack.c.bf16 %v986, %v986
        %v989 = vsel %vm938, %v927, 0
        %v992 = vsel %vm942, %v987, 0
        %994 = vmatprep.subr.bf16.mxu0 0
        %995 = vmatpush1.bf16.msra.mxu0 0
        %996 = vmatprep.subr.bf16.mxu0 0
        %997 = vmatpush1.bf16.msra.mxu0 0
        %998 = vmatprep.subr.bf16.mxu0 0
        %999 = vmatpush1.bf16.msra.mxu0 0
        %1000 = vmatprep.subr.bf16.mxu0 0
        %1001 = vmatpush1.bf16.msra.mxu0 0
        %1002 = vmatprep.subr.bf16.mxu0 0
        %1003 = vmatpush1.bf16.msra.mxu0 0
        %1004 = vmatprep.subr.bf16.mxu0 0
        %1005 = vmatpush1.bf16.msra.mxu0 0
        %1006 = vmatprep.subr.bf16.mxu0 0
        %1007 = vmatpush1.bf16.msra.mxu0 0
        %1008 = vmatprep.subr.bf16.mxu0 0
        %1009 = vmatpush1.bf16.msra.mxu0 %v992
        %1010 = vmatprep.subr.bf16.mxu0 0
        %1011 = vmatpush2.bf16.msra.mxu0 0
        %1012 = vmatprep.subr.bf16.mxu0 0
        %1013 = vmatpush2.bf16.msra.mxu0 0
        %1014 = vmatprep.subr.bf16.mxu0 0
        %1015 = vmatpush2.bf16.msra.mxu0 0
        %1016 = vmatprep.subr.bf16.mxu0 0
        %1017 = vmatpush2.bf16.msra.mxu0 0
        %1018 = vmatprep.subr.bf16.mxu0 0
        %1019 = vmatpush2.bf16.msra.mxu0 0
        %1020 = vmatprep.subr.bf16.mxu0 0
        %1021 = vmatpush2.bf16.msra.mxu0 0
        %1022 = vmatprep.subr.bf16.mxu0 0
        %1023 = vmatpush2.bf16.msra.mxu0 0
        %1024 = vmatprep.subr.bf16.mxu0 0
        %1025 = vmatpush2.bf16.msra.mxu0 0
        %1026 = vmatprep.mubr.bf16.mxu0 0
        %1027 = vmatmul.mubr.bf16.gmra.mxu0 %v989
        %v1028 = vpop.f32.mrf.mxu0
        %v1029 = vadd.f32 0.0, %v1028
        %v1030 = vpop.f32.mrf.mxu0
        %v1031 = vpop.f32.mrf.mxu0
        %v1032 = vpop.f32.mrf.mxu0
        %1033 = vdwg.mxu0
        %v1034 = vadd.f32 %v928, 1.0
        %s1036 = vtos %v1034
        %v1037 = vstv %s1036
        %v1039 = vmul.f32 %v1037, %v908
        %v1040 = vadd.f32 %v1039, %v1029
        %v1041 = vpack.c.bf16 %v1040, %v1040
        %v1042 = vld [vmem:[#allocation10] sm:$0xf]
        %v1043 = vld [vmem:[#allocation10 + $0x4] sm:$0xf]
        %v1044 = vld [vmem:[#allocation10 + $0x8] sm:$0xf]
        %v1045 = vld [vmem:[#allocation10 + $0xc] sm:$0xf]
        %v1046 = vld [vmem:[#allocation10 + $0x10] sm:$0xf]
        %v1047 = vld [vmem:[#allocation10 + $0x14] sm:$0xf]
        %v1048 = vld [vmem:[#allocation10 + $0x18] sm:$0xf]
        %v1049 = vld [vmem:[#allocation10 + $0x1c] sm:$0xf]
        %v1050 = vld [vmem:[#allocation10 + $0x20] sm:$0xf]
        %v1051 = vld [vmem:[#allocation10 + $0x24] sm:$0xf]
        %v1052 = vld [vmem:[#allocation10 + $0x28] sm:$0xf]
        %v1053 = vld [vmem:[#allocation10 + $0x2c] sm:$0xf]
        %v1054 = vld [vmem:[#allocation10 + $0x30] sm:$0xf]
        %v1055 = vld [vmem:[#allocation10 + $0x34] sm:$0xf]
        %v1056 = vld [vmem:[#allocation10 + $0x38] sm:$0xf]
        %v1057 = vld [vmem:[#allocation10 + $0x3c] sm:$0xf]
        %v1058 = vlaneseq
        %v1059 = vshrl.u32 %v1058, 7
        %v1060 = vsub.s32 0, %v1059
        %v1061 = vrot.slane %v930, %v1060
        %v1078 = vunpack.c.l.b16 %v1042
        %v1079 = vunpack.c.l.b16 %v1043
        %v1080 = vunpack.c.l.b16 %v1044
        %v1081 = vunpack.c.l.b16 %v1045
        %v1082 = vunpack.c.l.b16 %v1046
        %v1083 = vunpack.c.l.b16 %v1047
        %v1084 = vunpack.c.l.b16 %v1048
        %v1085 = vunpack.c.l.b16 %v1049
        %v1086 = vunpack.c.l.b16 %v1050
        %v1087 = vunpack.c.l.b16 %v1051
        %v1088 = vunpack.c.l.b16 %v1052
        %v1089 = vunpack.c.l.b16 %v1053
        %v1090 = vunpack.c.l.b16 %v1054
        %v1091 = vunpack.c.l.b16 %v1055
        %v1092 = vunpack.c.l.b16 %v1056
        %v1093 = vunpack.c.l.b16 %v1057
        %v1094 = vpack.c.b16 %v1079, %v1078
        %v1095 = vpack.c.b16 %v1081, %v1080
        %v1096 = vpack.c.b16 %v1083, %v1082
        %v1097 = vpack.c.b16 %v1085, %v1084
        %v1098 = vpack.c.b16 %v1087, %v1086
        %v1099 = vpack.c.b16 %v1089, %v1088
        %v1100 = vpack.c.b16 %v1091, %v1090
        %v1101 = vpack.c.b16 %v1093, %v1092
        %1110 = vmatprep.subr.bf16.mxu0 0
        %1111 = vmatpush1.bf16.msra.mxu0 %v1101
        %1112 = vmatprep.subr.bf16.mxu0 0
        %1113 = vmatpush1.bf16.msra.mxu0 %v1100
        %1114 = vmatprep.subr.bf16.mxu0 0
        %1115 = vmatpush1.bf16.msra.mxu0 %v1099
        %1116 = vmatprep.subr.bf16.mxu0 0
        %1117 = vmatpush1.bf16.msra.mxu0 %v1098
        %1118 = vmatprep.subr.bf16.mxu0 0
        %1119 = vmatpush1.bf16.msra.mxu0 %v1097
        %1120 = vmatprep.subr.bf16.mxu0 0
        %1121 = vmatpush1.bf16.msra.mxu0 %v1096
        %1122 = vmatprep.subr.bf16.mxu0 0
        %1123 = vmatpush1.bf16.msra.mxu0 %v1095
        %1124 = vmatprep.subr.bf16.mxu0 0
        %1125 = vmatpush1.bf16.msra.mxu0 %v1094
        %1126 = vmatprep.subr.bf16.mxu0 0
        %1127 = vmatpush2.bf16.msra.mxu0 0
        %1128 = vmatprep.subr.bf16.mxu0 0
        %1129 = vmatpush2.bf16.msra.mxu0 0
        %1130 = vmatprep.subr.bf16.mxu0 0
        %1131 = vmatpush2.bf16.msra.mxu0 0
        %1132 = vmatprep.subr.bf16.mxu0 0
        %1133 = vmatpush2.bf16.msra.mxu0 0
        %1134 = vmatprep.subr.bf16.mxu0 0
        %1135 = vmatpush2.bf16.msra.mxu0 0
        %1136 = vmatprep.subr.bf16.mxu0 0
        %1137 = vmatpush2.bf16.msra.mxu0 0
        %1138 = vmatprep.subr.bf16.mxu0 0
        %1139 = vmatpush2.bf16.msra.mxu0 0
        %1140 = vmatprep.subr.bf16.mxu0 0
        %1141 = vmatpush2.bf16.msra.mxu0 0
        %1142 = vmatprep.mubr.bf16.mxu0 0
        %1143 = vmatmul.mubr.bf16.gmra.mxu0 %v1041
        %v1144 = vpop.f32.mrf.mxu0
        %v1145 = vadd.f32 %v1061, %v1144
        %v1146 = vpop.f32.mrf.mxu0
        %v1147 = vpop.f32.mrf.mxu0
        %v1148 = vpop.f32.mrf.mxu0
        %1149 = vdwg.mxu0
        %v1150 = vmax.f32 %v1145, 0.0
        %v1151 = vpack.c.bf16 %v1150, %v1150
        %v1152 = vld [vmem:[#allocation11] sm:$0xf]
        %v1153 = vld [vmem:[#allocation11 + $0x4] sm:$0xf]
        %v1154 = vld [vmem:[#allocation11 + $0x8] sm:$0xf]
        %v1155 = vld [vmem:[#allocation11 + $0xc] sm:$0xf]
        %v1156 = vld [vmem:[#allocation11 + $0x10] sm:$0xf]
        %v1157 = vld [vmem:[#allocation11 + $0x14] sm:$0xf]
        %v1158 = vld [vmem:[#allocation11 + $0x18] sm:$0xf]
        %v1159 = vld [vmem:[#allocation11 + $0x1c] sm:$0xf]
        %v1160 = vld [vmem:[#allocation11 + $0x20] sm:$0xf]
        %v1161 = vld [vmem:[#allocation11 + $0x24] sm:$0xf]
        %v1162 = vld [vmem:[#allocation11 + $0x28] sm:$0xf]
        %v1163 = vld [vmem:[#allocation11 + $0x2c] sm:$0xf]
        %v1164 = vld [vmem:[#allocation11 + $0x30] sm:$0xf]
        %v1165 = vld [vmem:[#allocation11 + $0x34] sm:$0xf]
        %v1166 = vld [vmem:[#allocation11 + $0x38] sm:$0xf]
        %v1167 = vld [vmem:[#allocation11 + $0x3c] sm:$0xf]
        %v1168 = vlaneseq
        %v1169 = vshrl.u32 %v1168, 7
        %v1170 = vsub.s32 0, %v1169
        %v1171 = vrot.slane %v931, %v1170
        %v1188 = vunpack.c.l.b16 %v1152
        %v1189 = vunpack.c.l.b16 %v1153
        %v1190 = vunpack.c.l.b16 %v1154
        %v1191 = vunpack.c.l.b16 %v1155
        %v1192 = vunpack.c.l.b16 %v1156
        %v1193 = vunpack.c.l.b16 %v1157
        %v1194 = vunpack.c.l.b16 %v1158
        %v1195 = vunpack.c.l.b16 %v1159
        %v1196 = vunpack.c.l.b16 %v1160
        %v1197 = vunpack.c.l.b16 %v1161
        %v1198 = vunpack.c.l.b16 %v1162
        %v1199 = vunpack.c.l.b16 %v1163
        %v1200 = vunpack.c.l.b16 %v1164
        %v1201 = vunpack.c.l.b16 %v1165
        %v1202 = vunpack.c.l.b16 %v1166
        %v1203 = vunpack.c.l.b16 %v1167
        %v1204 = vpack.c.b16 %v1189, %v1188
        %v1205 = vpack.c.b16 %v1191, %v1190
        %v1206 = vpack.c.b16 %v1193, %v1192
        %v1207 = vpack.c.b16 %v1195, %v1194
        %v1208 = vpack.c.b16 %v1197, %v1196
        %v1209 = vpack.c.b16 %v1199, %v1198
        %v1210 = vpack.c.b16 %v1201, %v1200
        %v1211 = vpack.c.b16 %v1203, %v1202
        %1220 = vmatprep.subr.bf16.mxu0 0
        %1221 = vmatpush1.bf16.msra.mxu0 %v1211
        %1222 = vmatprep.subr.bf16.mxu0 0
        %1223 = vmatpush1.bf16.msra.mxu0 %v1210
        %1224 = vmatprep.subr.bf16.mxu0 0
        %1225 = vmatpush1.bf16.msra.mxu0 %v1209
        %1226 = vmatprep.subr.bf16.mxu0 0
        %1227 = vmatpush1.bf16.msra.mxu0 %v1208
        %1228 = vmatprep.subr.bf16.mxu0 0
        %1229 = vmatpush1.bf16.msra.mxu0 %v1207
        %1230 = vmatprep.subr.bf16.mxu0 0
        %1231 = vmatpush1.bf16.msra.mxu0 %v1206
        %1232 = vmatprep.subr.bf16.mxu0 0
        %1233 = vmatpush1.bf16.msra.mxu0 %v1205
        %1234 = vmatprep.subr.bf16.mxu0 0
        %1235 = vmatpush1.bf16.msra.mxu0 %v1204
        %1236 = vmatprep.subr.bf16.mxu0 0
        %1237 = vmatpush2.bf16.msra.mxu0 0
        %1238 = vmatprep.subr.bf16.mxu0 0
        %1239 = vmatpush2.bf16.msra.mxu0 0
        %1240 = vmatprep.subr.bf16.mxu0 0
        %1241 = vmatpush2.bf16.msra.mxu0 0
        %1242 = vmatprep.subr.bf16.mxu0 0
        %1243 = vmatpush2.bf16.msra.mxu0 0
        %1244 = vmatprep.subr.bf16.mxu0 0
        %1245 = vmatpush2.bf16.msra.mxu0 0
        %1246 = vmatprep.subr.bf16.mxu0 0
        %1247 = vmatpush2.bf16.msra.mxu0 0
        %1248 = vmatprep.subr.bf16.mxu0 0
        %1249 = vmatpush2.bf16.msra.mxu0 0
        %1250 = vmatprep.subr.bf16.mxu0 0
        %1251 = vmatpush2.bf16.msra.mxu0 0
        %1252 = vmatprep.mubr.bf16.mxu0 0
        %1253 = vmatmul.mubr.bf16.gmra.mxu0 %v1151
        %v1254 = vpop.f32.mrf.mxu0
        %v1255 = vadd.f32 %v1171, %v1254
        %v1256 = vpop.f32.mrf.mxu0
        %v1257 = vpop.f32.mrf.mxu0
        %v1258 = vpop.f32.mrf.mxu0
        %1259 = vdwg.mxu0
        %1260 = vadd.xlane.f32.xlu0 %v1255
        %v1261 = vpop.xlane.xlu0 %1260
        %v1262 = vrcp.pop 128.0
        %v1263 = vmul.f32 %v1261, %v1262
        %v1264 = vsub.f32 %v1255, %v1263
        %v1265 = vmul.f32 %v1264, %v1264
        %1266 = vadd.xlane.f32.xlu0 %v1265
        %v1267 = vpop.xlane.xlu0 %1266
        %v1268 = vmul.f32 %v1267, %v1262
        %v1269 = vadd.f32 %v1268, 1e-05
        %v1270 = vrsqrt.pop %v1269
        %v1271 = vmul.f32 %v1264, %v1270
        %vm1272 = vcmp.gt.f32.partialorder %v1271, 0.0
        %v1273 = vmul.f32 %v1271, 0.1
        %v1274 = vsel %vm1272, %v1271, %v1273
        %v1275 = vld [vmem:[%s12 + $0x1] sm:$0x1]
        %v1276 = vld [vmem:[%s12 + $0x4] sm:$0x1]
        %v1277 = vld [vmem:[%s12 + $0x7] sm:$0x1]
        %v1278 = vlaneseq
        %v1279 = vshrl.u32 %v1278, 7
        %v1280 = vsub.s32 0, %v1279
        %v1281 = vrot.slane %v1275, %v1280
        %v1282 = vadd.f32 %v864, %v1281
        %v1283 = vpack.c.bf16 %v1274, %v1274
        %v1285 = vsel %vm942, %v1283, 0
        %1287 = vmatprep.subr.bf16.mxu0 0
        %1288 = vmatpush1.bf16.msra.mxu0 0
        %1289 = vmatprep.subr.bf16.mxu0 0
        %1290 = vmatpush1.bf16.msra.mxu0 0
        %1291 = vmatprep.subr.bf16.mxu0 0
        %1292 = vmatpush1.bf16.msra.mxu0 0
        %1293 = vmatprep.subr.bf16.mxu0 0
        %1294 = vmatpush1.bf16.msra.mxu0 0
        %1295 = vmatprep.subr.bf16.mxu0 0
        %1296 = vmatpush1.bf16.msra.mxu0 0
        %1297 = vmatprep.subr.bf16.mxu0 0
        %1298 = vmatpush1.bf16.msra.mxu0 0
        %1299 = vmatprep.subr.bf16.mxu0 0
        %1300 = vmatpush1.bf16.msra.mxu0 0
        %1301 = vmatprep.subr.bf16.mxu0 0
        %1302 = vmatpush1.bf16.msra.mxu0 %v1285
        %1303 = vmatprep.subr.bf16.mxu0 0
        %1304 = vmatpush2.bf16.msra.mxu0 0
        %1305 = vmatprep.subr.bf16.mxu0 0
        %1306 = vmatpush2.bf16.msra.mxu0 0
        %1307 = vmatprep.subr.bf16.mxu0 0
        %1308 = vmatpush2.bf16.msra.mxu0 0
        %1309 = vmatprep.subr.bf16.mxu0 0
        %1310 = vmatpush2.bf16.msra.mxu0 0
        %1311 = vmatprep.subr.bf16.mxu0 0
        %1312 = vmatpush2.bf16.msra.mxu0 0
        %1313 = vmatprep.subr.bf16.mxu0 0
        %1314 = vmatpush2.bf16.msra.mxu0 0
        %1315 = vmatprep.subr.bf16.mxu0 0
        %1316 = vmatpush2.bf16.msra.mxu0 0
        %1317 = vmatprep.subr.bf16.mxu0 0
        %1318 = vmatpush2.bf16.msra.mxu0 0
        %1319 = vmatprep.mubr.bf16.mxu0 0
        %1320 = vmatmul.mubr.bf16.gmra.mxu0 %v940
        %v1321 = vpop.f32.mrf.mxu0
        %v1322 = vadd.f32 %v1282, %v1321
        %v1323 = vpop.f32.mrf.mxu0
        %v1324 = vpop.f32.mrf.mxu0
        %v1325 = vpop.f32.mrf.mxu0
        %1326 = vdwg.mxu0
        %v1327 = vmax.f32 %v1322, 0.0
        %v1328 = vpack.c.bf16 %v1327, %v1327
        %v1330 = vsel %vm942, %v1328, 0
        %1332 = vmatprep.subr.bf16.mxu0 0
        %1333 = vmatpush1.bf16.msra.mxu0 0
        %1334 = vmatprep.subr.bf16.mxu0 0
        %1335 = vmatpush1.bf16.msra.mxu0 0
        %1336 = vmatprep.subr.bf16.mxu0 0
        %1337 = vmatpush1.bf16.msra.mxu0 0
        %1338 = vmatprep.subr.bf16.mxu0 0
        %1339 = vmatpush1.bf16.msra.mxu0 0
        %1340 = vmatprep.subr.bf16.mxu0 0
        %1341 = vmatpush1.bf16.msra.mxu0 0
        %1342 = vmatprep.subr.bf16.mxu0 0
        %1343 = vmatpush1.bf16.msra.mxu0 0
        %1344 = vmatprep.subr.bf16.mxu0 0
        %1345 = vmatpush1.bf16.msra.mxu0 0
        %1346 = vmatprep.subr.bf16.mxu0 0
        %1347 = vmatpush1.bf16.msra.mxu0 %v1330
        %1348 = vmatprep.subr.bf16.mxu0 0
        %1349 = vmatpush2.bf16.msra.mxu0 0
        %1350 = vmatprep.subr.bf16.mxu0 0
        %1351 = vmatpush2.bf16.msra.mxu0 0
        %1352 = vmatprep.subr.bf16.mxu0 0
        %1353 = vmatpush2.bf16.msra.mxu0 0
        %1354 = vmatprep.subr.bf16.mxu0 0
        %1355 = vmatpush2.bf16.msra.mxu0 0
        %1356 = vmatprep.subr.bf16.mxu0 0
        %1357 = vmatpush2.bf16.msra.mxu0 0
        %1358 = vmatprep.subr.bf16.mxu0 0
        %1359 = vmatpush2.bf16.msra.mxu0 0
        %1360 = vmatprep.subr.bf16.mxu0 0
        %1361 = vmatpush2.bf16.msra.mxu0 0
        %1362 = vmatprep.subr.bf16.mxu0 0
        %1363 = vmatpush2.bf16.msra.mxu0 0
        %1364 = vmatprep.mubr.bf16.mxu0 0
        %1365 = vmatmul.mubr.bf16.gmra.mxu0 %v989
        %v1366 = vpop.f32.mrf.mxu0
        %v1367 = vadd.f32 0.0, %v1366
        %v1368 = vpop.f32.mrf.mxu0
        %v1369 = vpop.f32.mrf.mxu0
        %v1370 = vpop.f32.mrf.mxu0
        %1371 = vdwg.mxu0
        %1372 = vrot.lane.b32.xlu0 %v1034, 127
        %v1373 = vpop.permute.xlu0 %1372
        %s1374 = vtos %v1373
        %v1375 = vstv %s1374
        %v1377 = vmul.f32 %v1375, %v1274
        %v1378 = vadd.f32 %v1377, %v1367
        %v1379 = vpack.c.bf16 %v1378, %v1378
        %s1380 = scalar_lea.vmem [#allocation10], 64
        %v1381 = vld [vmem:[%s1380] sm:$0xf]
        %v1382 = vld [vmem:[%s1380 + $0x4] sm:$0xf]
        %v1383 = vld [vmem:[%s1380 + $0x8] sm:$0xf]
        %v1384 = vld [vmem:[%s1380 + $0xc] sm:$0xf]
        %v1385 = vld [vmem:[%s1380 + $0x10] sm:$0xf]
        %v1386 = vld [vmem:[%s1380 + $0x14] sm:$0xf]
        %v1387 = vld [vmem:[%s1380 + $0x18] sm:$0xf]
        %v1388 = vld [vmem:[%s1380 + $0x1c] sm:$0xf]
        %v1389 = vld [vmem:[%s1380 + $0x20] sm:$0xf]
        %v1390 = vld [vmem:[%s1380 + $0x24] sm:$0xf]
        %v1391 = vld [vmem:[%s1380 + $0x28] sm:$0xf]
        %v1392 = vld [vmem:[%s1380 + $0x2c] sm:$0xf]
        %v1393 = vld [vmem:[%s1380 + $0x30] sm:$0xf]
        %v1394 = vld [vmem:[%s1380 + $0x34] sm:$0xf]
        %v1395 = vld [vmem:[%s1380 + $0x38] sm:$0xf]
        %v1396 = vld [vmem:[%s1380 + $0x3c] sm:$0xf]
        %v1397 = vlaneseq
        %v1398 = vshrl.u32 %v1397, 7
        %v1399 = vsub.s32 0, %v1398
        %v1400 = vrot.slane %v1276, %v1399
        %v1417 = vunpack.c.l.b16 %v1381
        %v1418 = vunpack.c.l.b16 %v1382
        %v1419 = vunpack.c.l.b16 %v1383
        %v1420 = vunpack.c.l.b16 %v1384
        %v1421 = vunpack.c.l.b16 %v1385
        %v1422 = vunpack.c.l.b16 %v1386
        %v1423 = vunpack.c.l.b16 %v1387
        %v1424 = vunpack.c.l.b16 %v1388
        %v1425 = vunpack.c.l.b16 %v1389
        %v1426 = vunpack.c.l.b16 %v1390
        %v1427 = vunpack.c.l.b16 %v1391
        %v1428 = vunpack.c.l.b16 %v1392
        %v1429 = vunpack.c.l.b16 %v1393
        %v1430 = vunpack.c.l.b16 %v1394
        %v1431 = vunpack.c.l.b16 %v1395
        %v1432 = vunpack.c.l.b16 %v1396
        %v1433 = vpack.c.b16 %v1418, %v1417
        %v1434 = vpack.c.b16 %v1420, %v1419
        %v1435 = vpack.c.b16 %v1422, %v1421
        %v1436 = vpack.c.b16 %v1424, %v1423
        %v1437 = vpack.c.b16 %v1426, %v1425
        %v1438 = vpack.c.b16 %v1428, %v1427
        %v1439 = vpack.c.b16 %v1430, %v1429
        %v1440 = vpack.c.b16 %v1432, %v1431
        %1449 = vmatprep.subr.bf16.mxu0 0
        %1450 = vmatpush1.bf16.msra.mxu0 %v1440
        %1451 = vmatprep.subr.bf16.mxu0 0
        %1452 = vmatpush1.bf16.msra.mxu0 %v1439
        %1453 = vmatprep.subr.bf16.mxu0 0
        %1454 = vmatpush1.bf16.msra.mxu0 %v1438
        %1455 = vmatprep.subr.bf16.mxu0 0
        %1456 = vmatpush1.bf16.msra.mxu0 %v1437
        %1457 = vmatprep.subr.bf16.mxu0 0
        %1458 = vmatpush1.bf16.msra.mxu0 %v1436
        %1459 = vmatprep.subr.bf16.mxu0 0
        %1460 = vmatpush1.bf16.msra.mxu0 %v1435
        %1461 = vmatprep.subr.bf16.mxu0 0
        %1462 = vmatpush1.bf16.msra.mxu0 %v1434
        %1463 = vmatprep.subr.bf16.mxu0 0
        %1464 = vmatpush1.bf16.msra.mxu0 %v1433
        %1465 = vmatprep.subr.bf16.mxu0 0
        %1466 = vmatpush2.bf16.msra.mxu0 0
        %1467 = vmatprep.subr.bf16.mxu0 0
        %1468 = vmatpush2.bf16.msra.mxu0 0
        %1469 = vmatprep.subr.bf16.mxu0 0
        %1470 = vmatpush2.bf16.msra.mxu0 0
        %1471 = vmatprep.subr.bf16.mxu0 0
        %1472 = vmatpush2.bf16.msra.mxu0 0
        %1473 = vmatprep.subr.bf16.mxu0 0
        %1474 = vmatpush2.bf16.msra.mxu0 0
        %1475 = vmatprep.subr.bf16.mxu0 0
        %1476 = vmatpush2.bf16.msra.mxu0 0
        %1477 = vmatprep.subr.bf16.mxu0 0
        %1478 = vmatpush2.bf16.msra.mxu0 0
        %1479 = vmatprep.subr.bf16.mxu0 0
        %1480 = vmatpush2.bf16.msra.mxu0 0
        %1481 = vmatprep.mubr.bf16.mxu0 0
        %1482 = vmatmul.mubr.bf16.gmra.mxu0 %v1379
        %v1483 = vpop.f32.mrf.mxu0
        %v1484 = vadd.f32 %v1400, %v1483
        %v1485 = vpop.f32.mrf.mxu0
        %v1486 = vpop.f32.mrf.mxu0
        %v1487 = vpop.f32.mrf.mxu0
        %1488 = vdwg.mxu0
        %v1489 = vmax.f32 %v1484, 0.0
        %v1490 = vpack.c.bf16 %v1489, %v1489
        %s1491 = scalar_lea.vmem [#allocation11], 64
        %v1492 = vld [vmem:[%s1491] sm:$0xf]
        %v1493 = vld [vmem:[%s1491 + $0x4] sm:$0xf]
        %v1494 = vld [vmem:[%s1491 + $0x8] sm:$0xf]
        %v1495 = vld [vmem:[%s1491 + $0xc] sm:$0xf]
        %v1496 = vld [vmem:[%s1491 + $0x10] sm:$0xf]
        %v1497 = vld [vmem:[%s1491 + $0x14] sm:$0xf]
        %v1498 = vld [vmem:[%s1491 + $0x18] sm:$0xf]
        %v1499 = vld [vmem:[%s1491 + $0x1c] sm:$0xf]
        %v1500 = vld [vmem:[%s1491 + $0x20] sm:$0xf]
        %v1501 = vld [vmem:[%s1491 + $0x24] sm:$0xf]
        %v1502 = vld [vmem:[%s1491 + $0x28] sm:$0xf]
        %v1503 = vld [vmem:[%s1491 + $0x2c] sm:$0xf]
        %v1504 = vld [vmem:[%s1491 + $0x30] sm:$0xf]
        %v1505 = vld [vmem:[%s1491 + $0x34] sm:$0xf]
        %v1506 = vld [vmem:[%s1491 + $0x38] sm:$0xf]
        %v1507 = vld [vmem:[%s1491 + $0x3c] sm:$0xf]
        %v1508 = vlaneseq
        %v1509 = vshrl.u32 %v1508, 7
        %v1510 = vsub.s32 0, %v1509
        %v1511 = vrot.slane %v1277, %v1510
        %v1528 = vunpack.c.l.b16 %v1492
        %v1529 = vunpack.c.l.b16 %v1493
        %v1530 = vunpack.c.l.b16 %v1494
        %v1531 = vunpack.c.l.b16 %v1495
        %v1532 = vunpack.c.l.b16 %v1496
        %v1533 = vunpack.c.l.b16 %v1497
        %v1534 = vunpack.c.l.b16 %v1498
        %v1535 = vunpack.c.l.b16 %v1499
        %v1536 = vunpack.c.l.b16 %v1500
        %v1537 = vunpack.c.l.b16 %v1501
        %v1538 = vunpack.c.l.b16 %v1502
        %v1539 = vunpack.c.l.b16 %v1503
        %v1540 = vunpack.c.l.b16 %v1504
        %v1541 = vunpack.c.l.b16 %v1505
        %v1542 = vunpack.c.l.b16 %v1506
        %v1543 = vunpack.c.l.b16 %v1507
        %v1544 = vpack.c.b16 %v1529, %v1528
        %v1545 = vpack.c.b16 %v1531, %v1530
        %v1546 = vpack.c.b16 %v1533, %v1532
        %v1547 = vpack.c.b16 %v1535, %v1534
        %v1548 = vpack.c.b16 %v1537, %v1536
        %v1549 = vpack.c.b16 %v1539, %v1538
        %v1550 = vpack.c.b16 %v1541, %v1540
        %v1551 = vpack.c.b16 %v1543, %v1542
        %1560 = vmatprep.subr.bf16.mxu0 0
        %1561 = vmatpush1.bf16.msra.mxu0 %v1551
        %1562 = vmatprep.subr.bf16.mxu0 0
        %1563 = vmatpush1.bf16.msra.mxu0 %v1550
        %1564 = vmatprep.subr.bf16.mxu0 0
        %1565 = vmatpush1.bf16.msra.mxu0 %v1549
        %1566 = vmatprep.subr.bf16.mxu0 0
        %1567 = vmatpush1.bf16.msra.mxu0 %v1548
        %1568 = vmatprep.subr.bf16.mxu0 0
        %1569 = vmatpush1.bf16.msra.mxu0 %v1547
        %1570 = vmatprep.subr.bf16.mxu0 0
        %1571 = vmatpush1.bf16.msra.mxu0 %v1546
        %1572 = vmatprep.subr.bf16.mxu0 0
        %1573 = vmatpush1.bf16.msra.mxu0 %v1545
        %1574 = vmatprep.subr.bf16.mxu0 0
        %1575 = vmatpush1.bf16.msra.mxu0 %v1544
        %1576 = vmatprep.subr.bf16.mxu0 0
        %1577 = vmatpush2.bf16.msra.mxu0 0
        %1578 = vmatprep.subr.bf16.mxu0 0
        %1579 = vmatpush2.bf16.msra.mxu0 0
        %1580 = vmatprep.subr.bf16.mxu0 0
        %1581 = vmatpush2.bf16.msra.mxu0 0
        %1582 = vmatprep.subr.bf16.mxu0 0
        %1583 = vmatpush2.bf16.msra.mxu0 0
        %1584 = vmatprep.subr.bf16.mxu0 0
        %1585 = vmatpush2.bf16.msra.mxu0 0
        %1586 = vmatprep.subr.bf16.mxu0 0
        %1587 = vmatpush2.bf16.msra.mxu0 0
        %1588 = vmatprep.subr.bf16.mxu0 0
        %1589 = vmatpush2.bf16.msra.mxu0 0
        %1590 = vmatprep.subr.bf16.mxu0 0
        %1591 = vmatpush2.bf16.msra.mxu0 0
        %1592 = vmatprep.mubr.bf16.mxu0 0
        %1593 = vmatmul.mubr.bf16.gmra.mxu0 %v1490
        %v1594 = vpop.f32.mrf.mxu0
        %v1595 = vadd.f32 %v1511, %v1594
        %v1596 = vpop.f32.mrf.mxu0
        %v1597 = vpop.f32.mrf.mxu0
        %v1598 = vpop.f32.mrf.mxu0
        %1599 = vdwg.mxu0
        %1600 = vadd.xlane.f32.xlu0 %v1595
        %v1601 = vpop.xlane.xlu0 %1600
        %v1602 = vmul.f32 %v1601, %v1262
        %v1603 = vsub.f32 %v1595, %v1602
        %v1604 = vmul.f32 %v1603, %v1603
        %1605 = vadd.xlane.f32.xlu0 %v1604
        %v1606 = vpop.xlane.xlu0 %1605
        %v1607 = vmul.f32 %v1606, %v1262
        %v1608 = vadd.f32 %v1607, 1e-05
        %v1609 = vrsqrt.pop %v1608
        %v1610 = vmul.f32 %v1603, %v1609
        %v1611 = vadd.f32 %v1610, %v1274
        %vm1612 = vcmp.gt.f32.partialorder %v1611, 0.0
        %v1613 = vmul.f32 %v1611, 0.1
        %v1614 = vsel %vm1612, %v1611, %v1613
        %v1615 = vld [vmem:[%s12 + $0x2] sm:$0x1]
        %v1616 = vld [vmem:[%s12 + $0x5] sm:$0x1]
        %v1617 = vld [vmem:[%s12 + $0x8] sm:$0x1]
        %v1618 = vlaneseq
        %v1619 = vshrl.u32 %v1618, 7
        %v1620 = vsub.s32 0, %v1619
        %v1621 = vrot.slane %v1615, %v1620
        %v1622 = vadd.f32 %v903, %v1621
        %v1623 = vpack.c.bf16 %v1614, %v1614
        %v1625 = vsel %vm942, %v1623, 0
        %1627 = vmatprep.subr.bf16.mxu0 0
        %1628 = vmatpush1.bf16.msra.mxu0 0
        %1629 = vmatprep.subr.bf16.mxu0 0
        %1630 = vmatpush1.bf16.msra.mxu0 0
        %1631 = vmatprep.subr.bf16.mxu0 0
        %1632 = vmatpush1.bf16.msra.mxu0 0
        %1633 = vmatprep.subr.bf16.mxu0 0
        %1634 = vmatpush1.bf16.msra.mxu0 0
        %1635 = vmatprep.subr.bf16.mxu0 0
        %1636 = vmatpush1.bf16.msra.mxu0 0
        %1637 = vmatprep.subr.bf16.mxu0 0
        %1638 = vmatpush1.bf16.msra.mxu0 0
        %1639 = vmatprep.subr.bf16.mxu0 0
        %1640 = vmatpush1.bf16.msra.mxu0 0
        %1641 = vmatprep.subr.bf16.mxu0 0
        %1642 = vmatpush1.bf16.msra.mxu0 %v1625
        %1643 = vmatprep.subr.bf16.mxu0 0
        %1644 = vmatpush2.bf16.msra.mxu0 0
        %1645 = vmatprep.subr.bf16.mxu0 0
        %1646 = vmatpush2.bf16.msra.mxu0 0
        %1647 = vmatprep.subr.bf16.mxu0 0
        %1648 = vmatpush2.bf16.msra.mxu0 0
        %1649 = vmatprep.subr.bf16.mxu0 0
        %1650 = vmatpush2.bf16.msra.mxu0 0
        %1651 = vmatprep.subr.bf16.mxu0 0
        %1652 = vmatpush2.bf16.msra.mxu0 0
        %1653 = vmatprep.subr.bf16.mxu0 0
        %1654 = vmatpush2.bf16.msra.mxu0 0
        %1655 = vmatprep.subr.bf16.mxu0 0
        %1656 = vmatpush2.bf16.msra.mxu0 0
        %1657 = vmatprep.subr.bf16.mxu0 0
        %1658 = vmatpush2.bf16.msra.mxu0 0
        %1659 = vmatprep.mubr.bf16.mxu0 0
        %1660 = vmatmul.mubr.bf16.gmra.mxu0 %v940
        %v1661 = vpop.f32.mrf.mxu0
        %v1662 = vadd.f32 %v1622, %v1661
        %v1663 = vpop.f32.mrf.mxu0
        %v1664 = vpop.f32.mrf.mxu0
        %v1665 = vpop.f32.mrf.mxu0
        %1666 = vdwg.mxu0
        %v1667 = vmax.f32 %v1662, 0.0
        %v1668 = vpack.c.bf16 %v1667, %v1667
        %v1670 = vsel %vm942, %v1668, 0
        %1672 = vmatprep.subr.bf16.mxu0 0
        %1673 = vmatpush1.bf16.msra.mxu0 0
        %1674 = vmatprep.subr.bf16.mxu0 0
        %1675 = vmatpush1.bf16.msra.mxu0 0
        %1676 = vmatprep.subr.bf16.mxu0 0
        %1677 = vmatpush1.bf16.msra.mxu0 0
        %1678 = vmatprep.subr.bf16.mxu0 0
        %1679 = vmatpush1.bf16.msra.mxu0 0
        %1680 = vmatprep.subr.bf16.mxu0 0
        %1681 = vmatpush1.bf16.msra.mxu0 0
        %1682 = vmatprep.subr.bf16.mxu0 0
        %1683 = vmatpush1.bf16.msra.mxu0 0
        %1684 = vmatprep.subr.bf16.mxu0 0
        %1685 = vmatpush1.bf16.msra.mxu0 0
        %1686 = vmatprep.subr.bf16.mxu0 0
        %1687 = vmatpush1.bf16.msra.mxu0 %v1670
        %1688 = vmatprep.subr.bf16.mxu0 0
        %1689 = vmatpush2.bf16.msra.mxu0 0
        %1690 = vmatprep.subr.bf16.mxu0 0
        %1691 = vmatpush2.bf16.msra.mxu0 0
        %1692 = vmatprep.subr.bf16.mxu0 0
        %1693 = vmatpush2.bf16.msra.mxu0 0
        %1694 = vmatprep.subr.bf16.mxu0 0
        %1695 = vmatpush2.bf16.msra.mxu0 0
        %1696 = vmatprep.subr.bf16.mxu0 0
        %1697 = vmatpush2.bf16.msra.mxu0 0
        %1698 = vmatprep.subr.bf16.mxu0 0
        %1699 = vmatpush2.bf16.msra.mxu0 0
        %1700 = vmatprep.subr.bf16.mxu0 0
        %1701 = vmatpush2.bf16.msra.mxu0 0
        %1702 = vmatprep.subr.bf16.mxu0 0
        %1703 = vmatpush2.bf16.msra.mxu0 0
        %1704 = vmatprep.mubr.bf16.mxu0 0
        %1705 = vmatmul.mubr.bf16.gmra.mxu0 %v989
        %v1706 = vpop.f32.mrf.mxu0
        %v1707 = vadd.f32 0.0, %v1706
        %v1708 = vpop.f32.mrf.mxu0
        %v1709 = vpop.f32.mrf.mxu0
        %v1710 = vpop.f32.mrf.mxu0
        %1711 = vdwg.mxu0
        %1712 = vrot.lane.b32.xlu0 %v1034, 126
        %v1713 = vpop.permute.xlu0 %1712
        %s1714 = vtos %v1713
        %v1715 = vstv %s1714
        %v1717 = vmul.f32 %v1715, %v1614
        %v1718 = vadd.f32 %v1717, %v1707
        %v1719 = vpack.c.bf16 %v1718, %v1718
        %s1720 = scalar_lea.vmem [#allocation10], 128
        %v1721 = vld [vmem:[%s1720] sm:$0xf]
        %v1722 = vld [vmem:[%s1720 + $0x4] sm:$0xf]
        %v1723 = vld [vmem:[%s1720 + $0x8] sm:$0xf]
        %v1724 = vld [vmem:[%s1720 + $0xc] sm:$0xf]
        %v1725 = vld [vmem:[%s1720 + $0x10] sm:$0xf]
        %v1726 = vld [vmem:[%s1720 + $0x14] sm:$0xf]
        %v1727 = vld [vmem:[%s1720 + $0x18] sm:$0xf]
        %v1728 = vld [vmem:[%s1720 + $0x1c] sm:$0xf]
        %v1729 = vld [vmem:[%s1720 + $0x20] sm:$0xf]
        %v1730 = vld [vmem:[%s1720 + $0x24] sm:$0xf]
        %v1731 = vld [vmem:[%s1720 + $0x28] sm:$0xf]
        %v1732 = vld [vmem:[%s1720 + $0x2c] sm:$0xf]
        %v1733 = vld [vmem:[%s1720 + $0x30] sm:$0xf]
        %v1734 = vld [vmem:[%s1720 + $0x34] sm:$0xf]
        %v1735 = vld [vmem:[%s1720 + $0x38] sm:$0xf]
        %v1736 = vld [vmem:[%s1720 + $0x3c] sm:$0xf]
        %v1737 = vlaneseq
        %v1738 = vshrl.u32 %v1737, 7
        %v1739 = vsub.s32 0, %v1738
        %v1740 = vrot.slane %v1616, %v1739
        %v1757 = vunpack.c.l.b16 %v1721
        %v1758 = vunpack.c.l.b16 %v1722
        %v1759 = vunpack.c.l.b16 %v1723
        %v1760 = vunpack.c.l.b16 %v1724
        %v1761 = vunpack.c.l.b16 %v1725
        %v1762 = vunpack.c.l.b16 %v1726
        %v1763 = vunpack.c.l.b16 %v1727
        %v1764 = vunpack.c.l.b16 %v1728
        %v1765 = vunpack.c.l.b16 %v1729
        %v1766 = vunpack.c.l.b16 %v1730
        %v1767 = vunpack.c.l.b16 %v1731
        %v1768 = vunpack.c.l.b16 %v1732
        %v1769 = vunpack.c.l.b16 %v1733
        %v1770 = vunpack.c.l.b16 %v1734
        %v1771 = vunpack.c.l.b16 %v1735
        %v1772 = vunpack.c.l.b16 %v1736
        %v1773 = vpack.c.b16 %v1758, %v1757
        %v1774 = vpack.c.b16 %v1760, %v1759
        %v1775 = vpack.c.b16 %v1762, %v1761
        %v1776 = vpack.c.b16 %v1764, %v1763
        %v1777 = vpack.c.b16 %v1766, %v1765
        %v1778 = vpack.c.b16 %v1768, %v1767
        %v1779 = vpack.c.b16 %v1770, %v1769
        %v1780 = vpack.c.b16 %v1772, %v1771
        %1789 = vmatprep.subr.bf16.mxu0 0
        %1790 = vmatpush1.bf16.msra.mxu0 %v1780
        %1791 = vmatprep.subr.bf16.mxu0 0
        %1792 = vmatpush1.bf16.msra.mxu0 %v1779
        %1793 = vmatprep.subr.bf16.mxu0 0
        %1794 = vmatpush1.bf16.msra.mxu0 %v1778
        %1795 = vmatprep.subr.bf16.mxu0 0
        %1796 = vmatpush1.bf16.msra.mxu0 %v1777
        %1797 = vmatprep.subr.bf16.mxu0 0
        %1798 = vmatpush1.bf16.msra.mxu0 %v1776
        %1799 = vmatprep.subr.bf16.mxu0 0
        %1800 = vmatpush1.bf16.msra.mxu0 %v1775
        %1801 = vmatprep.subr.bf16.mxu0 0
        %1802 = vmatpush1.bf16.msra.mxu0 %v1774
        %1803 = vmatprep.subr.bf16.mxu0 0
        %1804 = vmatpush1.bf16.msra.mxu0 %v1773
        %1805 = vmatprep.subr.bf16.mxu0 0
        %1806 = vmatpush2.bf16.msra.mxu0 0
        %1807 = vmatprep.subr.bf16.mxu0 0
        %1808 = vmatpush2.bf16.msra.mxu0 0
        %1809 = vmatprep.subr.bf16.mxu0 0
        %1810 = vmatpush2.bf16.msra.mxu0 0
        %1811 = vmatprep.subr.bf16.mxu0 0
        %1812 = vmatpush2.bf16.msra.mxu0 0
        %1813 = vmatprep.subr.bf16.mxu0 0
        %1814 = vmatpush2.bf16.msra.mxu0 0
        %1815 = vmatprep.subr.bf16.mxu0 0
        %1816 = vmatpush2.bf16.msra.mxu0 0
        %1817 = vmatprep.subr.bf16.mxu0 0
        %1818 = vmatpush2.bf16.msra.mxu0 0
        %1819 = vmatprep.subr.bf16.mxu0 0
        %1820 = vmatpush2.bf16.msra.mxu0 0
        %1821 = vmatprep.mubr.bf16.mxu0 0
        %1822 = vmatmul.mubr.bf16.gmra.mxu0 %v1719
        %v1823 = vpop.f32.mrf.mxu0
        %v1824 = vadd.f32 %v1740, %v1823
        %v1825 = vpop.f32.mrf.mxu0
        %v1826 = vpop.f32.mrf.mxu0
        %v1827 = vpop.f32.mrf.mxu0
        %1828 = vdwg.mxu0
        %v1829 = vmax.f32 %v1824, 0.0
        %v1830 = vpack.c.bf16 %v1829, %v1829
        %s1831 = scalar_lea.vmem [#allocation11], 128
        %v1832 = vld [vmem:[%s1831] sm:$0xf]
        %v1833 = vld [vmem:[%s1831 + $0x4] sm:$0xf]
        %v1834 = vld [vmem:[%s1831 + $0x8] sm:$0xf]
        %v1835 = vld [vmem:[%s1831 + $0xc] sm:$0xf]
        %v1836 = vld [vmem:[%s1831 + $0x10] sm:$0xf]
        %v1837 = vld [vmem:[%s1831 + $0x14] sm:$0xf]
        %v1838 = vld [vmem:[%s1831 + $0x18] sm:$0xf]
        %v1839 = vld [vmem:[%s1831 + $0x1c] sm:$0xf]
        %v1840 = vld [vmem:[%s1831 + $0x20] sm:$0xf]
        %v1841 = vld [vmem:[%s1831 + $0x24] sm:$0xf]
        %v1842 = vld [vmem:[%s1831 + $0x28] sm:$0xf]
        %v1843 = vld [vmem:[%s1831 + $0x2c] sm:$0xf]
        %v1844 = vld [vmem:[%s1831 + $0x30] sm:$0xf]
        %v1845 = vld [vmem:[%s1831 + $0x34] sm:$0xf]
        %v1846 = vld [vmem:[%s1831 + $0x38] sm:$0xf]
        %v1847 = vld [vmem:[%s1831 + $0x3c] sm:$0xf]
        %v1848 = vlaneseq
        %v1849 = vshrl.u32 %v1848, 7
        %v1850 = vsub.s32 0, %v1849
        %v1851 = vrot.slane %v1617, %v1850
        %v1868 = vunpack.c.l.b16 %v1832
        %v1869 = vunpack.c.l.b16 %v1833
        %v1870 = vunpack.c.l.b16 %v1834
        %v1871 = vunpack.c.l.b16 %v1835
        %v1872 = vunpack.c.l.b16 %v1836
        %v1873 = vunpack.c.l.b16 %v1837
        %v1874 = vunpack.c.l.b16 %v1838
        %v1875 = vunpack.c.l.b16 %v1839
        %v1876 = vunpack.c.l.b16 %v1840
        %v1877 = vunpack.c.l.b16 %v1841
        %v1878 = vunpack.c.l.b16 %v1842
        %v1879 = vunpack.c.l.b16 %v1843
        %v1880 = vunpack.c.l.b16 %v1844
        %v1881 = vunpack.c.l.b16 %v1845
        %v1882 = vunpack.c.l.b16 %v1846
        %v1883 = vunpack.c.l.b16 %v1847
        %v1884 = vpack.c.b16 %v1869, %v1868
        %v1885 = vpack.c.b16 %v1871, %v1870
        %v1886 = vpack.c.b16 %v1873, %v1872
        %v1887 = vpack.c.b16 %v1875, %v1874
        %v1888 = vpack.c.b16 %v1877, %v1876
        %v1889 = vpack.c.b16 %v1879, %v1878
        %v1890 = vpack.c.b16 %v1881, %v1880
        %v1891 = vpack.c.b16 %v1883, %v1882
        %1900 = vmatprep.subr.bf16.mxu0 0
        %1901 = vmatpush1.bf16.msra.mxu0 %v1891
        %1902 = vmatprep.subr.bf16.mxu0 0
        %1903 = vmatpush1.bf16.msra.mxu0 %v1890
        %1904 = vmatprep.subr.bf16.mxu0 0
        %1905 = vmatpush1.bf16.msra.mxu0 %v1889
        %1906 = vmatprep.subr.bf16.mxu0 0
        %1907 = vmatpush1.bf16.msra.mxu0 %v1888
        %1908 = vmatprep.subr.bf16.mxu0 0
        %1909 = vmatpush1.bf16.msra.mxu0 %v1887
        %1910 = vmatprep.subr.bf16.mxu0 0
        %1911 = vmatpush1.bf16.msra.mxu0 %v1886
        %1912 = vmatprep.subr.bf16.mxu0 0
        %1913 = vmatpush1.bf16.msra.mxu0 %v1885
        %1914 = vmatprep.subr.bf16.mxu0 0
        %1915 = vmatpush1.bf16.msra.mxu0 %v1884
        %1916 = vmatprep.subr.bf16.mxu0 0
        %1917 = vmatpush2.bf16.msra.mxu0 0
        %1918 = vmatprep.subr.bf16.mxu0 0
        %1919 = vmatpush2.bf16.msra.mxu0 0
        %1920 = vmatprep.subr.bf16.mxu0 0
        %1921 = vmatpush2.bf16.msra.mxu0 0
        %1922 = vmatprep.subr.bf16.mxu0 0
        %1923 = vmatpush2.bf16.msra.mxu0 0
        %1924 = vmatprep.subr.bf16.mxu0 0
        %1925 = vmatpush2.bf16.msra.mxu0 0
        %1926 = vmatprep.subr.bf16.mxu0 0
        %1927 = vmatpush2.bf16.msra.mxu0 0
        %1928 = vmatprep.subr.bf16.mxu0 0
        %1929 = vmatpush2.bf16.msra.mxu0 0
        %1930 = vmatprep.subr.bf16.mxu0 0
        %1931 = vmatpush2.bf16.msra.mxu0 0
        %1932 = vmatprep.mubr.bf16.mxu0 0
        %1933 = vmatmul.mubr.bf16.gmra.mxu0 %v1830
        %v1934 = vpop.f32.mrf.mxu0
        %v1935 = vadd.f32 %v1851, %v1934
        %v1936 = vpop.f32.mrf.mxu0
        %v1937 = vpop.f32.mrf.mxu0
        %v1938 = vpop.f32.mrf.mxu0
        %1939 = vdwg.mxu0
        %1940 = vadd.xlane.f32.xlu0 %v1935
        %v1941 = vpop.xlane.xlu0 %1940
        %v1942 = vmul.f32 %v1941, %v1262
        %v1943 = vsub.f32 %v1935, %v1942
        %v1944 = vmul.f32 %v1943, %v1943
        %1945 = vadd.xlane.f32.xlu0 %v1944
        %v1946 = vpop.xlane.xlu0 %1945
        %v1947 = vmul.f32 %v1946, %v1262
        %v1948 = vadd.f32 %v1947, 1e-05
        %v1949 = vrsqrt.pop %v1948
        %v1950 = vmul.f32 %v1943, %v1949
        %v1951 = vadd.f32 %v1950, %v1614
        %vm1952 = vcmp.gt.f32.partialorder %v1951, 0.0
        %v1953 = vmul.f32 %v1951, 0.1
        %v1954 = vsel %vm1952, %v1951, %v1953
        %v1955 = vld [vmem:[%s656] sm:$0xff]
        %1957 = vset.pattern.permute.xlu0 0
        %1958 = vperm.xlu0 %1957, %v1955
        %v1959 = vpop.permute.xlu0 %1958
        %v1961 = vmul.f32 %v1954, %v1959
        %v1962 = vrot.slane %v1961, 4
        %v1963 = vadd.f32 %v1961, %v1962
        %v1964 = vrot.slane %v1963, 2
        %v1965 = vadd.f32 %v1963, %v1964
        %v1966 = vrot.slane %v1965, 1
        %v1967 = vadd.f32 %v1965, %v1966
        %v1968 = vrot.slane %v1955, 4
        %v1969 = vadd.f32 %v1955, %v1968
        %v1970 = vrot.slane %v1969, 2
        %v1971 = vadd.f32 %v1969, %v1970
        %v1972 = vrot.slane %v1971, 1
        %v1973 = vadd.f32 %v1971, %v1972
        %v1974 = vmax.f32 %v1973, 1.0
        %vm1975 = vcmp.eq.s32.totalorder %v912, 0
        %1977 = vset.pattern.permute.xlu0 0
        %1978 = vperm.xlu0 %1977, %v1974
        %v1979 = vpop.permute.xlu0 %1978
        %v1981 = vrcp.pop %v1979
        %v1982 = vmul.f32 %v1973, %v1981
        %v1983 = vsel %vm1975, %v1973, %v1982
        %v1984 = vld [vmem:[%s664] sm:$0xff]
        %v1985 = vld [vmem:[%s561] sm:$0xf]
        %v1986 = vunpack.c.l.bf16 %v1985
        %1988 = vset.pattern.permute.xlu0 0
        %1989 = vperm.xlu0 %1988, %v1984
        %v1990 = vpop.permute.xlu0 %1989
        %v1992 = vmul.f32 %v1986, %v1990
        %v1993 = vrot.slane %v1992, 4
        %v1994 = vadd.f32 %v1992, %v1993
        %v1995 = vrot.slane %v1994, 2
        %v1996 = vadd.f32 %v1994, %v1995
        %v1997 = vrot.slane %v1996, 1
        %v1998 = vadd.f32 %v1996, %v1997
        %vm1999 = vcmask 7168
        %v2000 = vsel %vm1999, %v1984, 0.0
        %v2001 = vrot.slane %v2000, 4
        %v2002 = vadd.f32 %v2000, %v2001
        %v2003 = vrot.slane %v2002, 2
        %v2004 = vadd.f32 %v2002, %v2003
        %v2005 = vrot.slane %v2004, 1
        %v2006 = vadd.f32 %v2004, %v2005
        %v2007 = vmax.f32 %v2006, 1.0
        %2009 = vset.pattern.permute.xlu0 0
        %2010 = vperm.xlu0 %2009, %v2007
        %v2011 = vpop.permute.xlu0 %2010
        %v2013 = vrcp.pop %v2011
        %v2014 = vmul.f32 %v1998, %v2013
        %v2015 = vpack.c.bf16 %v1967, %v1967
        %v2016 = vpack.c.bf16 %v1983, %v1983
        %v2017 = vpack.c.bf16 %v2014, %v2014
        %v2018 = vld [vmem:[#allocation13] sm:$0xf]
        %v2019 = vld [vmem:[#allocation13 + $0x4] sm:$0xf]
        %v2020 = vld [vmem:[#allocation13 + $0x8] sm:$0xf]
        %v2021 = vld [vmem:[#allocation13 + $0xc] sm:$0xf]
        %v2022 = vld [vmem:[#allocation13 + $0x10] sm:$0xf]
        %v2023 = vld [vmem:[#allocation13 + $0x14] sm:$0xf]
        %v2024 = vld [vmem:[#allocation13 + $0x18] sm:$0xf]
        %v2025 = vld [vmem:[#allocation13 + $0x1c] sm:$0xf]
        %v2026 = vld [vmem:[#allocation13 + $0x20] sm:$0xf]
        %v2027 = vld [vmem:[#allocation13 + $0x24] sm:$0xf]
        %v2028 = vld [vmem:[#allocation13 + $0x28] sm:$0xf]
        %v2029 = vld [vmem:[#allocation13 + $0x2c] sm:$0xf]
        %v2030 = vld [vmem:[#allocation13 + $0x30] sm:$0xf]
        %v2031 = vld [vmem:[#allocation13 + $0x34] sm:$0xf]
        %v2032 = vld [vmem:[#allocation13 + $0x38] sm:$0xf]
        %v2033 = vld [vmem:[#allocation13 + $0x3c] sm:$0xf]
        %v2034 = vld [vmem:[#allocation13 + $0x40] sm:$0xf]
        %v2035 = vld [vmem:[#allocation13 + $0x44] sm:$0xf]
        %v2036 = vld [vmem:[#allocation13 + $0x48] sm:$0xf]
        %v2037 = vld [vmem:[#allocation13 + $0x4c] sm:$0xf]
        %v2038 = vld [vmem:[#allocation13 + $0x50] sm:$0xf]
        %v2039 = vld [vmem:[#allocation13 + $0x54] sm:$0xf]
        %v2040 = vld [vmem:[#allocation13 + $0x58] sm:$0xf]
        %v2041 = vld [vmem:[#allocation13 + $0x5c] sm:$0xf]
        %v2042 = vld [vmem:[#allocation13 + $0x60] sm:$0xf]
        %v2043 = vld [vmem:[#allocation13 + $0x64] sm:$0xf]
        %v2044 = vld [vmem:[#allocation13 + $0x68] sm:$0xf]
        %v2045 = vld [vmem:[#allocation13 + $0x6c] sm:$0xf]
        %v2046 = vld [vmem:[#allocation13 + $0x70] sm:$0xf]
        %v2047 = vld [vmem:[#allocation13 + $0x74] sm:$0xf]
        %v2048 = vld [vmem:[#allocation13 + $0x78] sm:$0xf]
        %v2049 = vld [vmem:[#allocation13 + $0x7c] sm:$0xf]
        %v2050 = vld [vmem:[#allocation13 + $0x80] sm:$0xf]
        %v2051 = vld [vmem:[#allocation13 + $0x84] sm:$0xf]
        %v2052 = vld [vmem:[#allocation13 + $0x88] sm:$0xf]
        %v2053 = vld [vmem:[#allocation13 + $0x8c] sm:$0xf]
        %v2054 = vld [vmem:[#allocation13 + $0x90] sm:$0xf]
        %v2055 = vld [vmem:[#allocation13 + $0x94] sm:$0xf]
        %v2056 = vld [vmem:[#allocation13 + $0x98] sm:$0xf]
        %v2057 = vld [vmem:[#allocation13 + $0x9c] sm:$0xf]
        %v2058 = vld [vmem:[#allocation13 + $0xa0] sm:$0xf]
        %v2059 = vld [vmem:[#allocation13 + $0xa4] sm:$0xf]
        %v2060 = vld [vmem:[#allocation13 + $0xa8] sm:$0xf]
        %v2061 = vld [vmem:[#allocation13 + $0xac] sm:$0xf]
        %v2062 = vld [vmem:[#allocation13 + $0xb0] sm:$0xf]
        %v2063 = vld [vmem:[#allocation13 + $0xb4] sm:$0xf]
        %v2064 = vld [vmem:[#allocation13 + $0xb8] sm:$0xf]
        %v2065 = vld [vmem:[#allocation13 + $0xbc] sm:$0xf]
        %v2066 = vld [vmem:[%s12 + $0x9] sm:$0x1]
        %v2115 = vunpack.c.l.b16 %v2018
        %v2116 = vunpack.c.l.b16 %v2019
        %v2117 = vunpack.c.l.b16 %v2020
        %v2118 = vunpack.c.l.b16 %v2021
        %v2119 = vunpack.c.l.b16 %v2022
        %v2120 = vunpack.c.l.b16 %v2023
        %v2121 = vunpack.c.l.b16 %v2024
        %v2122 = vunpack.c.l.b16 %v2025
        %v2123 = vunpack.c.l.b16 %v2026
        %v2124 = vunpack.c.l.b16 %v2027
        %v2125 = vunpack.c.l.b16 %v2028
        %v2126 = vunpack.c.l.b16 %v2029
        %v2127 = vunpack.c.l.b16 %v2030
        %v2128 = vunpack.c.l.b16 %v2031
        %v2129 = vunpack.c.l.b16 %v2032
        %v2130 = vunpack.c.l.b16 %v2033
        %v2131 = vunpack.c.l.b16 %v2034
        %v2132 = vunpack.c.l.b16 %v2035
        %v2133 = vunpack.c.l.b16 %v2036
        %v2134 = vunpack.c.l.b16 %v2037
        %v2135 = vunpack.c.l.b16 %v2038
        %v2136 = vunpack.c.l.b16 %v2039
        %v2137 = vunpack.c.l.b16 %v2040
        %v2138 = vunpack.c.l.b16 %v2041
        %v2139 = vunpack.c.l.b16 %v2042
        %v2140 = vunpack.c.l.b16 %v2043
        %v2141 = vunpack.c.l.b16 %v2044
        %v2142 = vunpack.c.l.b16 %v2045
        %v2143 = vunpack.c.l.b16 %v2046
        %v2144 = vunpack.c.l.b16 %v2047
        %v2145 = vunpack.c.l.b16 %v2048
        %v2146 = vunpack.c.l.b16 %v2049
        %v2147 = vunpack.c.l.b16 %v2050
        %v2148 = vunpack.c.l.b16 %v2051
        %v2149 = vunpack.c.l.b16 %v2052
        %v2150 = vunpack.c.l.b16 %v2053
        %v2151 = vunpack.c.l.b16 %v2054
        %v2152 = vunpack.c.l.b16 %v2055
        %v2153 = vunpack.c.l.b16 %v2056
        %v2154 = vunpack.c.l.b16 %v2057
        %v2155 = vunpack.c.l.b16 %v2058
        %v2156 = vunpack.c.l.b16 %v2059
        %v2157 = vunpack.c.l.b16 %v2060
        %v2158 = vunpack.c.l.b16 %v2061
        %v2159 = vunpack.c.l.b16 %v2062
        %v2160 = vunpack.c.l.b16 %v2063
        %v2161 = vunpack.c.l.b16 %v2064
        %v2162 = vunpack.c.l.b16 %v2065
        %v2163 = vpack.c.b16 %v2116, %v2115
        %v2164 = vpack.c.b16 %v2118, %v2117
        %v2165 = vpack.c.b16 %v2120, %v2119
        %v2166 = vpack.c.b16 %v2122, %v2121
        %v2167 = vpack.c.b16 %v2124, %v2123
        %v2168 = vpack.c.b16 %v2126, %v2125
        %v2169 = vpack.c.b16 %v2128, %v2127
        %v2170 = vpack.c.b16 %v2130, %v2129
        %v2171 = vpack.c.b16 %v2132, %v2131
        %v2172 = vpack.c.b16 %v2134, %v2133
        %v2173 = vpack.c.b16 %v2136, %v2135
        %v2174 = vpack.c.b16 %v2138, %v2137
        %v2175 = vpack.c.b16 %v2140, %v2139
        %v2176 = vpack.c.b16 %v2142, %v2141
        %v2177 = vpack.c.b16 %v2144, %v2143
        %v2178 = vpack.c.b16 %v2146, %v2145
        %v2179 = vpack.c.b16 %v2148, %v2147
        %v2180 = vpack.c.b16 %v2150, %v2149
        %v2181 = vpack.c.b16 %v2152, %v2151
        %v2182 = vpack.c.b16 %v2154, %v2153
        %v2183 = vpack.c.b16 %v2156, %v2155
        %v2184 = vpack.c.b16 %v2158, %v2157
        %v2185 = vpack.c.b16 %v2160, %v2159
        %v2186 = vpack.c.b16 %v2162, %v2161
        %2211 = vmatprep.subr.bf16.mxu0 0
        %2212 = vmatpush1.bf16.msra.mxu0 %v2170
        %2213 = vmatprep.subr.bf16.mxu0 0
        %2214 = vmatpush1.bf16.msra.mxu0 %v2169
        %2215 = vmatprep.subr.bf16.mxu0 0
        %2216 = vmatpush1.bf16.msra.mxu0 %v2168
        %2217 = vmatprep.subr.bf16.mxu0 0
        %2218 = vmatpush1.bf16.msra.mxu0 %v2167
        %2219 = vmatprep.subr.bf16.mxu0 0
        %2220 = vmatpush1.bf16.msra.mxu0 %v2166
        %2221 = vmatprep.subr.bf16.mxu0 0
        %2222 = vmatpush1.bf16.msra.mxu0 %v2165
        %2223 = vmatprep.subr.bf16.mxu0 0
        %2224 = vmatpush1.bf16.msra.mxu0 %v2164
        %2225 = vmatprep.subr.bf16.mxu0 0
        %2226 = vmatpush1.bf16.msra.mxu0 %v2163
        %2227 = vmatprep.subr.bf16.mxu0 0
        %2228 = vmatpush2.bf16.msra.mxu0 %v2178
        %2229 = vmatprep.subr.bf16.mxu0 0
        %2230 = vmatpush2.bf16.msra.mxu0 %v2177
        %2231 = vmatprep.subr.bf16.mxu0 0
        %2232 = vmatpush2.bf16.msra.mxu0 %v2176
        %2233 = vmatprep.subr.bf16.mxu0 0
        %2234 = vmatpush2.bf16.msra.mxu0 %v2175
        %2235 = vmatprep.subr.bf16.mxu0 0
        %2236 = vmatpush2.bf16.msra.mxu0 %v2174
        %2237 = vmatprep.subr.bf16.mxu0 0
        %2238 = vmatpush2.bf16.msra.mxu0 %v2173
        %2239 = vmatprep.subr.bf16.mxu0 0
        %2240 = vmatpush2.bf16.msra.mxu0 %v2172
        %2241 = vmatprep.subr.bf16.mxu0 0
        %2242 = vmatpush2.bf16.msra.mxu0 %v2171
        %2243 = vmatprep.mubr.bf16.mxu0 %v2016
        %2244 = vmatmul.mubr.bf16.gmra.mxu0 %v2015
        %v2245 = vpop.f32.mrf.mxu0
        %v2246 = vadd.f32 %v2066, %v2245
        %v2247 = vpop.f32.mrf.mxu0
        %v2248 = vpop.f32.mrf.mxu0
        %v2249 = vpop.f32.mrf.mxu0
        %2250 = vdwg.mxu0
        %2251 = vmatprep.subr.bf16.mxu0 0
        %2252 = vmatpush1.bf16.msra.mxu0 %v2186
        %2253 = vmatprep.subr.bf16.mxu0 0
        %2254 = vmatpush1.bf16.msra.mxu0 %v2185
        %2255 = vmatprep.subr.bf16.mxu0 0
        %2256 = vmatpush1.bf16.msra.mxu0 %v2184
        %2257 = vmatprep.subr.bf16.mxu0 0
        %2258 = vmatpush1.bf16.msra.mxu0 %v2183
        %2259 = vmatprep.subr.bf16.mxu0 0
        %2260 = vmatpush1.bf16.msra.mxu0 %v2182
        %2261 = vmatprep.subr.bf16.mxu0 0
        %2262 = vmatpush1.bf16.msra.mxu0 %v2181
        %2263 = vmatprep.subr.bf16.mxu0 0
        %2264 = vmatpush1.bf16.msra.mxu0 %v2180
        %2265 = vmatprep.subr.bf16.mxu0 0
        %2266 = vmatpush1.bf16.msra.mxu0 %v2179
        %2267 = vmatprep.subr.bf16.mxu0 0
        %2268 = vmatpush2.bf16.msra.mxu0 0
        %2269 = vmatprep.subr.bf16.mxu0 0
        %2270 = vmatpush2.bf16.msra.mxu0 0
        %2271 = vmatprep.subr.bf16.mxu0 0
        %2272 = vmatpush2.bf16.msra.mxu0 0
        %2273 = vmatprep.subr.bf16.mxu0 0
        %2274 = vmatpush2.bf16.msra.mxu0 0
        %2275 = vmatprep.subr.bf16.mxu0 0
        %2276 = vmatpush2.bf16.msra.mxu0 0
        %2277 = vmatprep.subr.bf16.mxu0 0
        %2278 = vmatpush2.bf16.msra.mxu0 0
        %2279 = vmatprep.subr.bf16.mxu0 0
        %2280 = vmatpush2.bf16.msra.mxu0 0
        %2281 = vmatprep.subr.bf16.mxu0 0
        %2282 = vmatpush2.bf16.msra.mxu0 0
        %2283 = vmatprep.mubr.bf16.mxu0 0
        %2284 = vmatmul.mubr.bf16.gmra.mxu0 %v2017
        %v2285 = vpop.f32.mrf.mxu0
        %v2286 = vadd.f32 %v2246, %v2285
        %v2287 = vpop.f32.mrf.mxu0
        %v2288 = vpop.f32.mrf.mxu0
        %v2289 = vpop.f32.mrf.mxu0
        %2290 = vdwg.mxu0
        %vm2291 = vcmp.gt.f32.partialorder %v2286, 0.0
        %v2292 = vmul.f32 %v2286, 0.1
        %v2293 = vsel %vm2291, %v2286, %v2292
        %v2294 = vpack.c.bf16 %v2293, %v2293
        %v2295 = vld [vmem:[#allocation14] sm:$0xf]
        %v2296 = vld [vmem:[#allocation14 + $0x4] sm:$0xf]
        %v2297 = vld [vmem:[#allocation14 + $0x8] sm:$0xf]
        %v2298 = vld [vmem:[#allocation14 + $0xc] sm:$0xf]
        %v2299 = vld [vmem:[#allocation14 + $0x10] sm:$0xf]
        %v2300 = vld [vmem:[#allocation14 + $0x14] sm:$0xf]
        %v2301 = vld [vmem:[#allocation14 + $0x18] sm:$0xf]
        %v2302 = vld [vmem:[#allocation14 + $0x1c] sm:$0xf]
        %v2303 = vld [vmem:[#allocation14 + $0x20] sm:$0xf]
        %v2304 = vld [vmem:[#allocation14 + $0x24] sm:$0xf]
        %v2305 = vld [vmem:[#allocation14 + $0x28] sm:$0xf]
        %v2306 = vld [vmem:[#allocation14 + $0x2c] sm:$0xf]
        %v2307 = vld [vmem:[#allocation14 + $0x30] sm:$0xf]
        %v2308 = vld [vmem:[#allocation14 + $0x34] sm:$0xf]
        %v2309 = vld [vmem:[#allocation14 + $0x38] sm:$0xf]
        %v2310 = vld [vmem:[#allocation14 + $0x3c] sm:$0xf]
        %v2311 = vld [vmem:[%s12 + $0xa] sm:$0x1]
        %v2328 = vunpack.c.l.b16 %v2295
        %v2329 = vunpack.c.l.b16 %v2296
        %v2330 = vunpack.c.l.b16 %v2297
        %v2331 = vunpack.c.l.b16 %v2298
        %v2332 = vunpack.c.l.b16 %v2299
        %v2333 = vunpack.c.l.b16 %v2300
        %v2334 = vunpack.c.l.b16 %v2301
        %v2335 = vunpack.c.l.b16 %v2302
        %v2336 = vunpack.c.l.b16 %v2303
        %v2337 = vunpack.c.l.b16 %v2304
        %v2338 = vunpack.c.l.b16 %v2305
        %v2339 = vunpack.c.l.b16 %v2306
        %v2340 = vunpack.c.l.b16 %v2307
        %v2341 = vunpack.c.l.b16 %v2308
        %v2342 = vunpack.c.l.b16 %v2309
        %v2343 = vunpack.c.l.b16 %v2310
        %v2344 = vpack.c.b16 %v2329, %v2328
        %v2345 = vpack.c.b16 %v2331, %v2330
        %v2346 = vpack.c.b16 %v2333, %v2332
        %v2347 = vpack.c.b16 %v2335, %v2334
        %v2348 = vpack.c.b16 %v2337, %v2336
        %v2349 = vpack.c.b16 %v2339, %v2338
        %v2350 = vpack.c.b16 %v2341, %v2340
        %v2351 = vpack.c.b16 %v2343, %v2342
        %2360 = vmatprep.subr.bf16.mxu0 0
        %2361 = vmatpush1.bf16.msra.mxu0 %v2351
        %2362 = vmatprep.subr.bf16.mxu0 0
        %2363 = vmatpush1.bf16.msra.mxu0 %v2350
        %2364 = vmatprep.subr.bf16.mxu0 0
        %2365 = vmatpush1.bf16.msra.mxu0 %v2349
        %2366 = vmatprep.subr.bf16.mxu0 0
        %2367 = vmatpush1.bf16.msra.mxu0 %v2348
        %2368 = vmatprep.subr.bf16.mxu0 0
        %2369 = vmatpush1.bf16.msra.mxu0 %v2347
        %2370 = vmatprep.subr.bf16.mxu0 0
        %2371 = vmatpush1.bf16.msra.mxu0 %v2346
        %2372 = vmatprep.subr.bf16.mxu0 0
        %2373 = vmatpush1.bf16.msra.mxu0 %v2345
        %2374 = vmatprep.subr.bf16.mxu0 0
        %2375 = vmatpush1.bf16.msra.mxu0 %v2344
        %2376 = vmatprep.subr.bf16.mxu0 0
        %2377 = vmatpush2.bf16.msra.mxu0 0
        %2378 = vmatprep.subr.bf16.mxu0 0
        %2379 = vmatpush2.bf16.msra.mxu0 0
        %2380 = vmatprep.subr.bf16.mxu0 0
        %2381 = vmatpush2.bf16.msra.mxu0 0
        %2382 = vmatprep.subr.bf16.mxu0 0
        %2383 = vmatpush2.bf16.msra.mxu0 0
        %2384 = vmatprep.subr.bf16.mxu0 0
        %2385 = vmatpush2.bf16.msra.mxu0 0
        %2386 = vmatprep.subr.bf16.mxu0 0
        %2387 = vmatpush2.bf16.msra.mxu0 0
        %2388 = vmatprep.subr.bf16.mxu0 0
        %2389 = vmatpush2.bf16.msra.mxu0 0
        %2390 = vmatprep.subr.bf16.mxu0 0
        %2391 = vmatpush2.bf16.msra.mxu0 0
        %2392 = vmatprep.mubr.bf16.mxu0 0
        %2393 = vmatmul.mubr.bf16.gmra.mxu0 %v2294
        %v2394 = vpop.f32.mrf.mxu0
        %v2395 = vadd.f32 %v2311, %v2394
        %v2396 = vpop.f32.mrf.mxu0
        %v2397 = vpop.f32.mrf.mxu0
        %v2398 = vpop.f32.mrf.mxu0
        %2399 = vdwg.mxu0
        %v2400 = vlaneseq
        %v2401 = vshrl.u32 %v2400, 7
        %v2402 = vsub.s32 0, %v2401
        %v2403 = vrot.slane %v2395, %v2402
        %2404 = vst [vmem:[%s648] sm:$0xff] %v2403
        %s2405 = sand.u32 %s352, 1
        %s2406 = scalar_lea.sflag [#allocation4], %s2405
        %s2407 = sand.u32 %s352, 1
        %s2408 = smul.addr %s2407, 8
        %s2409 = scalar_lea.vmem [#allocation16], %s2408
        // Predicated region
        $region105: #{tpu_custom_call.1} parent=71 // pred_check
          %p2410 = pneg %p362
        $region106: #{tpu_custom_call.1} parent=71 // pred_check_branch
          %2412 = sbr.rel (%p2410) target = $region108
        $region107: #{tpu_custom_call.1} parent=71 // pred_region
          %s2414 = ssub.s32 128, 128
          %2415 = vsyncadd %s2406, %s2414
          %s2416 = smul.addr %s36, 128
          %s2417 = scalar_lea.hbm %s13, %s2416
          %s2419 = sshll.u32 %s2409, 4
          %s2420 = int_to_ptr.vmem [resolvable:$true] %s2419
          %2422 = dma.vmem_to_hbm [thread:$0]  %s2420, 128, %s2417, %s2406
        $region108: #{tpu_custom_call.1} parent=71 // pred_fallthru
          _
      $region72: #{tpu_custom_call.1} parent=5 // pred_fallthru
        _
      %p2423 = scmp.le.s32.totalorder 2, %s31
      // Predicated region
      $region109: #{tpu_custom_call.1} parent=5 // pred_check
        %p2424 = pneg %p2423
      $region110: #{tpu_custom_call.1} parent=5 // pred_check_branch
        %2426 = sbr.rel (%p2424) target = $region112
      $region111: #{tpu_custom_call.1} parent=5 // pred_region
        %s2427 = ssub.s32 %s31, 2
        // Predicated region
        $region113: #{tpu_custom_call.1} parent=111 // pred_check
          %p2428 = pneg %p368
        $region114: #{tpu_custom_call.1} parent=111 // pred_check_branch
          %2430 = sbr.rel (%p2428) target = $region116
        $region115: #{tpu_custom_call.1} parent=111 // pred_region
          %s2431 = sand.u32 %s353, 1
          %s2432 = scalar_lea.sflag [#allocation4], %s2431
          %s2433 = sand.u32 %s353, 1
          %s2434 = smul.addr %s2433, 8
          %s2435 = scalar_lea.vmem [#allocation16], %s2434
          %2436 = dma.done %s2432, 128
        $region116: #{tpu_custom_call.1} parent=111 // pred_fallthru
          _
      $region112: #{tpu_custom_call.1} parent=5 // pred_fallthru
        _
    $region6: #{tpu_custom_call.1} parent=1 // loop_footer
      %s35 = sadd.s32 1, %s31
    $region7: #{tpu_custom_call.1} parent=1 // loop_footer_branch
      %30 = sbr.rel target = $region3
    $region8: #{tpu_custom_call.1} parent=1 // loop_exit
      _
    %2437 = vsyncpa [#allocation3], 1
    %s2438 = scalar_lea.sflag [#allocation3], 1
    %2439 = vsyncpa %s2438, 1
    %2440 = vsyncpa [#allocation6], 1
    %s2441 = scalar_lea.sflag [#allocation6], 1
    %2442 = vsyncpa %s2441, 1
    %2443 = vsyncpa [#allocation9], 1
    %2444 = vsyncpa [#allocation12], 1
    %2445 = vsyncpa [#allocation15], 1
    %2446 = vsyncpa [#allocation4], 1
    %s2447 = scalar_lea.sflag [#allocation4], 1
    %2448 = vsyncpa %s2447, 1

</llo_original>
